<compile_context>
chip_gen: v6e
topology: v6e:2x2x1
jax: 0.10.0
libtpu: 0.0.40
codegen_flags: <defaults>
</compile_context>

<pallas_src>
import jax
import jax.numpy as jnp
from jax.experimental import pallas as pl
from jax.experimental.pallas import tpu as pltpu

KH = KW = 5
PAD = 2
EPS = 1e-5


def dwconv_bn_kernel(x_ref, w_ref, g_ref, b_ref, o_ref, mean_ref, var_ref):
    # x_ref : (N, H+4, W+4, TC)  spatially pre-padded input, channel tile TC
    # w_ref : (KH, KW, TC)       depthwise filter tile
    # g_ref, b_ref : (1, TC)     batchnorm affine params
    # o_ref : (N, H, W, TC)      normalized output (also used as VMEM staging)
    # mean_ref, var_ref : (1, TC) batch statistics (biased variance), f32
    N, H, W, TC = o_ref.shape

    # ---- pass 1: depthwise 5x5 conv, register-blocked per output row ------
    # Accumulator (W, TC) stays in vregs for all 25 taps and is stored once.
    # BN partial sums are accumulated while the row is still in registers.
    def conv_rows(n, carry_in):
        def row_body(h, carry):
            s1, s2 = carry
            acc = None
            for dh in range(KH):
                for dw in range(KW):
                    win = x_ref[n, h + dh, pl.ds(dw, W), :].astype(jnp.float32)
                    tap = w_ref[dh, dw, :].astype(jnp.float32)
                    term = win * tap
                    acc = term if acc is None else acc + term
            o_ref[n, h, :, :] = acc.astype(o_ref.dtype)
            s1 = s1 + jnp.sum(acc, axis=0, keepdims=True)
            s2 = s2 + jnp.sum(acc * acc, axis=0, keepdims=True)
            return s1, s2

        return jax.lax.fori_loop(0, H, row_body, carry_in)

    s1 = jnp.zeros((1, TC), jnp.float32)
    s2 = jnp.zeros((1, TC), jnp.float32)
    for n in range(N):
        s1, s2 = conv_rows(n, (s1, s2))

    # ---- batchnorm (training forward): stats over (N, H, W), biased var ---
    inv_cnt = 1.0 / float(N * H * W)
    mean = s1 * inv_cnt
    var = jnp.maximum(s2 * inv_cnt - mean * mean, 0.0)
    inv = jax.lax.rsqrt(var + EPS)
    scale = g_ref[...].astype(jnp.float32) * inv            # (1, TC)
    shift = b_ref[...].astype(jnp.float32) - mean * scale   # (1, TC)

    mean_ref[...] = mean.astype(mean_ref.dtype)
    var_ref[...] = var.astype(var_ref.dtype)

    # ---- pass 2: normalize o_ref in place, one row at a time --------------
    def norm_rows(n):
        def row_body(h, carry):
            y = o_ref[n, h, :, :].astype(jnp.float32)
            o_ref[n, h, :, :] = (y * scale + shift).astype(o_ref.dtype)
            return carry

        jax.lax.fori_loop(0, H, row_body, 0)

    for n in range(N):
        norm_rows(n)


def depthwise_conv_bn_nhwc(x_nhwc, w_dw, gamma, beta, *, c_tile=640):
    """Fused depthwise 5x5 conv + training-mode BatchNorm (NHWC, channel-minor).

    x_nhwc: (N, H, W, C); w_dw: (C, KH, KW); gamma/beta: (C,).
    Returns (y_nhwc, batch_mean, batch_var) with biased batch_var.
    """
    N, H, W, C = x_nhwc.shape
    Cp = pl.cdiv(C, c_tile) * c_tile
    cpad = Cp - C

    # Single pad pass covering the spatial halo + channel padding.
    x = jnp.pad(x_nhwc, ((0, 0), (PAD, PAD), (PAD, PAD), (0, cpad)))
    w = jnp.pad(jnp.transpose(w_dw, (1, 2, 0)), ((0, 0), (0, 0), (0, cpad)))
    g = jnp.pad(gamma, (0, cpad)).reshape(1, Cp)
    b = jnp.pad(beta, (0, cpad)).reshape(1, Cp)

    Hp, Wp = H + 2 * PAD, W + 2 * PAD
    grid = (Cp // c_tile,)

    y, mean, var = pl.pallas_call(
        dwconv_bn_kernel,
        out_shape=(
            jax.ShapeDtypeStruct((N, H, W, Cp), x_nhwc.dtype),
            jax.ShapeDtypeStruct((1, Cp), jnp.float32),
            jax.ShapeDtypeStruct((1, Cp), jnp.float32),
        ),
        grid_spec=pltpu.PrefetchScalarGridSpec(
            num_scalar_prefetch=0,
            grid=grid,
            in_specs=[
                pl.BlockSpec((N, Hp, Wp, c_tile), lambda c: (0, 0, 0, c)),
                pl.BlockSpec((KH, KW, c_tile), lambda c: (0, 0, c)),
                pl.BlockSpec((1, c_tile), lambda c: (0, c)),
                pl.BlockSpec((1, c_tile), lambda c: (0, c)),
            ],
            out_specs=(
                pl.BlockSpec((N, H, W, c_tile), lambda c: (0, 0, 0, c)),
                pl.BlockSpec((1, c_tile), lambda c: (0, c)),
                pl.BlockSpec((1, c_tile), lambda c: (0, c)),
            ),
        ),
        compiler_params=pltpu.CompilerParams(
            dimension_semantics=("parallel",)),
    )(x, w, g, b)

    return y[..., :C], mean[0, :C], var[0, :C]


def depthwise_conv_bn(x_nchw, w_dw, gamma, beta, *, c_tile=640):
    """NCHW wrapper matching the PyTorch module forward; returns NCHW output."""
    x = jnp.transpose(x_nchw, (0, 2, 3, 1))
    y, _, _ = depthwise_conv_bn_nhwc(x, w_dw, gamma, beta, c_tile=c_tile)
    return jnp.transpose(y, (0, 3, 1, 2))


def reference(x_nchw, w_dw, gamma, beta):
    """Pure-JAX reference of the PyTorch module forward (training-mode BN)."""
    C = x_nchw.shape[1]
    w = w_dw.reshape(C, 1, KH, KW)
    y = jax.lax.conv_general_dilated(
        x_nchw, w, window_strides=(1, 1),
        padding=((PAD, PAD), (PAD, PAD)),
        dimension_numbers=("NCHW", "OIHW", "NCHW"),
        feature_group_count=C)
    mean = jnp.mean(y, axis=(0, 2, 3), keepdims=True)
    var = jnp.mean((y - mean) ** 2, axis=(0, 2, 3), keepdims=True)
    return ((y - mean) * jax.lax.rsqrt(var + EPS)
            * gamma.reshape(1, C, 1, 1) + beta.reshape(1, C, 1, 1))


if __name__ == "__main__":
    # shapes implied by the module: N=1, C=1200 (fixed by groups=1200), 14x14
    N, C, H, W = 1, 1200, 14, 14

    key = jax.random.PRNGKey(0)
    kx, kw, kg, kb = jax.random.split(key, 4)
    x = jax.random.normal(kx, (N, C, H, W), jnp.float32)
    w_dw = 0.1 * jax.random.normal(kw, (C, KH, KW), jnp.float32)
    gamma = 1.0 + 0.1 * jax.random.normal(kg, (C,), jnp.float32)
    beta = 0.1 * jax.random.normal(kb, (C,), jnp.float32)

    out = jax.block_until_ready(depthwise_conv_bn(x, w_dw, gamma, beta))
    ref = jax.block_until_ready(reference(x, w_dw, gamma, beta))

    assert out.shape == (N, C, H, W)
    assert jnp.allclose(out, ref, atol=1e-3, rtol=1e-3), "mismatch vs reference"

    print("KERNEL_OK")
</pallas_src>

<mosaic_0001>
module attributes {stable_mosaic.version = 11 : i64} {
  func.func @dwconv_bn_kernel(%arg0: i32, %arg1: memref<1x18x18x640xf32, #tpu.memory_space<vmem>>, %arg2: memref<5x5x640xf32, #tpu.memory_space<vmem>>, %arg3: memref<1x640xf32, #tpu.memory_space<vmem>>, %arg4: memref<1x640xf32, #tpu.memory_space<vmem>>, %arg5: memref<1x14x14x640xf32, #tpu.memory_space<vmem>>, %arg6: memref<1x640xf32, #tpu.memory_space<vmem>>, %arg7: memref<1x640xf32, #tpu.memory_space<vmem>>) attributes {dimension_semantics = [#tpu.dimension_semantics<parallel>], iteration_bounds = array<i64: 2>, scalar_prefetch = 0 : i64, scratch_operands = 0 : i64, tpu.core_type = #tpu.core_type<tc>, window_params = [{transform_indices = @transform_0, window_bounds = array<i64: 1, 18, 18, 640>}, {transform_indices = @transform_1, window_bounds = array<i64: 5, 5, 640>}, {transform_indices = @transform_2, window_bounds = array<i64: 1, 640>}, {transform_indices = @transform_3, window_bounds = array<i64: 1, 640>}, {transform_indices = @transform_4, window_bounds = array<i64: 1, 14, 14, 640>}, {transform_indices = @transform_5, window_bounds = array<i64: 1, 640>}, {transform_indices = @transform_6, window_bounds = array<i64: 1, 640>}]} {
    %cst = arith.constant 0.000000e+00 : f32
    %0 = vector.broadcast %cst : f32 to vector<1x640xf32>
    %cst_0 = arith.constant 0.000000e+00 : f32
    %1 = vector.broadcast %cst_0 : f32 to vector<1x640xf32>
    %c0_i32 = arith.constant 0 : i32
    %c14_i32 = arith.constant 14 : i32
    %2 = arith.addi %c0_i32, %c14_i32 : i32
    %c1_i32 = arith.constant 1 : i32
    %3:2 = scf.for %arg8 = %c0_i32 to %2 step %c1_i32 iter_args(%arg9 = %0, %arg10 = %1) -> (vector<1x640xf32>, vector<1x640xf32>)  : i32 {
      %c0_i32_17 = arith.constant 0 : i32
      %23 = arith.addi %arg8, %c0_i32_17 : i32
      %c0_18 = arith.constant 0 : index
      %24 = arith.index_cast %23 : i32 to index
      %c0_19 = arith.constant 0 : index
      %c0_20 = arith.constant 0 : index
      %25 = vector.load %arg1[%c0_18, %24, %c0_19, %c0_20] : memref<1x18x18x640xf32, #tpu.memory_space<vmem>>, vector<1x1x14x640xf32>
      %26 = vector.shape_cast %25 : vector<1x1x14x640xf32> to vector<14x640xf32>
      %c0_21 = arith.constant 0 : index
      %c0_22 = arith.constant 0 : index
      %c0_23 = arith.constant 0 : index
      %27 = vector.load %arg2[%c0_21, %c0_22, %c0_23] : memref<5x5x640xf32, #tpu.memory_space<vmem>>, vector<1x1x640xf32>
      %28 = vector.shape_cast %27 : vector<1x1x640xf32> to vector<640xf32>
      %29 = vector.shape_cast %28 : vector<640xf32> to vector<1x640xf32>
      %30 = vector.broadcast %29 : vector<1x640xf32> to vector<14x640xf32>
      %31 = arith.mulf %26, %30 : vector<14x640xf32>
      %c0_i32_24 = arith.constant 0 : i32
      %32 = arith.addi %arg8, %c0_i32_24 : i32
      %c0_25 = arith.constant 0 : index
      %33 = arith.index_cast %32 : i32 to index
      %c1 = arith.constant 1 : index
      %c0_26 = arith.constant 0 : index
      %34 = vector.load %arg1[%c0_25, %33, %c1, %c0_26] : memref<1x18x18x640xf32, #tpu.memory_space<vmem>>, vector<1x1x14x640xf32>
      %35 = vector.shape_cast %34 : vector<1x1x14x640xf32> to vector<14x640xf32>
      %c0_27 = arith.constant 0 : index
      %c1_28 = arith.constant 1 : index
      %c0_29 = arith.constant 0 : index
      %36 = vector.load %arg2[%c0_27, %c1_28, %c0_29] : memref<5x5x640xf32, #tpu.memory_space<vmem>>, vector<1x1x640xf32>
      %37 = vector.shape_cast %36 : vector<1x1x640xf32> to vector<640xf32>
      %38 = vector.shape_cast %37 : vector<640xf32> to vector<1x640xf32>
      %39 = vector.broadcast %38 : vector<1x640xf32> to vector<14x640xf32>
      %40 = arith.mulf %35, %39 : vector<14x640xf32>
      %41 = arith.addf %31, %40 : vector<14x640xf32>
      %c0_i32_30 = arith.constant 0 : i32
      %42 = arith.addi %arg8, %c0_i32_30 : i32
      %c0_31 = arith.constant 0 : index
      %43 = arith.index_cast %42 : i32 to index
      %c2 = arith.constant 2 : index
      %c0_32 = arith.constant 0 : index
      %44 = vector.load %arg1[%c0_31, %43, %c2, %c0_32] : memref<1x18x18x640xf32, #tpu.memory_space<vmem>>, vector<1x1x14x640xf32>
      %45 = vector.shape_cast %44 : vector<1x1x14x640xf32> to vector<14x640xf32>
      %c0_33 = arith.constant 0 : index
      %c2_34 = arith.constant 2 : index
      %c0_35 = arith.constant 0 : index
      %46 = vector.load %arg2[%c0_33, %c2_34, %c0_35] : memref<5x5x640xf32, #tpu.memory_space<vmem>>, vector<1x1x640xf32>
      %47 = vector.shape_cast %46 : vector<1x1x640xf32> to vector<640xf32>
      %48 = vector.shape_cast %47 : vector<640xf32> to vector<1x640xf32>
      %49 = vector.broadcast %48 : vector<1x640xf32> to vector<14x640xf32>
      %50 = arith.mulf %45, %49 : vector<14x640xf32>
      %51 = arith.addf %41, %50 : vector<14x640xf32>
      %c0_i32_36 = arith.constant 0 : i32
      %52 = arith.addi %arg8, %c0_i32_36 : i32
      %c0_37 = arith.constant 0 : index
      %53 = arith.index_cast %52 : i32 to index
      %c3 = arith.constant 3 : index
      %c0_38 = arith.constant 0 : index
      %54 = vector.load %arg1[%c0_37, %53, %c3, %c0_38] : memref<1x18x18x640xf32, #tpu.memory_space<vmem>>, vector<1x1x14x640xf32>
      %55 = vector.shape_cast %54 : vector<1x1x14x640xf32> to vector<14x640xf32>
      %c0_39 = arith.constant 0 : index
      %c3_40 = arith.constant 3 : index
      %c0_41 = arith.constant 0 : index
      %56 = vector.load %arg2[%c0_39, %c3_40, %c0_41] : memref<5x5x640xf32, #tpu.memory_space<vmem>>, vector<1x1x640xf32>
      %57 = vector.shape_cast %56 : vector<1x1x640xf32> to vector<640xf32>
      %58 = vector.shape_cast %57 : vector<640xf32> to vector<1x640xf32>
      %59 = vector.broadcast %58 : vector<1x640xf32> to vector<14x640xf32>
      %60 = arith.mulf %55, %59 : vector<14x640xf32>
      %61 = arith.addf %51, %60 : vector<14x640xf32>
      %c0_i32_42 = arith.constant 0 : i32
      %62 = arith.addi %arg8, %c0_i32_42 : i32
      %c0_43 = arith.constant 0 : index
      %63 = arith.index_cast %62 : i32 to index
      %c4 = arith.constant 4 : index
      %c0_44 = arith.constant 0 : index
      %64 = vector.load %arg1[%c0_43, %63, %c4, %c0_44] : memref<1x18x18x640xf32, #tpu.memory_space<vmem>>, vector<1x1x14x640xf32>
      %65 = vector.shape_cast %64 : vector<1x1x14x640xf32> to vector<14x640xf32>
      %c0_45 = arith.constant 0 : index
      %c4_46 = arith.constant 4 : index
      %c0_47 = arith.constant 0 : index
      %66 = vector.load %arg2[%c0_45, %c4_46, %c0_47] : memref<5x5x640xf32, #tpu.memory_space<vmem>>, vector<1x1x640xf32>
      %67 = vector.shape_cast %66 : vector<1x1x640xf32> to vector<640xf32>
      %68 = vector.shape_cast %67 : vector<640xf32> to vector<1x640xf32>
      %69 = vector.broadcast %68 : vector<1x640xf32> to vector<14x640xf32>
      %70 = arith.mulf %65, %69 : vector<14x640xf32>
      %71 = arith.addf %61, %70 : vector<14x640xf32>
      %c1_i32_48 = arith.constant 1 : i32
      %72 = arith.addi %arg8, %c1_i32_48 : i32
      %c0_49 = arith.constant 0 : index
      %73 = arith.index_cast %72 : i32 to index
      %c0_50 = arith.constant 0 : index
      %c0_51 = arith.constant 0 : index
      %74 = vector.load %arg1[%c0_49, %73, %c0_50, %c0_51] : memref<1x18x18x640xf32, #tpu.memory_space<vmem>>, vector<1x1x14x640xf32>
      %75 = vector.shape_cast %74 : vector<1x1x14x640xf32> to vector<14x640xf32>
      %c1_52 = arith.constant 1 : index
      %c0_53 = arith.constant 0 : index
      %c0_54 = arith.constant 0 : index
      %76 = vector.load %arg2[%c1_52, %c0_53, %c0_54] : memref<5x5x640xf32, #tpu.memory_space<vmem>>, vector<1x1x640xf32>
      %77 = vector.shape_cast %76 : vector<1x1x640xf32> to vector<640xf32>
      %78 = vector.shape_cast %77 : vector<640xf32> to vector<1x640xf32>
      %79 = vector.broadcast %78 : vector<1x640xf32> to vector<14x640xf32>
      %80 = arith.mulf %75, %79 : vector<14x640xf32>
      %81 = arith.addf %71, %80 : vector<14x640xf32>
      %c1_i32_55 = arith.constant 1 : i32
      %82 = arith.addi %arg8, %c1_i32_55 : i32
      %c0_56 = arith.constant 0 : index
      %83 = arith.index_cast %82 : i32 to index
      %c1_57 = arith.constant 1 : index
      %c0_58 = arith.constant 0 : index
      %84 = vector.load %arg1[%c0_56, %83, %c1_57, %c0_58] : memref<1x18x18x640xf32, #tpu.memory_space<vmem>>, vector<1x1x14x640xf32>
      %85 = vector.shape_cast %84 : vector<1x1x14x640xf32> to vector<14x640xf32>
      %c1_59 = arith.constant 1 : index
      %c1_60 = arith.constant 1 : index
      %c0_61 = arith.constant 0 : index
      %86 = vector.load %arg2[%c1_59, %c1_60, %c0_61] : memref<5x5x640xf32, #tpu.memory_space<vmem>>, vector<1x1x640xf32>
      %87 = vector.shape_cast %86 : vector<1x1x640xf32> to vector<640xf32>
      %88 = vector.shape_cast %87 : vector<640xf32> to vector<1x640xf32>
      %89 = vector.broadcast %88 : vector<1x640xf32> to vector<14x640xf32>
      %90 = arith.mulf %85, %89 : vector<14x640xf32>
      %91 = arith.addf %81, %90 : vector<14x640xf32>
      %c1_i32_62 = arith.constant 1 : i32
      %92 = arith.addi %arg8, %c1_i32_62 : i32
      %c0_63 = arith.constant 0 : index
      %93 = arith.index_cast %92 : i32 to index
      %c2_64 = arith.constant 2 : index
      %c0_65 = arith.constant 0 : index
      %94 = vector.load %arg1[%c0_63, %93, %c2_64, %c0_65] : memref<1x18x18x640xf32, #tpu.memory_space<vmem>>, vector<1x1x14x640xf32>
      %95 = vector.shape_cast %94 : vector<1x1x14x640xf32> to vector<14x640xf32>
      %c1_66 = arith.constant 1 : index
      %c2_67 = arith.constant 2 : index
      %c0_68 = arith.constant 0 : index
      %96 = vector.load %arg2[%c1_66, %c2_67, %c0_68] : memref<5x5x640xf32, #tpu.memory_space<vmem>>, vector<1x1x640xf32>
      %97 = vector.shape_cast %96 : vector<1x1x640xf32> to vector<640xf32>
      %98 = vector.shape_cast %97 : vector<640xf32> to vector<1x640xf32>
      %99 = vector.broadcast %98 : vector<1x640xf32> to vector<14x640xf32>
      %100 = arith.mulf %95, %99 : vector<14x640xf32>
      %101 = arith.addf %91, %100 : vector<14x640xf32>
      %c1_i32_69 = arith.constant 1 : i32
      %102 = arith.addi %arg8, %c1_i32_69 : i32
      %c0_70 = arith.constant 0 : index
      %103 = arith.index_cast %102 : i32 to index
      %c3_71 = arith.constant 3 : index
      %c0_72 = arith.constant 0 : index
      %104 = vector.load %arg1[%c0_70, %103, %c3_71, %c0_72] : memref<1x18x18x640xf32, #tpu.memory_space<vmem>>, vector<1x1x14x640xf32>
      %105 = vector.shape_cast %104 : vector<1x1x14x640xf32> to vector<14x640xf32>
      %c1_73 = arith.constant 1 : index
      %c3_74 = arith.constant 3 : index
      %c0_75 = arith.constant 0 : index
      %106 = vector.load %arg2[%c1_73, %c3_74, %c0_75] : memref<5x5x640xf32, #tpu.memory_space<vmem>>, vector<1x1x640xf32>
      %107 = vector.shape_cast %106 : vector<1x1x640xf32> to vector<640xf32>
      %108 = vector.shape_cast %107 : vector<640xf32> to vector<1x640xf32>
      %109 = vector.broadcast %108 : vector<1x640xf32> to vector<14x640xf32>
      %110 = arith.mulf %105, %109 : vector<14x640xf32>
      %111 = arith.addf %101, %110 : vector<14x640xf32>
      %c1_i32_76 = arith.constant 1 : i32
      %112 = arith.addi %arg8, %c1_i32_76 : i32
      %c0_77 = arith.constant 0 : index
      %113 = arith.index_cast %112 : i32 to index
      %c4_78 = arith.constant 4 : index
      %c0_79 = arith.constant 0 : index
      %114 = vector.load %arg1[%c0_77, %113, %c4_78, %c0_79] : memref<1x18x18x640xf32, #tpu.memory_space<vmem>>, vector<1x1x14x640xf32>
      %115 = vector.shape_cast %114 : vector<1x1x14x640xf32> to vector<14x640xf32>
      %c1_80 = arith.constant 1 : index
      %c4_81 = arith.constant 4 : index
      %c0_82 = arith.constant 0 : index
      %116 = vector.load %arg2[%c1_80, %c4_81, %c0_82] : memref<5x5x640xf32, #tpu.memory_space<vmem>>, vector<1x1x640xf32>
      %117 = vector.shape_cast %116 : vector<1x1x640xf32> to vector<640xf32>
      %118 = vector.shape_cast %117 : vector<640xf32> to vector<1x640xf32>
      %119 = vector.broadcast %118 : vector<1x640xf32> to vector<14x640xf32>
      %120 = arith.mulf %115, %119 : vector<14x640xf32>
      %121 = arith.addf %111, %120 : vector<14x640xf32>
      %c2_i32 = arith.constant 2 : i32
      %122 = arith.addi %arg8, %c2_i32 : i32
      %c0_83 = arith.constant 0 : index
      %123 = arith.index_cast %122 : i32 to index
      %c0_84 = arith.constant 0 : index
      %c0_85 = arith.constant 0 : index
      %124 = vector.load %arg1[%c0_83, %123, %c0_84, %c0_85] : memref<1x18x18x640xf32, #tpu.memory_space<vmem>>, vector<1x1x14x640xf32>
      %125 = vector.shape_cast %124 : vector<1x1x14x640xf32> to vector<14x640xf32>
      %c2_86 = arith.constant 2 : index
      %c0_87 = arith.constant 0 : index
      %c0_88 = arith.constant 0 : index
      %126 = vector.load %arg2[%c2_86, %c0_87, %c0_88] : memref<5x5x640xf32, #tpu.memory_space<vmem>>, vector<1x1x640xf32>
      %127 = vector.shape_cast %126 : vector<1x1x640xf32> to vector<640xf32>
      %128 = vector.shape_cast %127 : vector<640xf32> to vector<1x640xf32>
      %129 = vector.broadcast %128 : vector<1x640xf32> to vector<14x640xf32>
      %130 = arith.mulf %125, %129 : vector<14x640xf32>
      %131 = arith.addf %121, %130 : vector<14x640xf32>
      %c2_i32_89 = arith.constant 2 : i32
      %132 = arith.addi %arg8, %c2_i32_89 : i32
      %c0_90 = arith.constant 0 : index
      %133 = arith.index_cast %132 : i32 to index
      %c1_91 = arith.constant 1 : index
      %c0_92 = arith.constant 0 : index
      %134 = vector.load %arg1[%c0_90, %133, %c1_91, %c0_92] : memref<1x18x18x640xf32, #tpu.memory_space<vmem>>, vector<1x1x14x640xf32>
      %135 = vector.shape_cast %134 : vector<1x1x14x640xf32> to vector<14x640xf32>
      %c2_93 = arith.constant 2 : index
      %c1_94 = arith.constant 1 : index
      %c0_95 = arith.constant 0 : index
      %136 = vector.load %arg2[%c2_93, %c1_94, %c0_95] : memref<5x5x640xf32, #tpu.memory_space<vmem>>, vector<1x1x640xf32>
      %137 = vector.shape_cast %136 : vector<1x1x640xf32> to vector<640xf32>
      %138 = vector.shape_cast %137 : vector<640xf32> to vector<1x640xf32>
      %139 = vector.broadcast %138 : vector<1x640xf32> to vector<14x640xf32>
      %140 = arith.mulf %135, %139 : vector<14x640xf32>
      %141 = arith.addf %131, %140 : vector<14x640xf32>
      %c2_i32_96 = arith.constant 2 : i32
      %142 = arith.addi %arg8, %c2_i32_96 : i32
      %c0_97 = arith.constant 0 : index
      %143 = arith.index_cast %142 : i32 to index
      %c2_98 = arith.constant 2 : index
      %c0_99 = arith.constant 0 : index
      %144 = vector.load %arg1[%c0_97, %143, %c2_98, %c0_99] : memref<1x18x18x640xf32, #tpu.memory_space<vmem>>, vector<1x1x14x640xf32>
      %145 = vector.shape_cast %144 : vector<1x1x14x640xf32> to vector<14x640xf32>
      %c2_100 = arith.constant 2 : index
      %c2_101 = arith.constant 2 : index
      %c0_102 = arith.constant 0 : index
      %146 = vector.load %arg2[%c2_100, %c2_101, %c0_102] : memref<5x5x640xf32, #tpu.memory_space<vmem>>, vector<1x1x640xf32>
      %147 = vector.shape_cast %146 : vector<1x1x640xf32> to vector<640xf32>
      %148 = vector.shape_cast %147 : vector<640xf32> to vector<1x640xf32>
      %149 = vector.broadcast %148 : vector<1x640xf32> to vector<14x640xf32>
      %150 = arith.mulf %145, %149 : vector<14x640xf32>
      %151 = arith.addf %141, %150 : vector<14x640xf32>
      %c2_i32_103 = arith.constant 2 : i32
      %152 = arith.addi %arg8, %c2_i32_103 : i32
      %c0_104 = arith.constant 0 : index
      %153 = arith.index_cast %152 : i32 to index
      %c3_105 = arith.constant 3 : index
      %c0_106 = arith.constant 0 : index
      %154 = vector.load %arg1[%c0_104, %153, %c3_105, %c0_106] : memref<1x18x18x640xf32, #tpu.memory_space<vmem>>, vector<1x1x14x640xf32>
      %155 = vector.shape_cast %154 : vector<1x1x14x640xf32> to vector<14x640xf32>
      %c2_107 = arith.constant 2 : index
      %c3_108 = arith.constant 3 : index
      %c0_109 = arith.constant 0 : index
      %156 = vector.load %arg2[%c2_107, %c3_108, %c0_109] : memref<5x5x640xf32, #tpu.memory_space<vmem>>, vector<1x1x640xf32>
      %157 = vector.shape_cast %156 : vector<1x1x640xf32> to vector<640xf32>
      %158 = vector.shape_cast %157 : vector<640xf32> to vector<1x640xf32>
      %159 = vector.broadcast %158 : vector<1x640xf32> to vector<14x640xf32>
      %160 = arith.mulf %155, %159 : vector<14x640xf32>
      %161 = arith.addf %151, %160 : vector<14x640xf32>
      %c2_i32_110 = arith.constant 2 : i32
      %162 = arith.addi %arg8, %c2_i32_110 : i32
      %c0_111 = arith.constant 0 : index
      %163 = arith.index_cast %162 : i32 to index
      %c4_112 = arith.constant 4 : index
      %c0_113 = arith.constant 0 : index
      %164 = vector.load %arg1[%c0_111, %163, %c4_112, %c0_113] : memref<1x18x18x640xf32, #tpu.memory_space<vmem>>, vector<1x1x14x640xf32>
      %165 = vector.shape_cast %164 : vector<1x1x14x640xf32> to vector<14x640xf32>
      %c2_114 = arith.constant 2 : index
      %c4_115 = arith.constant 4 : index
      %c0_116 = arith.constant 0 : index
      %166 = vector.load %arg2[%c2_114, %c4_115, %c0_116] : memref<5x5x640xf32, #tpu.memory_space<vmem>>, vector<1x1x640xf32>
      %167 = vector.shape_cast %166 : vector<1x1x640xf32> to vector<640xf32>
      %168 = vector.shape_cast %167 : vector<640xf32> to vector<1x640xf32>
      %169 = vector.broadcast %168 : vector<1x640xf32> to vector<14x640xf32>
      %170 = arith.mulf %165, %169 : vector<14x640xf32>
      %171 = arith.addf %161, %170 : vector<14x640xf32>
      %c3_i32 = arith.constant 3 : i32
      %172 = arith.addi %arg8, %c3_i32 : i32
      %c0_117 = arith.constant 0 : index
      %173 = arith.index_cast %172 : i32 to index
      %c0_118 = arith.constant 0 : index
      %c0_119 = arith.constant 0 : index
      %174 = vector.load %arg1[%c0_117, %173, %c0_118, %c0_119] : memref<1x18x18x640xf32, #tpu.memory_space<vmem>>, vector<1x1x14x640xf32>
      %175 = vector.shape_cast %174 : vector<1x1x14x640xf32> to vector<14x640xf32>
      %c3_120 = arith.constant 3 : index
      %c0_121 = arith.constant 0 : index
      %c0_122 = arith.constant 0 : index
      %176 = vector.load %arg2[%c3_120, %c0_121, %c0_122] : memref<5x5x640xf32, #tpu.memory_space<vmem>>, vector<1x1x640xf32>
      %177 = vector.shape_cast %176 : vector<1x1x640xf32> to vector<640xf32>
      %178 = vector.shape_cast %177 : vector<640xf32> to vector<1x640xf32>
      %179 = vector.broadcast %178 : vector<1x640xf32> to vector<14x640xf32>
      %180 = arith.mulf %175, %179 : vector<14x640xf32>
      %181 = arith.addf %171, %180 : vector<14x640xf32>
      %c3_i32_123 = arith.constant 3 : i32
      %182 = arith.addi %arg8, %c3_i32_123 : i32
      %c0_124 = arith.constant 0 : index
      %183 = arith.index_cast %182 : i32 to index
      %c1_125 = arith.constant 1 : index
      %c0_126 = arith.constant 0 : index
      %184 = vector.load %arg1[%c0_124, %183, %c1_125, %c0_126] : memref<1x18x18x640xf32, #tpu.memory_space<vmem>>, vector<1x1x14x640xf32>
      %185 = vector.shape_cast %184 : vector<1x1x14x640xf32> to vector<14x640xf32>
      %c3_127 = arith.constant 3 : index
      %c1_128 = arith.constant 1 : index
      %c0_129 = arith.constant 0 : index
      %186 = vector.load %arg2[%c3_127, %c1_128, %c0_129] : memref<5x5x640xf32, #tpu.memory_space<vmem>>, vector<1x1x640xf32>
      %187 = vector.shape_cast %186 : vector<1x1x640xf32> to vector<640xf32>
      %188 = vector.shape_cast %187 : vector<640xf32> to vector<1x640xf32>
      %189 = vector.broadcast %188 : vector<1x640xf32> to vector<14x640xf32>
      %190 = arith.mulf %185, %189 : vector<14x640xf32>
      %191 = arith.addf %181, %190 : vector<14x640xf32>
      %c3_i32_130 = arith.constant 3 : i32
      %192 = arith.addi %arg8, %c3_i32_130 : i32
      %c0_131 = arith.constant 0 : index
      %193 = arith.index_cast %192 : i32 to index
      %c2_132 = arith.constant 2 : index
      %c0_133 = arith.constant 0 : index
      %194 = vector.load %arg1[%c0_131, %193, %c2_132, %c0_133] : memref<1x18x18x640xf32, #tpu.memory_space<vmem>>, vector<1x1x14x640xf32>
      %195 = vector.shape_cast %194 : vector<1x1x14x640xf32> to vector<14x640xf32>
      %c3_134 = arith.constant 3 : index
      %c2_135 = arith.constant 2 : index
      %c0_136 = arith.constant 0 : index
      %196 = vector.load %arg2[%c3_134, %c2_135, %c0_136] : memref<5x5x640xf32, #tpu.memory_space<vmem>>, vector<1x1x640xf32>
      %197 = vector.shape_cast %196 : vector<1x1x640xf32> to vector<640xf32>
      %198 = vector.shape_cast %197 : vector<640xf32> to vector<1x640xf32>
      %199 = vector.broadcast %198 : vector<1x640xf32> to vector<14x640xf32>
      %200 = arith.mulf %195, %199 : vector<14x640xf32>
      %201 = arith.addf %191, %200 : vector<14x640xf32>
      %c3_i32_137 = arith.constant 3 : i32
      %202 = arith.addi %arg8, %c3_i32_137 : i32
      %c0_138 = arith.constant 0 : index
      %203 = arith.index_cast %202 : i32 to index
      %c3_139 = arith.constant 3 : index
      %c0_140 = arith.constant 0 : index
      %204 = vector.load %arg1[%c0_138, %203, %c3_139, %c0_140] : memref<1x18x18x640xf32, #tpu.memory_space<vmem>>, vector<1x1x14x640xf32>
      %205 = vector.shape_cast %204 : vector<1x1x14x640xf32> to vector<14x640xf32>
      %c3_141 = arith.constant 3 : index
      %c3_142 = arith.constant 3 : index
      %c0_143 = arith.constant 0 : index
      %206 = vector.load %arg2[%c3_141, %c3_142, %c0_143] : memref<5x5x640xf32, #tpu.memory_space<vmem>>, vector<1x1x640xf32>
      %207 = vector.shape_cast %206 : vector<1x1x640xf32> to vector<640xf32>
      %208 = vector.shape_cast %207 : vector<640xf32> to vector<1x640xf32>
      %209 = vector.broadcast %208 : vector<1x640xf32> to vector<14x640xf32>
      %210 = arith.mulf %205, %209 : vector<14x640xf32>
      %211 = arith.addf %201, %210 : vector<14x640xf32>
      %c3_i32_144 = arith.constant 3 : i32
      %212 = arith.addi %arg8, %c3_i32_144 : i32
      %c0_145 = arith.constant 0 : index
      %213 = arith.index_cast %212 : i32 to index
      %c4_146 = arith.constant 4 : index
      %c0_147 = arith.constant 0 : index
      %214 = vector.load %arg1[%c0_145, %213, %c4_146, %c0_147] : memref<1x18x18x640xf32, #tpu.memory_space<vmem>>, vector<1x1x14x640xf32>
      %215 = vector.shape_cast %214 : vector<1x1x14x640xf32> to vector<14x640xf32>
      %c3_148 = arith.constant 3 : index
      %c4_149 = arith.constant 4 : index
      %c0_150 = arith.constant 0 : index
      %216 = vector.load %arg2[%c3_148, %c4_149, %c0_150] : memref<5x5x640xf32, #tpu.memory_space<vmem>>, vector<1x1x640xf32>
      %217 = vector.shape_cast %216 : vector<1x1x640xf32> to vector<640xf32>
      %218 = vector.shape_cast %217 : vector<640xf32> to vector<1x640xf32>
      %219 = vector.broadcast %218 : vector<1x640xf32> to vector<14x640xf32>
      %220 = arith.mulf %215, %219 : vector<14x640xf32>
      %221 = arith.addf %211, %220 : vector<14x640xf32>
      %c4_i32 = arith.constant 4 : i32
      %222 = arith.addi %arg8, %c4_i32 : i32
      %c0_151 = arith.constant 0 : index
      %223 = arith.index_cast %222 : i32 to index
      %c0_152 = arith.constant 0 : index
      %c0_153 = arith.constant 0 : index
      %224 = vector.load %arg1[%c0_151, %223, %c0_152, %c0_153] : memref<1x18x18x640xf32, #tpu.memory_space<vmem>>, vector<1x1x14x640xf32>
      %225 = vector.shape_cast %224 : vector<1x1x14x640xf32> to vector<14x640xf32>
      %c4_154 = arith.constant 4 : index
      %c0_155 = arith.constant 0 : index
      %c0_156 = arith.constant 0 : index
      %226 = vector.load %arg2[%c4_154, %c0_155, %c0_156] : memref<5x5x640xf32, #tpu.memory_space<vmem>>, vector<1x1x640xf32>
      %227 = vector.shape_cast %226 : vector<1x1x640xf32> to vector<640xf32>
      %228 = vector.shape_cast %227 : vector<640xf32> to vector<1x640xf32>
      %229 = vector.broadcast %228 : vector<1x640xf32> to vector<14x640xf32>
      %230 = arith.mulf %225, %229 : vector<14x640xf32>
      %231 = arith.addf %221, %230 : vector<14x640xf32>
      %c4_i32_157 = arith.constant 4 : i32
      %232 = arith.addi %arg8, %c4_i32_157 : i32
      %c0_158 = arith.constant 0 : index
      %233 = arith.index_cast %232 : i32 to index
      %c1_159 = arith.constant 1 : index
      %c0_160 = arith.constant 0 : index
      %234 = vector.load %arg1[%c0_158, %233, %c1_159, %c0_160] : memref<1x18x18x640xf32, #tpu.memory_space<vmem>>, vector<1x1x14x640xf32>
      %235 = vector.shape_cast %234 : vector<1x1x14x640xf32> to vector<14x640xf32>
      %c4_161 = arith.constant 4 : index
      %c1_162 = arith.constant 1 : index
      %c0_163 = arith.constant 0 : index
      %236 = vector.load %arg2[%c4_161, %c1_162, %c0_163] : memref<5x5x640xf32, #tpu.memory_space<vmem>>, vector<1x1x640xf32>
      %237 = vector.shape_cast %236 : vector<1x1x640xf32> to vector<640xf32>
      %238 = vector.shape_cast %237 : vector<640xf32> to vector<1x640xf32>
      %239 = vector.broadcast %238 : vector<1x640xf32> to vector<14x640xf32>
      %240 = arith.mulf %235, %239 : vector<14x640xf32>
      %241 = arith.addf %231, %240 : vector<14x640xf32>
      %c4_i32_164 = arith.constant 4 : i32
      %242 = arith.addi %arg8, %c4_i32_164 : i32
      %c0_165 = arith.constant 0 : index
      %243 = arith.index_cast %242 : i32 to index
      %c2_166 = arith.constant 2 : index
      %c0_167 = arith.constant 0 : index
      %244 = vector.load %arg1[%c0_165, %243, %c2_166, %c0_167] : memref<1x18x18x640xf32, #tpu.memory_space<vmem>>, vector<1x1x14x640xf32>
      %245 = vector.shape_cast %244 : vector<1x1x14x640xf32> to vector<14x640xf32>
      %c4_168 = arith.constant 4 : index
      %c2_169 = arith.constant 2 : index
      %c0_170 = arith.constant 0 : index
      %246 = vector.load %arg2[%c4_168, %c2_169, %c0_170] : memref<5x5x640xf32, #tpu.memory_space<vmem>>, vector<1x1x640xf32>
      %247 = vector.shape_cast %246 : vector<1x1x640xf32> to vector<640xf32>
      %248 = vector.shape_cast %247 : vector<640xf32> to vector<1x640xf32>
      %249 = vector.broadcast %248 : vector<1x640xf32> to vector<14x640xf32>
      %250 = arith.mulf %245, %249 : vector<14x640xf32>
      %251 = arith.addf %241, %250 : vector<14x640xf32>
      %c4_i32_171 = arith.constant 4 : i32
      %252 = arith.addi %arg8, %c4_i32_171 : i32
      %c0_172 = arith.constant 0 : index
      %253 = arith.index_cast %252 : i32 to index
      %c3_173 = arith.constant 3 : index
      %c0_174 = arith.constant 0 : index
      %254 = vector.load %arg1[%c0_172, %253, %c3_173, %c0_174] : memref<1x18x18x640xf32, #tpu.memory_space<vmem>>, vector<1x1x14x640xf32>
      %255 = vector.shape_cast %254 : vector<1x1x14x640xf32> to vector<14x640xf32>
      %c4_175 = arith.constant 4 : index
      %c3_176 = arith.constant 3 : index
      %c0_177 = arith.constant 0 : index
      %256 = vector.load %arg2[%c4_175, %c3_176, %c0_177] : memref<5x5x640xf32, #tpu.memory_space<vmem>>, vector<1x1x640xf32>
      %257 = vector.shape_cast %256 : vector<1x1x640xf32> to vector<640xf32>
      %258 = vector.shape_cast %257 : vector<640xf32> to vector<1x640xf32>
      %259 = vector.broadcast %258 : vector<1x640xf32> to vector<14x640xf32>
      %260 = arith.mulf %255, %259 : vector<14x640xf32>
      %261 = arith.addf %251, %260 : vector<14x640xf32>
      %c4_i32_178 = arith.constant 4 : i32
      %262 = arith.addi %arg8, %c4_i32_178 : i32
      %c0_179 = arith.constant 0 : index
      %263 = arith.index_cast %262 : i32 to index
      %c4_180 = arith.constant 4 : index
      %c0_181 = arith.constant 0 : index
      %264 = vector.load %arg1[%c0_179, %263, %c4_180, %c0_181] : memref<1x18x18x640xf32, #tpu.memory_space<vmem>>, vector<1x1x14x640xf32>
      %265 = vector.shape_cast %264 : vector<1x1x14x640xf32> to vector<14x640xf32>
      %c4_182 = arith.constant 4 : index
      %c4_183 = arith.constant 4 : index
      %c0_184 = arith.constant 0 : index
      %266 = vector.load %arg2[%c4_182, %c4_183, %c0_184] : memref<5x5x640xf32, #tpu.memory_space<vmem>>, vector<1x1x640xf32>
      %267 = vector.shape_cast %266 : vector<1x1x640xf32> to vector<640xf32>
      %268 = vector.shape_cast %267 : vector<640xf32> to vector<1x640xf32>
      %269 = vector.broadcast %268 : vector<1x640xf32> to vector<14x640xf32>
      %270 = arith.mulf %265, %269 : vector<14x640xf32>
      %271 = arith.addf %261, %270 : vector<14x640xf32>
      %c0_185 = arith.constant 0 : index
      %272 = arith.index_cast %arg8 : i32 to index
      %c0_186 = arith.constant 0 : index
      %c0_187 = arith.constant 0 : index
      %273 = vector.load %arg5[%c0_185, %272, %c0_186, %c0_187] : memref<1x14x14x640xf32, #tpu.memory_space<vmem>>, vector<1x1x14x640xf32>
      %274 = vector.shape_cast %273 : vector<1x1x14x640xf32> to vector<14x640xf32>
      %275 = vector.shape_cast %271 : vector<14x640xf32> to vector<1x1x14x640xf32>
      tpu.vector_store %arg5[%c0_185, %272, %c0_186, %c0_187], %275 {strides = array<i32>} : memref<1x14x14x640xf32, #tpu.memory_space<vmem>>, vector<1x1x14x640xf32>,
      %cst_188 = arith.constant dense<0.000000e+00> : vector<640xf32>
      %276 = vector.multi_reduction <add>, %271, %cst_188 [0] : vector<14x640xf32> to vector<640xf32>
      %277 = vector.shape_cast %276 : vector<640xf32> to vector<1x640xf32>
      %278 = arith.addf %arg9, %277 : vector<1x640xf32>
      %279 = arith.mulf %271, %271 : vector<14x640xf32>
      %cst_189 = arith.constant dense<0.000000e+00> : vector<640xf32>
      %280 = vector.multi_reduction <add>, %279, %cst_189 [0] : vector<14x640xf32> to vector<640xf32>
      %281 = vector.shape_cast %280 : vector<640xf32> to vector<1x640xf32>
      %282 = arith.addf %arg10, %281 : vector<1x640xf32>
      scf.yield %278, %282 : vector<1x640xf32>, vector<1x640xf32>
    }
    %c14_i32_1 = arith.constant 14 : i32
    %cst_2 = arith.constant 0.00510204071 : f32
    %4 = vector.broadcast %cst_2 : f32 to vector<1x640xf32>
    %5 = arith.mulf %3#0, %4 : vector<1x640xf32>
    %cst_3 = arith.constant 0.00510204071 : f32
    %6 = vector.broadcast %cst_3 : f32 to vector<1x640xf32>
    %7 = arith.mulf %3#1, %6 : vector<1x640xf32>
    %8 = arith.mulf %5, %5 : vector<1x640xf32>
    %9 = arith.subf %7, %8 : vector<1x640xf32>
    %cst_4 = arith.constant 0.000000e+00 : f32
    %10 = vector.broadcast %cst_4 : f32 to vector<1x640xf32>
    %11 = arith.maximumf %9, %10 : vector<1x640xf32>
    %cst_5 = arith.constant 9.99999974E-6 : f32
    %12 = vector.broadcast %cst_5 : f32 to vector<1x640xf32>
    %13 = arith.addf %11, %12 : vector<1x640xf32>
    %14 = math.rsqrt %13 : vector<1x640xf32>
    %c0 = arith.constant 0 : index
    %c0_6 = arith.constant 0 : index
    %15 = vector.load %arg3[%c0, %c0_6] : memref<1x640xf32, #tpu.memory_space<vmem>>, vector<1x640xf32>
    %16 = arith.mulf %15, %14 : vector<1x640xf32>
    %c0_7 = arith.constant 0 : index
    %c0_8 = arith.constant 0 : index
    %17 = vector.load %arg4[%c0_7, %c0_8] : memref<1x640xf32, #tpu.memory_space<vmem>>, vector<1x640xf32>
    %18 = arith.mulf %5, %16 : vector<1x640xf32>
    %19 = arith.subf %17, %18 : vector<1x640xf32>
    %c0_9 = arith.constant 0 : index
    %c0_10 = arith.constant 0 : index
    %20 = vector.load %arg6[%c0_9, %c0_10] : memref<1x640xf32, #tpu.memory_space<vmem>>, vector<1x640xf32>
    tpu.vector_store %arg6[%c0_9, %c0_10], %5 {strides = array<i32>} : memref<1x640xf32, #tpu.memory_space<vmem>>, vector<1x640xf32>,
    %c0_11 = arith.constant 0 : index
    %c0_12 = arith.constant 0 : index
    %21 = vector.load %arg7[%c0_11, %c0_12] : memref<1x640xf32, #tpu.memory_space<vmem>>, vector<1x640xf32>
    tpu.vector_store %arg7[%c0_11, %c0_12], %11 {strides = array<i32>} : memref<1x640xf32, #tpu.memory_space<vmem>>, vector<1x640xf32>,
    %c0_i32_13 = arith.constant 0 : i32
    %c14_i32_14 = arith.constant 14 : i32
    %22 = arith.addi %c0_i32_13, %c14_i32_14 : i32
    %c1_i32_15 = arith.constant 1 : i32
    scf.for %arg8 = %c0_i32_13 to %22 step %c1_i32_15  : i32 {
      %c0_17 = arith.constant 0 : index
      %23 = arith.index_cast %arg8 : i32 to index
      %c0_18 = arith.constant 0 : index
      %c0_19 = arith.constant 0 : index
      %24 = vector.load %arg5[%c0_17, %23, %c0_18, %c0_19] : memref<1x14x14x640xf32, #tpu.memory_space<vmem>>, vector<1x1x14x640xf32>
      %25 = vector.shape_cast %24 : vector<1x1x14x640xf32> to vector<14x640xf32>
      %26 = vector.broadcast %16 : vector<1x640xf32> to vector<14x640xf32>
      %27 = arith.mulf %25, %26 : vector<14x640xf32>
      %28 = vector.broadcast %19 : vector<1x640xf32> to vector<14x640xf32>
      %29 = arith.addf %27, %28 : vector<14x640xf32>
      %c0_20 = arith.constant 0 : index
      %30 = arith.index_cast %arg8 : i32 to index
      %c0_21 = arith.constant 0 : index
      %c0_22 = arith.constant 0 : index
      %31 = vector.load %arg5[%c0_20, %30, %c0_21, %c0_22] : memref<1x14x14x640xf32, #tpu.memory_space<vmem>>, vector<1x1x14x640xf32>
      %32 = vector.shape_cast %31 : vector<1x1x14x640xf32> to vector<14x640xf32>
      %33 = vector.shape_cast %29 : vector<14x640xf32> to vector<1x1x14x640xf32>
      tpu.vector_store %arg5[%c0_20, %30, %c0_21, %c0_22], %33 {strides = array<i32>} : memref<1x14x14x640xf32, #tpu.memory_space<vmem>>, vector<1x1x14x640xf32>,
    }
    %c14_i32_16 = arith.constant 14 : i32
    return
  }
  func.func @transform_0(%arg0: i32) -> (i32, i32, i32, i32) {
    %c0_i32 = arith.constant 0 : i32
    %c0_i32_0 = arith.constant 0 : i32
    %c0_i32_1 = arith.constant 0 : i32
    %c0_i32_2 = arith.constant 0 : i32
    return %c0_i32, %c0_i32_0, %c0_i32_1, %arg0 : i32, i32, i32, i32
  }
  func.func @transform_1(%arg0: i32) -> (i32, i32, i32) {
    %c0_i32 = arith.constant 0 : i32
    %c0_i32_0 = arith.constant 0 : i32
    %c0_i32_1 = arith.constant 0 : i32
    return %c0_i32, %c0_i32_0, %arg0 : i32, i32, i32
  }
  func.func @transform_2(%arg0: i32) -> (i32, i32) {
    %c0_i32 = arith.constant 0 : i32
    %c0_i32_0 = arith.constant 0 : i32
    return %c0_i32, %arg0 : i32, i32
  }
  func.func @transform_3(%arg0: i32) -> (i32, i32) {
    %c0_i32 = arith.constant 0 : i32
    %c0_i32_0 = arith.constant 0 : i32
    return %c0_i32, %arg0 : i32, i32
  }
  func.func @transform_4(%arg0: i32) -> (i32, i32, i32, i32) {
    %c0_i32 = arith.constant 0 : i32
    %c0_i32_0 = arith.constant 0 : i32
    %c0_i32_1 = arith.constant 0 : i32
    %c0_i32_2 = arith.constant 0 : i32
    return %c0_i32, %c0_i32_0, %c0_i32_1, %arg0 : i32, i32, i32, i32
  }
  func.func @transform_5(%arg0: i32) -> (i32, i32) {
    %c0_i32 = arith.constant 0 : i32
    %c0_i32_0 = arith.constant 0 : i32
    return %c0_i32, %arg0 : i32, i32
  }
  func.func @transform_6(%arg0: i32) -> (i32, i32) {
    %c0_i32 = arith.constant 0 : i32
    %c0_i32_0 = arith.constant 0 : i32
    return %c0_i32, %arg0 : i32, i32
  }
}

</mosaic_0001>

<llo_original>
// kernel: tpu_custom_call.1
$region0: #{tpu_custom_call.1}
  #allocation0 [shape = 'u32[]', space=smem, size = 0x4, offset = 0x4, fixed_abs, tag = 'smem constant byte address 0x4 - core index']
  #allocation1 [shape = 'u32[144,128]{1,0:T(1,128)}', space=vmem, size = 0x12000, scoped, tag = 'internal scratch']
  %s0 = inlined_call_operand.vmem [shape: f32[1,18,18,1280], index: 0, kind: input, shape index: {}]
  %s1 = inlined_call_operand.vmem [shape: f32[5,5,1280], index: 1, kind: input, shape index: {}]
  %s2 = inlined_call_operand.vmem [shape: f32[1,1280], index: 2, kind: input, shape index: {}]
  %s3 = inlined_call_operand.vmem [shape: f32[1,1280], index: 3, kind: input, shape index: {}]
  %s4 = inlined_call_operand.vmem [shape: f32[1,14,14,1280], index: 4, kind: output, shape index: {0}]
  %s5 = inlined_call_operand.hbm [shape: f32[1,1280], index: 5, kind: output, shape index: {1}]
  %s6 = inlined_call_operand.hbm [shape: f32[1,1280], index: 6, kind: output, shape index: {2}]
  %7 = xla_tuple %s4, %s5, %s6
  %s8 = sld [smem:[#allocation0]]
  $region144: #{tpu_custom_call.1} parent=0
    _
  %s10 = ssub.s32 1, %s8
  %s11 = scalar_select 0, %s10, %s8
  $region1: #{tpu_custom_call.1} parent=0
    #allocation2 [shape = 'u8[2211840]{0}', space=vmem, size = 0x21c000, scoped, tag = 'input window, operand 0']
    #allocation3 [shape = 'u8[204800]{0}', space=vmem, size = 0x32000, scoped, tag = 'input window, operand 1']
    #allocation4 [shape = 'u8[1146880]{0}', space=vmem, size = 0x118000, scoped, tag = 'output window, operand 0']
    #allocation5 [shape = 'u8[5120]{0}', space=vmem, size = 0x1400, scoped, tag = 'output window, operand 1']
    #allocation6 [shape = 's32[2]{0}', space=sflag, size = 0x8, scoped, tag = 'scoped memory for tpu_custom_call.1']
    #allocation7 [shape = 'u8[5120]{0}', space=vmem, size = 0x1400, scoped, tag = 'output window, operand 2']
    #allocation8 [shape = 's32[2]{0}', space=sflag, size = 0x8, scoped, tag = 'scoped memory for tpu_custom_call.1']
    %12 = vsyncpa [#allocation6], 0
    %s13 = scalar_lea.sflag [#allocation6], 1
    %14 = vsyncpa %s13, 0
    %15 = vsyncpa [#allocation8], 0
    %s16 = scalar_lea.sflag [#allocation8], 1
    %17 = vsyncpa %s16, 0
    loop: start=0, step=1, limit=4
    $region2: #{tpu_custom_call.1} parent=1 // loop_pre_header
      _
    $region3: #{tpu_custom_call.1} parent=1 // loop_header
      %s19 = sphi 0, %s23
      %p20 = scmp.ge.s32.totalorder %s19, 4
      %s29 = sphi 0, %s31
      %s32 = sphi 0, %s29
      %s33 = sphi 0, %s32
      %s49 = sphi 0, %s33
      %s55 = sphi 0, %s57
      %s58 = sphi 0, %s55
      %s59 = sphi 0, %s58
      %s75 = sphi 0, %s59
      %s81 = sphi 0, %s83
      %s84 = sphi 0, %s81
      %s85 = sphi 0, %s84
      %s101 = sphi 0, %s85
      %s107 = sphi 0, %s109
      %s110 = sphi 0, %s107
      %s111 = sphi 0, %s110
      %s127 = sphi 0, %s111
      %s133 = sphi 0, %s135
      %s136 = sphi 0, %s133
      %s137 = sphi 0, %s136
      %s153 = sphi 0, %s137
      %s159 = sphi 0, %s161
      %s162 = sphi 0, %s159
      %s163 = sphi 0, %s162
      %s179 = sphi 0, %s163
      %s185 = sphi 0, %s187
      %s188 = sphi 0, %s185
      %s189 = sphi 0, %s188
      %s205 = sphi 0, %s189
    $region4: #{tpu_custom_call.1} parent=1 // loop_header_branch
      %22 = sbr.rel (%p20) target = $region8
    $region5: #{tpu_custom_call.1} parent=1 // loop_body
      %s24 = ssub.s32 %s19, 1
      %s25 = ssub.s32 %s19, 2
      %s26 = sadd.s32 %s19, 1
      %s27 = ssub.s32 %s19, %s26
      %p28 = scmp.eq.s32.totalorder %s27, 0
      %s30 = sadd.s32 %s29, 1
      %s31 = scalar_select %p28, %s29, %s30
      %p34 = pneg %p28
      %p35 = scmp.eq.s32.totalorder %s19, 1
      %p36 = por %p34, %p35
      %p37 = scmp.ne.s32.totalorder %s29, %s32
      %p38 = scmp.eq.s32.totalorder %s19, 0
      %p39 = por %p37, %p38
      %p40 = scmp.ne.s32.totalorder %s29, %s32
      %p41 = scmp.eq.s32.totalorder %s24, 1
      %p42 = por %p40, %p41
      %p43 = scmp.ne.s32.totalorder %s32, %s33
      %p44 = scmp.eq.s32.totalorder %s24, 0
      %p45 = por %p43, %p44
      %p46 = scmp.ne.s32.totalorder %s32, %s33
      %p47 = scmp.eq.s32.totalorder %s25, 1
      %p48 = por %p46, %p47
      %p50 = scmp.ne.s32.totalorder %s33, %s49
      %p51 = scmp.eq.s32.totalorder %s25, 0
      %p52 = por %p50, %p51
      %s53 = ssub.s32 %s19, %s26
      %p54 = scmp.eq.s32.totalorder %s53, 0
      %s56 = sadd.s32 %s55, 1
      %s57 = scalar_select %p54, %s55, %s56
      %p60 = pneg %p54
      %p61 = scmp.eq.s32.totalorder %s19, 1
      %p62 = por %p60, %p61
      %p63 = scmp.ne.s32.totalorder %s55, %s58
      %p64 = scmp.eq.s32.totalorder %s19, 0
      %p65 = por %p63, %p64
      %p66 = scmp.ne.s32.totalorder %s55, %s58
      %p67 = scmp.eq.s32.totalorder %s24, 1
      %p68 = por %p66, %p67
      %p69 = scmp.ne.s32.totalorder %s58, %s59
      %p70 = scmp.eq.s32.totalorder %s24, 0
      %p71 = por %p69, %p70
      %p72 = scmp.ne.s32.totalorder %s58, %s59
      %p73 = scmp.eq.s32.totalorder %s25, 1
      %p74 = por %p72, %p73
      %p76 = scmp.ne.s32.totalorder %s59, %s75
      %p77 = scmp.eq.s32.totalorder %s25, 0
      %p78 = por %p76, %p77
      %s79 = ssub.s32 %s19, %s26
      %p80 = scmp.eq.s32.totalorder %s79, 0
      %s82 = sadd.s32 %s81, 1
      %s83 = scalar_select %p80, %s81, %s82
      %p86 = pneg %p80
      %p87 = scmp.eq.s32.totalorder %s19, 1
      %p88 = por %p86, %p87
      %p89 = scmp.ne.s32.totalorder %s81, %s84
      %p90 = scmp.eq.s32.totalorder %s19, 0
      %p91 = por %p89, %p90
      %p92 = scmp.ne.s32.totalorder %s81, %s84
      %p93 = scmp.eq.s32.totalorder %s24, 1
      %p94 = por %p92, %p93
      %p95 = scmp.ne.s32.totalorder %s84, %s85
      %p96 = scmp.eq.s32.totalorder %s24, 0
      %p97 = por %p95, %p96
      %p98 = scmp.ne.s32.totalorder %s84, %s85
      %p99 = scmp.eq.s32.totalorder %s25, 1
      %p100 = por %p98, %p99
      %p102 = scmp.ne.s32.totalorder %s85, %s101
      %p103 = scmp.eq.s32.totalorder %s25, 0
      %p104 = por %p102, %p103
      %s105 = ssub.s32 %s19, %s26
      %p106 = scmp.eq.s32.totalorder %s105, 0
      %s108 = sadd.s32 %s107, 1
      %s109 = scalar_select %p106, %s107, %s108
      %p112 = pneg %p106
      %p113 = scmp.eq.s32.totalorder %s19, 1
      %p114 = por %p112, %p113
      %p115 = scmp.ne.s32.totalorder %s107, %s110
      %p116 = scmp.eq.s32.totalorder %s19, 0
      %p117 = por %p115, %p116
      %p118 = scmp.ne.s32.totalorder %s107, %s110
      %p119 = scmp.eq.s32.totalorder %s24, 1
      %p120 = por %p118, %p119
      %p121 = scmp.ne.s32.totalorder %s110, %s111
      %p122 = scmp.eq.s32.totalorder %s24, 0
      %p123 = por %p121, %p122
      %p124 = scmp.ne.s32.totalorder %s110, %s111
      %p125 = scmp.eq.s32.totalorder %s25, 1
      %p126 = por %p124, %p125
      %p128 = scmp.ne.s32.totalorder %s111, %s127
      %p129 = scmp.eq.s32.totalorder %s25, 0
      %p130 = por %p128, %p129
      %s131 = ssub.s32 %s19, %s26
      %p132 = scmp.eq.s32.totalorder %s131, 0
      %s134 = sadd.s32 %s133, 1
      %s135 = scalar_select %p132, %s133, %s134
      %p138 = pneg %p132
      %p139 = scmp.eq.s32.totalorder %s19, 1
      %p140 = por %p138, %p139
      %p141 = scmp.ne.s32.totalorder %s133, %s136
      %p142 = scmp.eq.s32.totalorder %s19, 0
      %p143 = por %p141, %p142
      %p144 = scmp.ne.s32.totalorder %s133, %s136
      %p145 = scmp.eq.s32.totalorder %s24, 1
      %p146 = por %p144, %p145
      %p147 = scmp.ne.s32.totalorder %s136, %s137
      %p148 = scmp.eq.s32.totalorder %s24, 0
      %p149 = por %p147, %p148
      %p150 = scmp.ne.s32.totalorder %s136, %s137
      %p151 = scmp.eq.s32.totalorder %s25, 1
      %p152 = por %p150, %p151
      %p154 = scmp.ne.s32.totalorder %s137, %s153
      %p155 = scmp.eq.s32.totalorder %s25, 0
      %p156 = por %p154, %p155
      %s157 = ssub.s32 %s19, %s26
      %p158 = scmp.eq.s32.totalorder %s157, 0
      %s160 = sadd.s32 %s159, 1
      %s161 = scalar_select %p158, %s159, %s160
      %p164 = pneg %p158
      %p165 = scmp.eq.s32.totalorder %s19, 1
      %p166 = por %p164, %p165
      %p167 = scmp.ne.s32.totalorder %s159, %s162
      %p168 = scmp.eq.s32.totalorder %s19, 0
      %p169 = por %p167, %p168
      %p170 = scmp.ne.s32.totalorder %s159, %s162
      %p171 = scmp.eq.s32.totalorder %s24, 1
      %p172 = por %p170, %p171
      %p173 = scmp.ne.s32.totalorder %s162, %s163
      %p174 = scmp.eq.s32.totalorder %s24, 0
      %p175 = por %p173, %p174
      %p176 = scmp.ne.s32.totalorder %s162, %s163
      %p177 = scmp.eq.s32.totalorder %s25, 1
      %p178 = por %p176, %p177
      %p180 = scmp.ne.s32.totalorder %s163, %s179
      %p181 = scmp.eq.s32.totalorder %s25, 0
      %p182 = por %p180, %p181
      %s183 = ssub.s32 %s19, %s26
      %p184 = scmp.eq.s32.totalorder %s183, 0
      %s186 = sadd.s32 %s185, 1
      %s187 = scalar_select %p184, %s185, %s186
      %p190 = pneg %p184
      %p191 = scmp.eq.s32.totalorder %s19, 1
      %p192 = por %p190, %p191
      %p193 = scmp.ne.s32.totalorder %s185, %s188
      %p194 = scmp.eq.s32.totalorder %s19, 0
      %p195 = por %p193, %p194
      %p196 = scmp.ne.s32.totalorder %s185, %s188
      %p197 = scmp.eq.s32.totalorder %s24, 1
      %p198 = por %p196, %p197
      %p199 = scmp.ne.s32.totalorder %s188, %s189
      %p200 = scmp.eq.s32.totalorder %s24, 0
      %p201 = por %p199, %p200
      %p202 = scmp.ne.s32.totalorder %s188, %s189
      %p203 = scmp.eq.s32.totalorder %s25, 1
      %p204 = por %p202, %p203
      %p206 = scmp.ne.s32.totalorder %s189, %s205
      %p207 = scmp.eq.s32.totalorder %s25, 0
      %p208 = por %p206, %p207
      %p209 = scmp.le.s32.totalorder 1, %s19
      %p210 = scmp.lt.s32.totalorder %s19, 3
      %p211 = pnand %p209, %p210
      %p212 = pneg %p211
      // Predicated region
      $region9: #{tpu_custom_call.1} parent=5 // pred_check
        _
      $region10: #{tpu_custom_call.1} parent=5 // pred_check_branch
        %214 = sbr.rel (%p211) target = $region12
      $region11: #{tpu_custom_call.1} parent=5 // pred_region
        %s215 = ssub.s32 %s19, 1
      $region12: #{tpu_custom_call.1} parent=5 // pred_fallthru
        _
      %p216 = scmp.lt.s32.totalorder %s19, 2
      // Predicated region
      $region13: #{tpu_custom_call.1} parent=5 // pred_check
        %p217 = pneg %p216
      $region14: #{tpu_custom_call.1} parent=5 // pred_check_branch
        %219 = sbr.rel (%p217) target = $region16
      $region15: #{tpu_custom_call.1} parent=5 // pred_region
        // Predicated region
        $region17: #{tpu_custom_call.1} parent=15 // pred_check
          %p220 = pneg %p39
        $region18: #{tpu_custom_call.1} parent=15 // pred_check_branch
          %222 = sbr.rel (%p220) target = $region20
        $region19: #{tpu_custom_call.1} parent=15 // pred_region
          %s223 = sand.u32 %s29, 1
          %s224 = sand.u32 %s29, 1
          %s225 = smul.addr %s224, 2160
          %s226 = scalar_lea.vmem [#allocation2], %s225
          %s227 = smul.u32 5, %s19
          %s228 = smul.addr %s227, 8
          %s229 = scalar_lea.vmem %s0, %s228
          // Predicated region
          $region21: #{tpu_custom_call.1} parent=19 // pred_check
            _
          $region22: #{tpu_custom_call.1} parent=19 // pred_check_branch
            %231 = sbr.rel (0) target = $region24
          $region23: #{tpu_custom_call.1} parent=19 // pred_region
            // Predicated region
            $region25: #{tpu_custom_call.1} parent=23 // pred_check
              _
            $region26: #{tpu_custom_call.1} parent=23 // pred_check_branch
              %233 = sbr.rel (0) target = $region28
            $region27: #{tpu_custom_call.1} parent=23 // pred_region
              loop: start=0, step=1, limit=1
              $region29: #{tpu_custom_call.1} parent=27 // loop_pre_header
                _
              $region30: #{tpu_custom_call.1} parent=27 // loop_header
                %s235 = sphi 0, %s239
                %p236 = scmp.ge.s32.totalorder %s235, 1
                %s240 = sphi %s229, %s229
                %s241 = sphi %s226, %s226
              $region31: #{tpu_custom_call.1} parent=27 // loop_header_branch
                %238 = sbr.rel (%p236) target = $region35
              $region32: #{tpu_custom_call.1} parent=27 // loop_body
                %v242 = vld [vmem:[%s240] sm:$0xff]
                %243 = vst [vmem:[%s241] sm:$0xff] %v242
                %v244 = vld [vmem:[%s240 + $0x8] sm:$0xff]
                %245 = vst [vmem:[%s241 + $0x8] sm:$0xff] %v244
                %v246 = vld [vmem:[%s240 + $0x10] sm:$0xff]
                %247 = vst [vmem:[%s241 + $0x10] sm:$0xff] %v246
                %v248 = vld [vmem:[%s240 + $0x18] sm:$0xff]
                %249 = vst [vmem:[%s241 + $0x18] sm:$0xff] %v248
                %v250 = vld [vmem:[%s240 + $0x20] sm:$0xff]
                %251 = vst [vmem:[%s241 + $0x20] sm:$0xff] %v250
                %v252 = vld [vmem:[%s240 + $0x50] sm:$0xff]
                %253 = vst [vmem:[%s241 + $0x28] sm:$0xff] %v252
                %v254 = vld [vmem:[%s240 + $0x58] sm:$0xff]
                %255 = vst [vmem:[%s241 + $0x30] sm:$0xff] %v254
                %v256 = vld [vmem:[%s240 + $0x60] sm:$0xff]
                %257 = vst [vmem:[%s241 + $0x38] sm:$0xff] %v256
                %v258 = vld [vmem:[%s240 + $0x68] sm:$0xff]
                %259 = vst [vmem:[%s241 + $0x40] sm:$0xff] %v258
                %v260 = vld [vmem:[%s240 + $0x70] sm:$0xff]
                %261 = vst [vmem:[%s241 + $0x48] sm:$0xff] %v260
                %v262 = vld [vmem:[%s240 + $0xa0] sm:$0xff]
                %263 = vst [vmem:[%s241 + $0x50] sm:$0xff] %v262
                %v264 = vld [vmem:[%s240 + $0xa8] sm:$0xff]
                %265 = vst [vmem:[%s241 + $0x58] sm:$0xff] %v264
                %v266 = vld [vmem:[%s240 + $0xb0] sm:$0xff]
                %267 = vst [vmem:[%s241 + $0x60] sm:$0xff] %v266
                %v268 = vld [vmem:[%s240 + $0xb8] sm:$0xff]
                %269 = vst [vmem:[%s241 + $0x68] sm:$0xff] %v268
                %v270 = vld [vmem:[%s240 + $0xc0] sm:$0xff]
                %271 = vst [vmem:[%s241 + $0x70] sm:$0xff] %v270
                %v272 = vld [vmem:[%s240 + $0xf0] sm:$0xff]
                %273 = vst [vmem:[%s241 + $0x78] sm:$0xff] %v272
                %v274 = vld [vmem:[%s240 + $0xf8] sm:$0xff]
                %275 = vst [vmem:[%s241 + $0x80] sm:$0xff] %v274
                %v276 = vld [vmem:[%s240 + $0x100] sm:$0xff]
                %277 = vst [vmem:[%s241 + $0x88] sm:$0xff] %v276
                %v278 = vld [vmem:[%s240 + $0x108] sm:$0xff]
                %279 = vst [vmem:[%s241 + $0x90] sm:$0xff] %v278
                %v280 = vld [vmem:[%s240 + $0x110] sm:$0xff]
                %281 = vst [vmem:[%s241 + $0x98] sm:$0xff] %v280
                %v282 = vld [vmem:[%s240 + $0x140] sm:$0xff]
                %283 = vst [vmem:[%s241 + $0xa0] sm:$0xff] %v282
                %v284 = vld [vmem:[%s240 + $0x148] sm:$0xff]
                %285 = vst [vmem:[%s241 + $0xa8] sm:$0xff] %v284
                %v286 = vld [vmem:[%s240 + $0x150] sm:$0xff]
                %287 = vst [vmem:[%s241 + $0xb0] sm:$0xff] %v286
                %v288 = vld [vmem:[%s240 + $0x158] sm:$0xff]
                %289 = vst [vmem:[%s241 + $0xb8] sm:$0xff] %v288
                %v290 = vld [vmem:[%s240 + $0x160] sm:$0xff]
                %291 = vst [vmem:[%s241 + $0xc0] sm:$0xff] %v290
                %v292 = vld [vmem:[%s240 + $0x190] sm:$0xff]
                %293 = vst [vmem:[%s241 + $0xc8] sm:$0xff] %v292
                %v294 = vld [vmem:[%s240 + $0x198] sm:$0xff]
                %295 = vst [vmem:[%s241 + $0xd0] sm:$0xff] %v294
                %v296 = vld [vmem:[%s240 + $0x1a0] sm:$0xff]
                %297 = vst [vmem:[%s241 + $0xd8] sm:$0xff] %v296
                %v298 = vld [vmem:[%s240 + $0x1a8] sm:$0xff]
                %299 = vst [vmem:[%s241 + $0xe0] sm:$0xff] %v298
                %v300 = vld [vmem:[%s240 + $0x1b0] sm:$0xff]
                %301 = vst [vmem:[%s241 + $0xe8] sm:$0xff] %v300
                %v302 = vld [vmem:[%s240 + $0x1e0] sm:$0xff]
                %303 = vst [vmem:[%s241 + $0xf0] sm:$0xff] %v302
                %v304 = vld [vmem:[%s240 + $0x1e8] sm:$0xff]
                %305 = vst [vmem:[%s241 + $0xf8] sm:$0xff] %v304
                %v306 = vld [vmem:[%s240 + $0x1f0] sm:$0xff]
                %307 = vst [vmem:[%s241 + $0x100] sm:$0xff] %v306
                %v308 = vld [vmem:[%s240 + $0x1f8] sm:$0xff]
                %309 = vst [vmem:[%s241 + $0x108] sm:$0xff] %v308
                %v310 = vld [vmem:[%s240 + $0x200] sm:$0xff]
                %311 = vst [vmem:[%s241 + $0x110] sm:$0xff] %v310
                %v312 = vld [vmem:[%s240 + $0x230] sm:$0xff]
                %313 = vst [vmem:[%s241 + $0x118] sm:$0xff] %v312
                %v314 = vld [vmem:[%s240 + $0x238] sm:$0xff]
                %315 = vst [vmem:[%s241 + $0x120] sm:$0xff] %v314
                %v316 = vld [vmem:[%s240 + $0x240] sm:$0xff]
                %317 = vst [vmem:[%s241 + $0x128] sm:$0xff] %v316
                %v318 = vld [vmem:[%s240 + $0x248] sm:$0xff]
                %319 = vst [vmem:[%s241 + $0x130] sm:$0xff] %v318
                %v320 = vld [vmem:[%s240 + $0x250] sm:$0xff]
                %321 = vst [vmem:[%s241 + $0x138] sm:$0xff] %v320
                %v322 = vld [vmem:[%s240 + $0x280] sm:$0xff]
                %323 = vst [vmem:[%s241 + $0x140] sm:$0xff] %v322
                %v324 = vld [vmem:[%s240 + $0x288] sm:$0xff]
                %325 = vst [vmem:[%s241 + $0x148] sm:$0xff] %v324
                %v326 = vld [vmem:[%s240 + $0x290] sm:$0xff]
                %327 = vst [vmem:[%s241 + $0x150] sm:$0xff] %v326
                %v328 = vld [vmem:[%s240 + $0x298] sm:$0xff]
                %329 = vst [vmem:[%s241 + $0x158] sm:$0xff] %v328
                %v330 = vld [vmem:[%s240 + $0x2a0] sm:$0xff]
                %331 = vst [vmem:[%s241 + $0x160] sm:$0xff] %v330
                %v332 = vld [vmem:[%s240 + $0x2d0] sm:$0xff]
                %333 = vst [vmem:[%s241 + $0x168] sm:$0xff] %v332
                %v334 = vld [vmem:[%s240 + $0x2d8] sm:$0xff]
                %335 = vst [vmem:[%s241 + $0x170] sm:$0xff] %v334
                %v336 = vld [vmem:[%s240 + $0x2e0] sm:$0xff]
                %337 = vst [vmem:[%s241 + $0x178] sm:$0xff] %v336
                %v338 = vld [vmem:[%s240 + $0x2e8] sm:$0xff]
                %339 = vst [vmem:[%s241 + $0x180] sm:$0xff] %v338
                %v340 = vld [vmem:[%s240 + $0x2f0] sm:$0xff]
                %341 = vst [vmem:[%s241 + $0x188] sm:$0xff] %v340
                %v342 = vld [vmem:[%s240 + $0x320] sm:$0xff]
                %343 = vst [vmem:[%s241 + $0x190] sm:$0xff] %v342
                %v344 = vld [vmem:[%s240 + $0x328] sm:$0xff]
                %345 = vst [vmem:[%s241 + $0x198] sm:$0xff] %v344
                %v346 = vld [vmem:[%s240 + $0x330] sm:$0xff]
                %347 = vst [vmem:[%s241 + $0x1a0] sm:$0xff] %v346
                %v348 = vld [vmem:[%s240 + $0x338] sm:$0xff]
                %349 = vst [vmem:[%s241 + $0x1a8] sm:$0xff] %v348
                %v350 = vld [vmem:[%s240 + $0x340] sm:$0xff]
                %351 = vst [vmem:[%s241 + $0x1b0] sm:$0xff] %v350
                %v352 = vld [vmem:[%s240 + $0x370] sm:$0xff]
                %353 = vst [vmem:[%s241 + $0x1b8] sm:$0xff] %v352
                %v354 = vld [vmem:[%s240 + $0x378] sm:$0xff]
                %355 = vst [vmem:[%s241 + $0x1c0] sm:$0xff] %v354
                %v356 = vld [vmem:[%s240 + $0x380] sm:$0xff]
                %357 = vst [vmem:[%s241 + $0x1c8] sm:$0xff] %v356
                %v358 = vld [vmem:[%s240 + $0x388] sm:$0xff]
                %359 = vst [vmem:[%s241 + $0x1d0] sm:$0xff] %v358
                %v360 = vld [vmem:[%s240 + $0x390] sm:$0xff]
                %361 = vst [vmem:[%s241 + $0x1d8] sm:$0xff] %v360
                %v362 = vld [vmem:[%s240 + $0x3c0] sm:$0xff]
                %363 = vst [vmem:[%s241 + $0x1e0] sm:$0xff] %v362
                %v364 = vld [vmem:[%s240 + $0x3c8] sm:$0xff]
                %365 = vst [vmem:[%s241 + $0x1e8] sm:$0xff] %v364
                %v366 = vld [vmem:[%s240 + $0x3d0] sm:$0xff]
                %367 = vst [vmem:[%s241 + $0x1f0] sm:$0xff] %v366
                %v368 = vld [vmem:[%s240 + $0x3d8] sm:$0xff]
                %369 = vst [vmem:[%s241 + $0x1f8] sm:$0xff] %v368
                %v370 = vld [vmem:[%s240 + $0x3e0] sm:$0xff]
                %371 = vst [vmem:[%s241 + $0x200] sm:$0xff] %v370
                %v372 = vld [vmem:[%s240 + $0x410] sm:$0xff]
                %373 = vst [vmem:[%s241 + $0x208] sm:$0xff] %v372
                %v374 = vld [vmem:[%s240 + $0x418] sm:$0xff]
                %375 = vst [vmem:[%s241 + $0x210] sm:$0xff] %v374
                %v376 = vld [vmem:[%s240 + $0x420] sm:$0xff]
                %377 = vst [vmem:[%s241 + $0x218] sm:$0xff] %v376
                %v378 = vld [vmem:[%s240 + $0x428] sm:$0xff]
                %379 = vst [vmem:[%s241 + $0x220] sm:$0xff] %v378
                %v380 = vld [vmem:[%s240 + $0x430] sm:$0xff]
                %381 = vst [vmem:[%s241 + $0x228] sm:$0xff] %v380
                %v382 = vld [vmem:[%s240 + $0x460] sm:$0xff]
                %383 = vst [vmem:[%s241 + $0x230] sm:$0xff] %v382
                %v384 = vld [vmem:[%s240 + $0x468] sm:$0xff]
                %385 = vst [vmem:[%s241 + $0x238] sm:$0xff] %v384
                %v386 = vld [vmem:[%s240 + $0x470] sm:$0xff]
                %387 = vst [vmem:[%s241 + $0x240] sm:$0xff] %v386
                %v388 = vld [vmem:[%s240 + $0x478] sm:$0xff]
                %389 = vst [vmem:[%s241 + $0x248] sm:$0xff] %v388
                %v390 = vld [vmem:[%s240 + $0x480] sm:$0xff]
                %391 = vst [vmem:[%s241 + $0x250] sm:$0xff] %v390
                %v392 = vld [vmem:[%s240 + $0x4b0] sm:$0xff]
                %393 = vst [vmem:[%s241 + $0x258] sm:$0xff] %v392
                %v394 = vld [vmem:[%s240 + $0x4b8] sm:$0xff]
                %395 = vst [vmem:[%s241 + $0x260] sm:$0xff] %v394
                %v396 = vld [vmem:[%s240 + $0x4c0] sm:$0xff]
                %397 = vst [vmem:[%s241 + $0x268] sm:$0xff] %v396
                %v398 = vld [vmem:[%s240 + $0x4c8] sm:$0xff]
                %399 = vst [vmem:[%s241 + $0x270] sm:$0xff] %v398
                %v400 = vld [vmem:[%s240 + $0x4d0] sm:$0xff]
                %401 = vst [vmem:[%s241 + $0x278] sm:$0xff] %v400
                %v402 = vld [vmem:[%s240 + $0x500] sm:$0xff]
                %403 = vst [vmem:[%s241 + $0x280] sm:$0xff] %v402
                %v404 = vld [vmem:[%s240 + $0x508] sm:$0xff]
                %405 = vst [vmem:[%s241 + $0x288] sm:$0xff] %v404
                %v406 = vld [vmem:[%s240 + $0x510] sm:$0xff]
                %407 = vst [vmem:[%s241 + $0x290] sm:$0xff] %v406
                %v408 = vld [vmem:[%s240 + $0x518] sm:$0xff]
                %409 = vst [vmem:[%s241 + $0x298] sm:$0xff] %v408
                %v410 = vld [vmem:[%s240 + $0x520] sm:$0xff]
                %411 = vst [vmem:[%s241 + $0x2a0] sm:$0xff] %v410
                %v412 = vld [vmem:[%s240 + $0x550] sm:$0xff]
                %413 = vst [vmem:[%s241 + $0x2a8] sm:$0xff] %v412
                %v414 = vld [vmem:[%s240 + $0x558] sm:$0xff]
                %415 = vst [vmem:[%s241 + $0x2b0] sm:$0xff] %v414
                %v416 = vld [vmem:[%s240 + $0x560] sm:$0xff]
                %417 = vst [vmem:[%s241 + $0x2b8] sm:$0xff] %v416
                %v418 = vld [vmem:[%s240 + $0x568] sm:$0xff]
                %419 = vst [vmem:[%s241 + $0x2c0] sm:$0xff] %v418
                %v420 = vld [vmem:[%s240 + $0x570] sm:$0xff]
                %421 = vst [vmem:[%s241 + $0x2c8] sm:$0xff] %v420
                %v422 = vld [vmem:[%s240 + $0x5a0] sm:$0xff]
                %423 = vst [vmem:[%s241 + $0x2d0] sm:$0xff] %v422
                %v424 = vld [vmem:[%s240 + $0x5a8] sm:$0xff]
                %425 = vst [vmem:[%s241 + $0x2d8] sm:$0xff] %v424
                %v426 = vld [vmem:[%s240 + $0x5b0] sm:$0xff]
                %427 = vst [vmem:[%s241 + $0x2e0] sm:$0xff] %v426
                %v428 = vld [vmem:[%s240 + $0x5b8] sm:$0xff]
                %429 = vst [vmem:[%s241 + $0x2e8] sm:$0xff] %v428
                %v430 = vld [vmem:[%s240 + $0x5c0] sm:$0xff]
                %431 = vst [vmem:[%s241 + $0x2f0] sm:$0xff] %v430
                %v432 = vld [vmem:[%s240 + $0x5f0] sm:$0xff]
                %433 = vst [vmem:[%s241 + $0x2f8] sm:$0xff] %v432
                %v434 = vld [vmem:[%s240 + $0x5f8] sm:$0xff]
                %435 = vst [vmem:[%s241 + $0x300] sm:$0xff] %v434
                %v436 = vld [vmem:[%s240 + $0x600] sm:$0xff]
                %437 = vst [vmem:[%s241 + $0x308] sm:$0xff] %v436
                %v438 = vld [vmem:[%s240 + $0x608] sm:$0xff]
                %439 = vst [vmem:[%s241 + $0x310] sm:$0xff] %v438
                %v440 = vld [vmem:[%s240 + $0x610] sm:$0xff]
                %441 = vst [vmem:[%s241 + $0x318] sm:$0xff] %v440
                %v442 = vld [vmem:[%s240 + $0x640] sm:$0xff]
                %443 = vst [vmem:[%s241 + $0x320] sm:$0xff] %v442
                %v444 = vld [vmem:[%s240 + $0x648] sm:$0xff]
                %445 = vst [vmem:[%s241 + $0x328] sm:$0xff] %v444
                %v446 = vld [vmem:[%s240 + $0x650] sm:$0xff]
                %447 = vst [vmem:[%s241 + $0x330] sm:$0xff] %v446
                %v448 = vld [vmem:[%s240 + $0x658] sm:$0xff]
                %449 = vst [vmem:[%s241 + $0x338] sm:$0xff] %v448
                %v450 = vld [vmem:[%s240 + $0x660] sm:$0xff]
                %451 = vst [vmem:[%s241 + $0x340] sm:$0xff] %v450
                %v452 = vld [vmem:[%s240 + $0x690] sm:$0xff]
                %453 = vst [vmem:[%s241 + $0x348] sm:$0xff] %v452
                %v454 = vld [vmem:[%s240 + $0x698] sm:$0xff]
                %455 = vst [vmem:[%s241 + $0x350] sm:$0xff] %v454
                %v456 = vld [vmem:[%s240 + $0x6a0] sm:$0xff]
                %457 = vst [vmem:[%s241 + $0x358] sm:$0xff] %v456
                %v458 = vld [vmem:[%s240 + $0x6a8] sm:$0xff]
                %459 = vst [vmem:[%s241 + $0x360] sm:$0xff] %v458
                %v460 = vld [vmem:[%s240 + $0x6b0] sm:$0xff]
                %461 = vst [vmem:[%s241 + $0x368] sm:$0xff] %v460
                %v462 = vld [vmem:[%s240 + $0x6e0] sm:$0xff]
                %463 = vst [vmem:[%s241 + $0x370] sm:$0xff] %v462
                %v464 = vld [vmem:[%s240 + $0x6e8] sm:$0xff]
                %465 = vst [vmem:[%s241 + $0x378] sm:$0xff] %v464
                %v466 = vld [vmem:[%s240 + $0x6f0] sm:$0xff]
                %467 = vst [vmem:[%s241 + $0x380] sm:$0xff] %v466
                %v468 = vld [vmem:[%s240 + $0x6f8] sm:$0xff]
                %469 = vst [vmem:[%s241 + $0x388] sm:$0xff] %v468
                %v470 = vld [vmem:[%s240 + $0x700] sm:$0xff]
                %471 = vst [vmem:[%s241 + $0x390] sm:$0xff] %v470
                %v472 = vld [vmem:[%s240 + $0x730] sm:$0xff]
                %473 = vst [vmem:[%s241 + $0x398] sm:$0xff] %v472
                %v474 = vld [vmem:[%s240 + $0x738] sm:$0xff]
                %475 = vst [vmem:[%s241 + $0x3a0] sm:$0xff] %v474
                %v476 = vld [vmem:[%s240 + $0x740] sm:$0xff]
                %477 = vst [vmem:[%s241 + $0x3a8] sm:$0xff] %v476
                %v478 = vld [vmem:[%s240 + $0x748] sm:$0xff]
                %479 = vst [vmem:[%s241 + $0x3b0] sm:$0xff] %v478
                %v480 = vld [vmem:[%s240 + $0x750] sm:$0xff]
                %481 = vst [vmem:[%s241 + $0x3b8] sm:$0xff] %v480
                %v482 = vld [vmem:[%s240 + $0x780] sm:$0xff]
                %483 = vst [vmem:[%s241 + $0x3c0] sm:$0xff] %v482
                %v484 = vld [vmem:[%s240 + $0x788] sm:$0xff]
                %485 = vst [vmem:[%s241 + $0x3c8] sm:$0xff] %v484
                %v486 = vld [vmem:[%s240 + $0x790] sm:$0xff]
                %487 = vst [vmem:[%s241 + $0x3d0] sm:$0xff] %v486
                %v488 = vld [vmem:[%s240 + $0x798] sm:$0xff]
                %489 = vst [vmem:[%s241 + $0x3d8] sm:$0xff] %v488
                %v490 = vld [vmem:[%s240 + $0x7a0] sm:$0xff]
                %491 = vst [vmem:[%s241 + $0x3e0] sm:$0xff] %v490
                %v492 = vld [vmem:[%s240 + $0x7d0] sm:$0xff]
                %493 = vst [vmem:[%s241 + $0x3e8] sm:$0xff] %v492
                %v494 = vld [vmem:[%s240 + $0x7d8] sm:$0xff]
                %495 = vst [vmem:[%s241 + $0x3f0] sm:$0xff] %v494
                %v496 = vld [vmem:[%s240 + $0x7e0] sm:$0xff]
                %497 = vst [vmem:[%s241 + $0x3f8] sm:$0xff] %v496
                %v498 = vld [vmem:[%s240 + $0x7e8] sm:$0xff]
                %499 = vst [vmem:[%s241 + $0x400] sm:$0xff] %v498
                %v500 = vld [vmem:[%s240 + $0x7f0] sm:$0xff]
                %501 = vst [vmem:[%s241 + $0x408] sm:$0xff] %v500
                %v502 = vld [vmem:[%s240 + $0x820] sm:$0xff]
                %503 = vst [vmem:[%s241 + $0x410] sm:$0xff] %v502
                %v504 = vld [vmem:[%s240 + $0x828] sm:$0xff]
                %505 = vst [vmem:[%s241 + $0x418] sm:$0xff] %v504
                %v506 = vld [vmem:[%s240 + $0x830] sm:$0xff]
                %507 = vst [vmem:[%s241 + $0x420] sm:$0xff] %v506
                %v508 = vld [vmem:[%s240 + $0x838] sm:$0xff]
                %509 = vst [vmem:[%s241 + $0x428] sm:$0xff] %v508
                %v510 = vld [vmem:[%s240 + $0x840] sm:$0xff]
                %511 = vst [vmem:[%s241 + $0x430] sm:$0xff] %v510
                %v512 = vld [vmem:[%s240 + $0x870] sm:$0xff]
                %513 = vst [vmem:[%s241 + $0x438] sm:$0xff] %v512
                %v514 = vld [vmem:[%s240 + $0x878] sm:$0xff]
                %515 = vst [vmem:[%s241 + $0x440] sm:$0xff] %v514
                %v516 = vld [vmem:[%s240 + $0x880] sm:$0xff]
                %517 = vst [vmem:[%s241 + $0x448] sm:$0xff] %v516
                %v518 = vld [vmem:[%s240 + $0x888] sm:$0xff]
                %519 = vst [vmem:[%s241 + $0x450] sm:$0xff] %v518
                %v520 = vld [vmem:[%s240 + $0x890] sm:$0xff]
                %521 = vst [vmem:[%s241 + $0x458] sm:$0xff] %v520
                %v522 = vld [vmem:[%s240 + $0x8c0] sm:$0xff]
                %523 = vst [vmem:[%s241 + $0x460] sm:$0xff] %v522
                %v524 = vld [vmem:[%s240 + $0x8c8] sm:$0xff]
                %525 = vst [vmem:[%s241 + $0x468] sm:$0xff] %v524
                %v526 = vld [vmem:[%s240 + $0x8d0] sm:$0xff]
                %527 = vst [vmem:[%s241 + $0x470] sm:$0xff] %v526
                %v528 = vld [vmem:[%s240 + $0x8d8] sm:$0xff]
                %529 = vst [vmem:[%s241 + $0x478] sm:$0xff] %v528
                %v530 = vld [vmem:[%s240 + $0x8e0] sm:$0xff]
                %531 = vst [vmem:[%s241 + $0x480] sm:$0xff] %v530
                %v532 = vld [vmem:[%s240 + $0x910] sm:$0xff]
                %533 = vst [vmem:[%s241 + $0x488] sm:$0xff] %v532
                %v534 = vld [vmem:[%s240 + $0x918] sm:$0xff]
                %535 = vst [vmem:[%s241 + $0x490] sm:$0xff] %v534
                %v536 = vld [vmem:[%s240 + $0x920] sm:$0xff]
                %537 = vst [vmem:[%s241 + $0x498] sm:$0xff] %v536
                %v538 = vld [vmem:[%s240 + $0x928] sm:$0xff]
                %539 = vst [vmem:[%s241 + $0x4a0] sm:$0xff] %v538
                %v540 = vld [vmem:[%s240 + $0x930] sm:$0xff]
                %541 = vst [vmem:[%s241 + $0x4a8] sm:$0xff] %v540
                %v542 = vld [vmem:[%s240 + $0x960] sm:$0xff]
                %543 = vst [vmem:[%s241 + $0x4b0] sm:$0xff] %v542
                %v544 = vld [vmem:[%s240 + $0x968] sm:$0xff]
                %545 = vst [vmem:[%s241 + $0x4b8] sm:$0xff] %v544
                %v546 = vld [vmem:[%s240 + $0x970] sm:$0xff]
                %547 = vst [vmem:[%s241 + $0x4c0] sm:$0xff] %v546
                %v548 = vld [vmem:[%s240 + $0x978] sm:$0xff]
                %549 = vst [vmem:[%s241 + $0x4c8] sm:$0xff] %v548
                %v550 = vld [vmem:[%s240 + $0x980] sm:$0xff]
                %551 = vst [vmem:[%s241 + $0x4d0] sm:$0xff] %v550
                %v552 = vld [vmem:[%s240 + $0x9b0] sm:$0xff]
                %553 = vst [vmem:[%s241 + $0x4d8] sm:$0xff] %v552
                %v554 = vld [vmem:[%s240 + $0x9b8] sm:$0xff]
                %555 = vst [vmem:[%s241 + $0x4e0] sm:$0xff] %v554
                %v556 = vld [vmem:[%s240 + $0x9c0] sm:$0xff]
                %557 = vst [vmem:[%s241 + $0x4e8] sm:$0xff] %v556
                %v558 = vld [vmem:[%s240 + $0x9c8] sm:$0xff]
                %559 = vst [vmem:[%s241 + $0x4f0] sm:$0xff] %v558
                %v560 = vld [vmem:[%s240 + $0x9d0] sm:$0xff]
                %561 = vst [vmem:[%s241 + $0x4f8] sm:$0xff] %v560
                %v562 = vld [vmem:[%s240 + $0xa00] sm:$0xff]
                %563 = vst [vmem:[%s241 + $0x500] sm:$0xff] %v562
                %v564 = vld [vmem:[%s240 + $0xa08] sm:$0xff]
                %565 = vst [vmem:[%s241 + $0x508] sm:$0xff] %v564
                %v566 = vld [vmem:[%s240 + $0xa10] sm:$0xff]
                %567 = vst [vmem:[%s241 + $0x510] sm:$0xff] %v566
                %v568 = vld [vmem:[%s240 + $0xa18] sm:$0xff]
                %569 = vst [vmem:[%s241 + $0x518] sm:$0xff] %v568
                %v570 = vld [vmem:[%s240 + $0xa20] sm:$0xff]
                %571 = vst [vmem:[%s241 + $0x520] sm:$0xff] %v570
                %v572 = vld [vmem:[%s240 + $0xa50] sm:$0xff]
                %573 = vst [vmem:[%s241 + $0x528] sm:$0xff] %v572
                %v574 = vld [vmem:[%s240 + $0xa58] sm:$0xff]
                %575 = vst [vmem:[%s241 + $0x530] sm:$0xff] %v574
                %v576 = vld [vmem:[%s240 + $0xa60] sm:$0xff]
                %577 = vst [vmem:[%s241 + $0x538] sm:$0xff] %v576
                %v578 = vld [vmem:[%s240 + $0xa68] sm:$0xff]
                %579 = vst [vmem:[%s241 + $0x540] sm:$0xff] %v578
                %v580 = vld [vmem:[%s240 + $0xa70] sm:$0xff]
                %581 = vst [vmem:[%s241 + $0x548] sm:$0xff] %v580
                %v582 = vld [vmem:[%s240 + $0xaa0] sm:$0xff]
                %583 = vst [vmem:[%s241 + $0x550] sm:$0xff] %v582
                %v584 = vld [vmem:[%s240 + $0xaa8] sm:$0xff]
                %585 = vst [vmem:[%s241 + $0x558] sm:$0xff] %v584
                %v586 = vld [vmem:[%s240 + $0xab0] sm:$0xff]
                %587 = vst [vmem:[%s241 + $0x560] sm:$0xff] %v586
                %v588 = vld [vmem:[%s240 + $0xab8] sm:$0xff]
                %589 = vst [vmem:[%s241 + $0x568] sm:$0xff] %v588
                %v590 = vld [vmem:[%s240 + $0xac0] sm:$0xff]
                %591 = vst [vmem:[%s241 + $0x570] sm:$0xff] %v590
                %v592 = vld [vmem:[%s240 + $0xaf0] sm:$0xff]
                %593 = vst [vmem:[%s241 + $0x578] sm:$0xff] %v592
                %v594 = vld [vmem:[%s240 + $0xaf8] sm:$0xff]
                %595 = vst [vmem:[%s241 + $0x580] sm:$0xff] %v594
                %v596 = vld [vmem:[%s240 + $0xb00] sm:$0xff]
                %597 = vst [vmem:[%s241 + $0x588] sm:$0xff] %v596
                %v598 = vld [vmem:[%s240 + $0xb08] sm:$0xff]
                %599 = vst [vmem:[%s241 + $0x590] sm:$0xff] %v598
                %v600 = vld [vmem:[%s240 + $0xb10] sm:$0xff]
                %601 = vst [vmem:[%s241 + $0x598] sm:$0xff] %v600
                %v602 = vld [vmem:[%s240 + $0xb40] sm:$0xff]
                %603 = vst [vmem:[%s241 + $0x5a0] sm:$0xff] %v602
                %v604 = vld [vmem:[%s240 + $0xb48] sm:$0xff]
                %605 = vst [vmem:[%s241 + $0x5a8] sm:$0xff] %v604
                %v606 = vld [vmem:[%s240 + $0xb50] sm:$0xff]
                %607 = vst [vmem:[%s241 + $0x5b0] sm:$0xff] %v606
                %v608 = vld [vmem:[%s240 + $0xb58] sm:$0xff]
                %609 = vst [vmem:[%s241 + $0x5b8] sm:$0xff] %v608
                %v610 = vld [vmem:[%s240 + $0xb60] sm:$0xff]
                %611 = vst [vmem:[%s241 + $0x5c0] sm:$0xff] %v610
                %v612 = vld [vmem:[%s240 + $0xb90] sm:$0xff]
                %613 = vst [vmem:[%s241 + $0x5c8] sm:$0xff] %v612
                %v614 = vld [vmem:[%s240 + $0xb98] sm:$0xff]
                %615 = vst [vmem:[%s241 + $0x5d0] sm:$0xff] %v614
                %v616 = vld [vmem:[%s240 + $0xba0] sm:$0xff]
                %617 = vst [vmem:[%s241 + $0x5d8] sm:$0xff] %v616
                %v618 = vld [vmem:[%s240 + $0xba8] sm:$0xff]
                %619 = vst [vmem:[%s241 + $0x5e0] sm:$0xff] %v618
                %v620 = vld [vmem:[%s240 + $0xbb0] sm:$0xff]
                %621 = vst [vmem:[%s241 + $0x5e8] sm:$0xff] %v620
                %v622 = vld [vmem:[%s240 + $0xbe0] sm:$0xff]
                %623 = vst [vmem:[%s241 + $0x5f0] sm:$0xff] %v622
                %v624 = vld [vmem:[%s240 + $0xbe8] sm:$0xff]
                %625 = vst [vmem:[%s241 + $0x5f8] sm:$0xff] %v624
                %v626 = vld [vmem:[%s240 + $0xbf0] sm:$0xff]
                %627 = vst [vmem:[%s241 + $0x600] sm:$0xff] %v626
                %v628 = vld [vmem:[%s240 + $0xbf8] sm:$0xff]
                %629 = vst [vmem:[%s241 + $0x608] sm:$0xff] %v628
                %v630 = vld [vmem:[%s240 + $0xc00] sm:$0xff]
                %631 = vst [vmem:[%s241 + $0x610] sm:$0xff] %v630
                %v632 = vld [vmem:[%s240 + $0xc30] sm:$0xff]
                %633 = vst [vmem:[%s241 + $0x618] sm:$0xff] %v632
                %v634 = vld [vmem:[%s240 + $0xc38] sm:$0xff]
                %635 = vst [vmem:[%s241 + $0x620] sm:$0xff] %v634
                %v636 = vld [vmem:[%s240 + $0xc40] sm:$0xff]
                %637 = vst [vmem:[%s241 + $0x628] sm:$0xff] %v636
                %v638 = vld [vmem:[%s240 + $0xc48] sm:$0xff]
                %639 = vst [vmem:[%s241 + $0x630] sm:$0xff] %v638
                %v640 = vld [vmem:[%s240 + $0xc50] sm:$0xff]
                %641 = vst [vmem:[%s241 + $0x638] sm:$0xff] %v640
                %v642 = vld [vmem:[%s240 + $0xc80] sm:$0xff]
                %643 = vst [vmem:[%s241 + $0x640] sm:$0xff] %v642
                %v644 = vld [vmem:[%s240 + $0xc88] sm:$0xff]
                %645 = vst [vmem:[%s241 + $0x648] sm:$0xff] %v644
                %v646 = vld [vmem:[%s240 + $0xc90] sm:$0xff]
                %647 = vst [vmem:[%s241 + $0x650] sm:$0xff] %v646
                %v648 = vld [vmem:[%s240 + $0xc98] sm:$0xff]
                %649 = vst [vmem:[%s241 + $0x658] sm:$0xff] %v648
                %v650 = vld [vmem:[%s240 + $0xca0] sm:$0xff]
                %651 = vst [vmem:[%s241 + $0x660] sm:$0xff] %v650
                %v652 = vld [vmem:[%s240 + $0xcd0] sm:$0xff]
                %653 = vst [vmem:[%s241 + $0x668] sm:$0xff] %v652
                %v654 = vld [vmem:[%s240 + $0xcd8] sm:$0xff]
                %655 = vst [vmem:[%s241 + $0x670] sm:$0xff] %v654
                %v656 = vld [vmem:[%s240 + $0xce0] sm:$0xff]
                %657 = vst [vmem:[%s241 + $0x678] sm:$0xff] %v656
                %v658 = vld [vmem:[%s240 + $0xce8] sm:$0xff]
                %659 = vst [vmem:[%s241 + $0x680] sm:$0xff] %v658
                %v660 = vld [vmem:[%s240 + $0xcf0] sm:$0xff]
                %661 = vst [vmem:[%s241 + $0x688] sm:$0xff] %v660
                %v662 = vld [vmem:[%s240 + $0xd20] sm:$0xff]
                %663 = vst [vmem:[%s241 + $0x690] sm:$0xff] %v662
                %v664 = vld [vmem:[%s240 + $0xd28] sm:$0xff]
                %665 = vst [vmem:[%s241 + $0x698] sm:$0xff] %v664
                %v666 = vld [vmem:[%s240 + $0xd30] sm:$0xff]
                %667 = vst [vmem:[%s241 + $0x6a0] sm:$0xff] %v666
                %v668 = vld [vmem:[%s240 + $0xd38] sm:$0xff]
                %669 = vst [vmem:[%s241 + $0x6a8] sm:$0xff] %v668
                %v670 = vld [vmem:[%s240 + $0xd40] sm:$0xff]
                %671 = vst [vmem:[%s241 + $0x6b0] sm:$0xff] %v670
                %v672 = vld [vmem:[%s240 + $0xd70] sm:$0xff]
                %673 = vst [vmem:[%s241 + $0x6b8] sm:$0xff] %v672
                %v674 = vld [vmem:[%s240 + $0xd78] sm:$0xff]
                %675 = vst [vmem:[%s241 + $0x6c0] sm:$0xff] %v674
                %v676 = vld [vmem:[%s240 + $0xd80] sm:$0xff]
                %677 = vst [vmem:[%s241 + $0x6c8] sm:$0xff] %v676
                %v678 = vld [vmem:[%s240 + $0xd88] sm:$0xff]
                %679 = vst [vmem:[%s241 + $0x6d0] sm:$0xff] %v678
                %v680 = vld [vmem:[%s240 + $0xd90] sm:$0xff]
                %681 = vst [vmem:[%s241 + $0x6d8] sm:$0xff] %v680
                %v682 = vld [vmem:[%s240 + $0xdc0] sm:$0xff]
                %683 = vst [vmem:[%s241 + $0x6e0] sm:$0xff] %v682
                %v684 = vld [vmem:[%s240 + $0xdc8] sm:$0xff]
                %685 = vst [vmem:[%s241 + $0x6e8] sm:$0xff] %v684
                %v686 = vld [vmem:[%s240 + $0xdd0] sm:$0xff]
                %687 = vst [vmem:[%s241 + $0x6f0] sm:$0xff] %v686
                %v688 = vld [vmem:[%s240 + $0xdd8] sm:$0xff]
                %689 = vst [vmem:[%s241 + $0x6f8] sm:$0xff] %v688
                %v690 = vld [vmem:[%s240 + $0xde0] sm:$0xff]
                %691 = vst [vmem:[%s241 + $0x700] sm:$0xff] %v690
                %v692 = vld [vmem:[%s240 + $0xe10] sm:$0xff]
                %693 = vst [vmem:[%s241 + $0x708] sm:$0xff] %v692
                %v694 = vld [vmem:[%s240 + $0xe18] sm:$0xff]
                %695 = vst [vmem:[%s241 + $0x710] sm:$0xff] %v694
                %v696 = vld [vmem:[%s240 + $0xe20] sm:$0xff]
                %697 = vst [vmem:[%s241 + $0x718] sm:$0xff] %v696
                %v698 = vld [vmem:[%s240 + $0xe28] sm:$0xff]
                %699 = vst [vmem:[%s241 + $0x720] sm:$0xff] %v698
                %v700 = vld [vmem:[%s240 + $0xe30] sm:$0xff]
                %701 = vst [vmem:[%s241 + $0x728] sm:$0xff] %v700
                %v702 = vld [vmem:[%s240 + $0xe60] sm:$0xff]
                %703 = vst [vmem:[%s241 + $0x730] sm:$0xff] %v702
                %v704 = vld [vmem:[%s240 + $0xe68] sm:$0xff]
                %705 = vst [vmem:[%s241 + $0x738] sm:$0xff] %v704
                %v706 = vld [vmem:[%s240 + $0xe70] sm:$0xff]
                %707 = vst [vmem:[%s241 + $0x740] sm:$0xff] %v706
                %v708 = vld [vmem:[%s240 + $0xe78] sm:$0xff]
                %709 = vst [vmem:[%s241 + $0x748] sm:$0xff] %v708
                %v710 = vld [vmem:[%s240 + $0xe80] sm:$0xff]
                %711 = vst [vmem:[%s241 + $0x750] sm:$0xff] %v710
                %v712 = vld [vmem:[%s240 + $0xeb0] sm:$0xff]
                %713 = vst [vmem:[%s241 + $0x758] sm:$0xff] %v712
                %v714 = vld [vmem:[%s240 + $0xeb8] sm:$0xff]
                %715 = vst [vmem:[%s241 + $0x760] sm:$0xff] %v714
                %v716 = vld [vmem:[%s240 + $0xec0] sm:$0xff]
                %717 = vst [vmem:[%s241 + $0x768] sm:$0xff] %v716
                %v718 = vld [vmem:[%s240 + $0xec8] sm:$0xff]
                %719 = vst [vmem:[%s241 + $0x770] sm:$0xff] %v718
                %v720 = vld [vmem:[%s240 + $0xed0] sm:$0xff]
                %721 = vst [vmem:[%s241 + $0x778] sm:$0xff] %v720
                %v722 = vld [vmem:[%s240 + $0xf00] sm:$0xff]
                %723 = vst [vmem:[%s241 + $0x780] sm:$0xff] %v722
                %v724 = vld [vmem:[%s240 + $0xf08] sm:$0xff]
                %725 = vst [vmem:[%s241 + $0x788] sm:$0xff] %v724
                %v726 = vld [vmem:[%s240 + $0xf10] sm:$0xff]
                %727 = vst [vmem:[%s241 + $0x790] sm:$0xff] %v726
                %v728 = vld [vmem:[%s240 + $0xf18] sm:$0xff]
                %729 = vst [vmem:[%s241 + $0x798] sm:$0xff] %v728
                %v730 = vld [vmem:[%s240 + $0xf20] sm:$0xff]
                %731 = vst [vmem:[%s241 + $0x7a0] sm:$0xff] %v730
                %v732 = vld [vmem:[%s240 + $0xf50] sm:$0xff]
                %733 = vst [vmem:[%s241 + $0x7a8] sm:$0xff] %v732
                %v734 = vld [vmem:[%s240 + $0xf58] sm:$0xff]
                %735 = vst [vmem:[%s241 + $0x7b0] sm:$0xff] %v734
                %v736 = vld [vmem:[%s240 + $0xf60] sm:$0xff]
                %737 = vst [vmem:[%s241 + $0x7b8] sm:$0xff] %v736
                %v738 = vld [vmem:[%s240 + $0xf68] sm:$0xff]
                %739 = vst [vmem:[%s241 + $0x7c0] sm:$0xff] %v738
                %v740 = vld [vmem:[%s240 + $0xf70] sm:$0xff]
                %741 = vst [vmem:[%s241 + $0x7c8] sm:$0xff] %v740
                %v742 = vld [vmem:[%s240 + $0xfa0] sm:$0xff]
                %743 = vst [vmem:[%s241 + $0x7d0] sm:$0xff] %v742
                %v744 = vld [vmem:[%s240 + $0xfa8] sm:$0xff]
                %745 = vst [vmem:[%s241 + $0x7d8] sm:$0xff] %v744
                %v746 = vld [vmem:[%s240 + $0xfb0] sm:$0xff]
                %747 = vst [vmem:[%s241 + $0x7e0] sm:$0xff] %v746
                %v748 = vld [vmem:[%s240 + $0xfb8] sm:$0xff]
                %749 = vst [vmem:[%s241 + $0x7e8] sm:$0xff] %v748
                %v750 = vld [vmem:[%s240 + $0xfc0] sm:$0xff]
                %751 = vst [vmem:[%s241 + $0x7f0] sm:$0xff] %v750
                %v752 = vld [vmem:[%s240 + $0xff0] sm:$0xff]
                %753 = vst [vmem:[%s241 + $0x7f8] sm:$0xff] %v752
                %v754 = vld [vmem:[%s240 + $0xff8] sm:$0xff]
                %755 = vst [vmem:[%s241 + $0x800] sm:$0xff] %v754
                %v756 = vld [vmem:[%s240 + $0x1000] sm:$0xff]
                %757 = vst [vmem:[%s241 + $0x808] sm:$0xff] %v756
                %v758 = vld [vmem:[%s240 + $0x1008] sm:$0xff]
                %759 = vst [vmem:[%s241 + $0x810] sm:$0xff] %v758
                %v760 = vld [vmem:[%s240 + $0x1010] sm:$0xff]
                %761 = vst [vmem:[%s241 + $0x818] sm:$0xff] %v760
                %v762 = vld [vmem:[%s240 + $0x1040] sm:$0xff]
                %763 = vst [vmem:[%s241 + $0x820] sm:$0xff] %v762
                %v764 = vld [vmem:[%s240 + $0x1048] sm:$0xff]
                %765 = vst [vmem:[%s241 + $0x828] sm:$0xff] %v764
                %v766 = vld [vmem:[%s240 + $0x1050] sm:$0xff]
                %767 = vst [vmem:[%s241 + $0x830] sm:$0xff] %v766
                %v768 = vld [vmem:[%s240 + $0x1058] sm:$0xff]
                %769 = vst [vmem:[%s241 + $0x838] sm:$0xff] %v768
                %v770 = vld [vmem:[%s240 + $0x1060] sm:$0xff]
                %771 = vst [vmem:[%s241 + $0x840] sm:$0xff] %v770
                %v772 = vld [vmem:[%s240 + $0x1090] sm:$0xff]
                %773 = vst [vmem:[%s241 + $0x848] sm:$0xff] %v772
                %v774 = vld [vmem:[%s240 + $0x1098] sm:$0xff]
                %775 = vst [vmem:[%s241 + $0x850] sm:$0xff] %v774
                %v776 = vld [vmem:[%s240 + $0x10a0] sm:$0xff]
                %777 = vst [vmem:[%s241 + $0x858] sm:$0xff] %v776
                %v778 = vld [vmem:[%s240 + $0x10a8] sm:$0xff]
                %779 = vst [vmem:[%s241 + $0x860] sm:$0xff] %v778
                %v780 = vld [vmem:[%s240 + $0x10b0] sm:$0xff]
                %781 = vst [vmem:[%s241 + $0x868] sm:$0xff] %v780
              $region33: #{tpu_custom_call.1} parent=27 // loop_footer
                %s239 = sadd.s32 1, %s235
              $region34: #{tpu_custom_call.1} parent=27 // loop_footer_branch
                %234 = sbr.rel target = $region30
              $region35: #{tpu_custom_call.1} parent=27 // loop_exit
                _
            $region28: #{tpu_custom_call.1} parent=23 // pred_fallthru
              _
            // Predicated region
            $region36: #{tpu_custom_call.1} parent=23 // pred_check
              _
            $region37: #{tpu_custom_call.1} parent=23 // pred_check_branch
              %783 = sbr.rel target = $region39
            $region38: #{tpu_custom_call.1} parent=23 // pred_region
              _
            $region39: #{tpu_custom_call.1} parent=23 // pred_fallthru
              _
          $region24: #{tpu_custom_call.1} parent=19 // pred_fallthru
            _
          %784 = vnop
        $region20: #{tpu_custom_call.1} parent=15 // pred_fallthru
          _
        // Predicated region
        $region40: #{tpu_custom_call.1} parent=15 // pred_check
          %p785 = pneg %p65
        $region41: #{tpu_custom_call.1} parent=15 // pred_check_branch
          %787 = sbr.rel (%p785) target = $region43
        $region42: #{tpu_custom_call.1} parent=15 // pred_region
          %s788 = sand.u32 %s55, 1
          %s789 = sand.u32 %s55, 1
          %s790 = smul.addr %s789, 200
          %s791 = scalar_lea.vmem [#allocation3], %s790
          %s792 = smul.u32 5, %s19
          %s793 = smul.addr %s792, 8
          %s794 = scalar_lea.vmem %s1, %s793
          // Predicated region
          $region44: #{tpu_custom_call.1} parent=42 // pred_check
            _
          $region45: #{tpu_custom_call.1} parent=42 // pred_check_branch
            %796 = sbr.rel (0) target = $region47
          $region46: #{tpu_custom_call.1} parent=42 // pred_region
            // Predicated region
            $region48: #{tpu_custom_call.1} parent=46 // pred_check
              _
            $region49: #{tpu_custom_call.1} parent=46 // pred_check_branch
              %798 = sbr.rel (0) target = $region51
            $region50: #{tpu_custom_call.1} parent=46 // pred_region
              loop: start=0, step=1, limit=1
              $region52: #{tpu_custom_call.1} parent=50 // loop_pre_header
                _
              $region53: #{tpu_custom_call.1} parent=50 // loop_header
                %s800 = sphi 0, %s804
                %p801 = scmp.ge.s32.totalorder %s800, 1
                %s805 = sphi %s794, %s794
                %s806 = sphi %s791, %s791
              $region54: #{tpu_custom_call.1} parent=50 // loop_header_branch
                %803 = sbr.rel (%p801) target = $region58
              $region55: #{tpu_custom_call.1} parent=50 // loop_body
                %v807 = vld [vmem:[%s805] sm:$0xff]
                %808 = vst [vmem:[%s806] sm:$0xff] %v807
                %v809 = vld [vmem:[%s805 + $0x8] sm:$0xff]
                %810 = vst [vmem:[%s806 + $0x8] sm:$0xff] %v809
                %v811 = vld [vmem:[%s805 + $0x10] sm:$0xff]
                %812 = vst [vmem:[%s806 + $0x10] sm:$0xff] %v811
                %v813 = vld [vmem:[%s805 + $0x18] sm:$0xff]
                %814 = vst [vmem:[%s806 + $0x18] sm:$0xff] %v813
                %v815 = vld [vmem:[%s805 + $0x20] sm:$0xff]
                %816 = vst [vmem:[%s806 + $0x20] sm:$0xff] %v815
                %v817 = vld [vmem:[%s805 + $0x50] sm:$0xff]
                %818 = vst [vmem:[%s806 + $0x28] sm:$0xff] %v817
                %v819 = vld [vmem:[%s805 + $0x58] sm:$0xff]
                %820 = vst [vmem:[%s806 + $0x30] sm:$0xff] %v819
                %v821 = vld [vmem:[%s805 + $0x60] sm:$0xff]
                %822 = vst [vmem:[%s806 + $0x38] sm:$0xff] %v821
                %v823 = vld [vmem:[%s805 + $0x68] sm:$0xff]
                %824 = vst [vmem:[%s806 + $0x40] sm:$0xff] %v823
                %v825 = vld [vmem:[%s805 + $0x70] sm:$0xff]
                %826 = vst [vmem:[%s806 + $0x48] sm:$0xff] %v825
                %v827 = vld [vmem:[%s805 + $0xa0] sm:$0xff]
                %828 = vst [vmem:[%s806 + $0x50] sm:$0xff] %v827
                %v829 = vld [vmem:[%s805 + $0xa8] sm:$0xff]
                %830 = vst [vmem:[%s806 + $0x58] sm:$0xff] %v829
                %v831 = vld [vmem:[%s805 + $0xb0] sm:$0xff]
                %832 = vst [vmem:[%s806 + $0x60] sm:$0xff] %v831
                %v833 = vld [vmem:[%s805 + $0xb8] sm:$0xff]
                %834 = vst [vmem:[%s806 + $0x68] sm:$0xff] %v833
                %v835 = vld [vmem:[%s805 + $0xc0] sm:$0xff]
                %836 = vst [vmem:[%s806 + $0x70] sm:$0xff] %v835
                %v837 = vld [vmem:[%s805 + $0xf0] sm:$0xff]
                %838 = vst [vmem:[%s806 + $0x78] sm:$0xff] %v837
                %v839 = vld [vmem:[%s805 + $0xf8] sm:$0xff]
                %840 = vst [vmem:[%s806 + $0x80] sm:$0xff] %v839
                %v841 = vld [vmem:[%s805 + $0x100] sm:$0xff]
                %842 = vst [vmem:[%s806 + $0x88] sm:$0xff] %v841
                %v843 = vld [vmem:[%s805 + $0x108] sm:$0xff]
                %844 = vst [vmem:[%s806 + $0x90] sm:$0xff] %v843
                %v845 = vld [vmem:[%s805 + $0x110] sm:$0xff]
                %846 = vst [vmem:[%s806 + $0x98] sm:$0xff] %v845
                %v847 = vld [vmem:[%s805 + $0x140] sm:$0xff]
                %848 = vst [vmem:[%s806 + $0xa0] sm:$0xff] %v847
                %v849 = vld [vmem:[%s805 + $0x148] sm:$0xff]
                %850 = vst [vmem:[%s806 + $0xa8] sm:$0xff] %v849
                %v851 = vld [vmem:[%s805 + $0x150] sm:$0xff]
                %852 = vst [vmem:[%s806 + $0xb0] sm:$0xff] %v851
                %v853 = vld [vmem:[%s805 + $0x158] sm:$0xff]
                %854 = vst [vmem:[%s806 + $0xb8] sm:$0xff] %v853
                %v855 = vld [vmem:[%s805 + $0x160] sm:$0xff]
                %856 = vst [vmem:[%s806 + $0xc0] sm:$0xff] %v855
              $region56: #{tpu_custom_call.1} parent=50 // loop_footer
                %s804 = sadd.s32 1, %s800
              $region57: #{tpu_custom_call.1} parent=50 // loop_footer_branch
                %799 = sbr.rel target = $region53
              $region58: #{tpu_custom_call.1} parent=50 // loop_exit
                _
            $region51: #{tpu_custom_call.1} parent=46 // pred_fallthru
              _
            // Predicated region
            $region59: #{tpu_custom_call.1} parent=46 // pred_check
              _
            $region60: #{tpu_custom_call.1} parent=46 // pred_check_branch
              %858 = sbr.rel target = $region62
            $region61: #{tpu_custom_call.1} parent=46 // pred_region
              _
            $region62: #{tpu_custom_call.1} parent=46 // pred_fallthru
              _
          $region47: #{tpu_custom_call.1} parent=42 // pred_fallthru
            _
          %859 = vnop
        $region43: #{tpu_custom_call.1} parent=15 // pred_fallthru
          _
        // Predicated region
        $region63: #{tpu_custom_call.1} parent=15 // pred_check
          %p860 = pneg %p91
        $region64: #{tpu_custom_call.1} parent=15 // pred_check_branch
          %862 = sbr.rel (%p860) target = $region66
        $region65: #{tpu_custom_call.1} parent=15 // pred_region
          %s863 = smul.u32 5, %s19
          %p864 = scmp.lt.s32.totalorder %s863, 9
          %s865 = scalar_select %p864, %s863, 9
          %s866 = scalar_lea.vmem %s2, %s865
          %s867 = smul.u32 5, %s19
        $region66: #{tpu_custom_call.1} parent=15 // pred_fallthru
          _
        // Predicated region
        $region67: #{tpu_custom_call.1} parent=15 // pred_check
          %p868 = pneg %p117
        $region68: #{tpu_custom_call.1} parent=15 // pred_check_branch
          %870 = sbr.rel (%p868) target = $region70
        $region69: #{tpu_custom_call.1} parent=15 // pred_region
          %s871 = smul.u32 5, %s19
          %p872 = scmp.lt.s32.totalorder %s871, 9
          %s873 = scalar_select %p872, %s871, 9
          %s874 = scalar_lea.vmem %s3, %s873
          %s875 = smul.u32 5, %s19
        $region70: #{tpu_custom_call.1} parent=15 // pred_fallthru
          _
      $region16: #{tpu_custom_call.1} parent=5 // pred_fallthru
        _
      %p876 = scmp.le.s32.totalorder 1, %s19
      %p877 = scmp.lt.s32.totalorder %s19, 3
      %p878 = pnand %p876, %p877
      %p879 = pneg %p878
      // Predicated region
      $region71: #{tpu_custom_call.1} parent=5 // pred_check
        _
      $region72: #{tpu_custom_call.1} parent=5 // pred_check_branch
        %881 = sbr.rel (%p878) target = $region74
      $region73: #{tpu_custom_call.1} parent=5 // pred_region
        %s882 = ssub.s32 %s19, 1
        %s883 = sand.u32 %s32, 1
        %s884 = sand.u32 %s32, 1
        %s885 = smul.addr %s884, 2160
        %s886 = scalar_lea.vmem [#allocation2], %s885
        // Predicated region
        $region75: #{tpu_custom_call.1} parent=73 // pred_check
          %p887 = pneg %p45
        $region76: #{tpu_custom_call.1} parent=73 // pred_check_branch
          %889 = sbr.rel (%p887) target = $region78
        $region77: #{tpu_custom_call.1} parent=73 // pred_region
          _
        $region78: #{tpu_custom_call.1} parent=73 // pred_fallthru
          _
        %s890 = sand.u32 %s58, 1
        %s891 = sand.u32 %s58, 1
        %s892 = smul.addr %s891, 200
        %s893 = scalar_lea.vmem [#allocation3], %s892
        // Predicated region
        $region79: #{tpu_custom_call.1} parent=73 // pred_check
          %p894 = pneg %p71
        $region80: #{tpu_custom_call.1} parent=73 // pred_check_branch
          %896 = sbr.rel (%p894) target = $region82
        $region81: #{tpu_custom_call.1} parent=73 // pred_region
          _
        $region82: #{tpu_custom_call.1} parent=73 // pred_fallthru
          _
        %s897 = sand.u32 %s32, 1
        %s898 = sand.u32 %s32, 1
        %s899 = smul.addr %s898, 2160
        %s900 = scalar_lea.vmem [#allocation2], %s899
        %p901 = pneg %p45
        %p902 = pneg %p42
        %s903 = sand.u32 %s58, 1
        %s904 = sand.u32 %s58, 1
        %s905 = smul.addr %s904, 200
        %s906 = scalar_lea.vmem [#allocation3], %s905
        %p907 = pneg %p71
        %p908 = pneg %p68
        %s909 = smul.u32 5, %s24
        %p910 = scmp.lt.s32.totalorder %s909, 9
        %s911 = scalar_select %p910, %s909, 9
        %s912 = scalar_lea.vmem %s2, %s911
        %p913 = pneg %p97
        %p914 = pneg %p94
        %s915 = smul.u32 5, %s24
        %p916 = scmp.lt.s32.totalorder %s915, 9
        %s917 = scalar_select %p916, %s915, 9
        %s918 = scalar_lea.vmem %s3, %s917
        %p919 = pneg %p123
        %p920 = pneg %p120
        %p921 = pneg %p149
        %p922 = pneg %p146
        %s923 = sand.u32 %s136, 1
        %s924 = sand.u32 %s136, 1
        %s925 = smul.addr %s924, 1120
        %s926 = scalar_lea.vmem [#allocation4], %s925
        %p927 = pneg %p175
        %p928 = pneg %p172
        %s929 = sand.u32 %s162, 1
        %s930 = scalar_lea.sflag [#allocation6], %s929
        %s931 = sand.u32 %s162, 1
        %s932 = smul.addr %s931, 5
        %s933 = scalar_lea.vmem [#allocation5], %s932
        %p934 = pneg %p201
        %p935 = pneg %p198
        %s936 = sand.u32 %s188, 1
        %s937 = scalar_lea.sflag [#allocation8], %s936
        %s938 = sand.u32 %s188, 1
        %s939 = smul.addr %s938, 5
        %s940 = scalar_lea.vmem [#allocation7], %s939
        %s941 = smul.u32 5, %s24
        %s942 = smul.u32 5, %s24
        %s943 = smul.u32 5, %s24
        %p944 = scmp.lt.s32.totalorder %s943, 9
        %s945 = scalar_select %p944, %s943, 9
        %s946 = scalar_lea.vmem %s2, %s945
        %s947 = smul.u32 5, %s24
        %s948 = smul.u32 5, %s24
        %p949 = scmp.lt.s32.totalorder %s948, 9
        %s950 = scalar_select %p949, %s948, 9
        %s951 = scalar_lea.vmem %s3, %s950
        %s952 = smul.u32 5, %s24
        %s953 = smul.u32 5, %s24
        %s954 = smul.u32 5, %s24
        %s955 = smul.u32 5, %s24
        loop: start=0, step=1, limit=14
        $region83: #{tpu_custom_call.1} parent=73 // loop_pre_header
          _
        $region84: #{tpu_custom_call.1} parent=73 // loop_header
          %s957 = sphi 0, %s961
          %p958 = scmp.ge.s32.totalorder %s957, 14
          %v962 = vphi 0.0, %v3437
          %v963 = vphi 0.0, %v3438
          %v964 = vphi 0.0, %v3439
          %v965 = vphi 0.0, %v3440
          %v966 = vphi 0.0, %v3441
          %v967 = vphi 0.0, %v3492
          %v968 = vphi 0.0, %v3493
          %v969 = vphi 0.0, %v3494
          %v970 = vphi 0.0, %v3495
          %v971 = vphi 0.0, %v3496
        $region85: #{tpu_custom_call.1} parent=73 // loop_header_branch
          %960 = sbr.rel (%p958) target = $region89
        $region86: #{tpu_custom_call.1} parent=73 // loop_body
          %s972 = smul.u32 %s957, 15
          %s973 = smul.addr %s972, 8
          %s974 = scalar_lea.vmem %s886, %s973 [#allocation2]
          %v975 = vld [vmem:[%s974] sm:$0xff]
          %v976 = vld [vmem:[%s974 + $0x8] sm:$0xff]
          %v977 = vld [vmem:[%s974 + $0x10] sm:$0xff]
          %v978 = vld [vmem:[%s974 + $0x18] sm:$0xff]
          %v979 = vld [vmem:[%s974 + $0x20] sm:$0xff]
          %v980 = vld [vmem:[%s974 + $0x28] sm:$0x3f]
          %v981 = vld [vmem:[%s974 + $0x30] sm:$0x3f]
          %v982 = vld [vmem:[%s974 + $0x38] sm:$0x3f]
          %v983 = vld [vmem:[%s974 + $0x40] sm:$0x3f]
          %v984 = vld [vmem:[%s974 + $0x48] sm:$0x3f]
          %v985 = vld [vmem:[%s893] ss:$8 sm:$0xf]
          %v986 = vld [vmem:[%s893] ss:$8 sm:$0x10]
          %v987 = vor.u32 %v985, %v986
          %v989 = vlaneseq
          %v990 = vshrl.u32 %v989, 7
          %v991 = vsub.s32 0, %v990
          %v992 = vrot.slane %v987, %v991
          %v993 = vlaneseq
          %v994 = vshrl.u32 %v993, 7
          %v995 = vsub.s32 1, %v994
          %v996 = vrot.slane %v987, %v995
          %v997 = vlaneseq
          %v998 = vshrl.u32 %v997, 7
          %v999 = vsub.s32 2, %v998
          %v1000 = vrot.slane %v987, %v999
          %v1001 = vlaneseq
          %v1002 = vshrl.u32 %v1001, 7
          %v1003 = vsub.s32 3, %v1002
          %v1004 = vrot.slane %v987, %v1003
          %v1005 = vlaneseq
          %v1006 = vshrl.u32 %v1005, 7
          %v1007 = vsub.s32 4, %v1006
          %v1008 = vrot.slane %v987, %v1007
          %v1014 = vmul.f32 %v975, %v992
          %v1015 = vmul.f32 %v976, %v996
          %v1016 = vmul.f32 %v977, %v1000
          %v1017 = vmul.f32 %v978, %v1004
          %v1018 = vmul.f32 %v979, %v1008
          %v1019 = vmul.f32 %v980, %v992
          %v1020 = vmul.f32 %v981, %v996
          %v1021 = vmul.f32 %v982, %v1000
          %v1022 = vmul.f32 %v983, %v1004
          %v1023 = vmul.f32 %v984, %v1008
          %v1024 = vld [vmem:[%s974] sm:$0xfe]
          %v1025 = vld [vmem:[%s974 + $0x8] sm:$0xfe]
          %v1026 = vld [vmem:[%s974 + $0x10] sm:$0xfe]
          %v1027 = vld [vmem:[%s974 + $0x18] sm:$0xfe]
          %v1028 = vld [vmem:[%s974 + $0x20] sm:$0xfe]
          %v1029 = vld [vmem:[%s974 + $0x28] sm:$0x7f]
          %v1030 = vld [vmem:[%s974 + $0x30] sm:$0x7f]
          %v1031 = vld [vmem:[%s974 + $0x38] sm:$0x7f]
          %v1032 = vld [vmem:[%s974 + $0x40] sm:$0x7f]
          %v1033 = vld [vmem:[%s974 + $0x48] sm:$0x7f]
          %s1034 = scalar_lea.vmem %s893, 1 [#allocation3]
          %v1035 = vld [vmem:[%s1034] ss:$8 sm:$0xf]
          %v1036 = vld [vmem:[%s1034] ss:$8 sm:$0x10]
          %v1037 = vor.u32 %v1035, %v1036
          %v1039 = vlaneseq
          %v1040 = vshrl.u32 %v1039, 7
          %v1041 = vsub.s32 0, %v1040
          %v1042 = vrot.slane %v1037, %v1041
          %v1043 = vlaneseq
          %v1044 = vshrl.u32 %v1043, 7
          %v1045 = vsub.s32 1, %v1044
          %v1046 = vrot.slane %v1037, %v1045
          %v1047 = vlaneseq
          %v1048 = vshrl.u32 %v1047, 7
          %v1049 = vsub.s32 2, %v1048
          %v1050 = vrot.slane %v1037, %v1049
          %v1051 = vlaneseq
          %v1052 = vshrl.u32 %v1051, 7
          %v1053 = vsub.s32 3, %v1052
          %v1054 = vrot.slane %v1037, %v1053
          %v1055 = vlaneseq
          %v1056 = vshrl.u32 %v1055, 7
          %v1057 = vsub.s32 4, %v1056
          %v1058 = vrot.slane %v1037, %v1057
          %v1064 = vmul.f32 %v1024, %v1042
          %v1065 = vmul.f32 %v1025, %v1046
          %v1066 = vmul.f32 %v1026, %v1050
          %v1067 = vmul.f32 %v1027, %v1054
          %v1068 = vmul.f32 %v1028, %v1058
          %v1069 = vmul.f32 %v1029, %v1042
          %v1070 = vmul.f32 %v1030, %v1046
          %v1071 = vmul.f32 %v1031, %v1050
          %v1072 = vmul.f32 %v1032, %v1054
          %v1073 = vmul.f32 %v1033, %v1058
          %vm1084 = vcmask 1046528
          %v1085 = vrot.slane %v1064, 1
          %v1086 = vrot.slane %v1069, 1
          %v1087 = vsel %vm1084, %v1085, %v1086
          %v1088 = vrot.slane %v1065, 1
          %v1089 = vrot.slane %v1070, 1
          %v1090 = vsel %vm1084, %v1088, %v1089
          %v1091 = vrot.slane %v1066, 1
          %v1092 = vrot.slane %v1071, 1
          %v1093 = vsel %vm1084, %v1091, %v1092
          %v1094 = vrot.slane %v1067, 1
          %v1095 = vrot.slane %v1072, 1
          %v1096 = vsel %vm1084, %v1094, %v1095
          %v1097 = vrot.slane %v1068, 1
          %v1098 = vrot.slane %v1073, 1
          %v1099 = vsel %vm1084, %v1097, %v1098
          %v1110 = vadd.f32 %v1014, %v1087
          %v1111 = vadd.f32 %v1015, %v1090
          %v1112 = vadd.f32 %v1016, %v1093
          %v1113 = vadd.f32 %v1017, %v1096
          %v1114 = vadd.f32 %v1018, %v1099
          %v1115 = vadd.f32 %v1019, %v1086
          %v1116 = vadd.f32 %v1020, %v1089
          %v1117 = vadd.f32 %v1021, %v1092
          %v1118 = vadd.f32 %v1022, %v1095
          %v1119 = vadd.f32 %v1023, %v1098
          %v1120 = vld [vmem:[%s974] sm:$0xfc]
          %v1121 = vld [vmem:[%s974 + $0x8] sm:$0xfc]
          %v1122 = vld [vmem:[%s974 + $0x10] sm:$0xfc]
          %v1123 = vld [vmem:[%s974 + $0x18] sm:$0xfc]
          %v1124 = vld [vmem:[%s974 + $0x20] sm:$0xfc]
          %v1125 = vld [vmem:[%s974 + $0x28] sm:$0xff]
          %v1126 = vld [vmem:[%s974 + $0x30] sm:$0xff]
          %v1127 = vld [vmem:[%s974 + $0x38] sm:$0xff]
          %v1128 = vld [vmem:[%s974 + $0x40] sm:$0xff]
          %v1129 = vld [vmem:[%s974 + $0x48] sm:$0xff]
          %s1130 = scalar_lea.vmem %s893, 2 [#allocation3]
          %v1131 = vld [vmem:[%s1130] ss:$8 sm:$0xf]
          %v1132 = vld [vmem:[%s1130] ss:$8 sm:$0x10]
          %v1133 = vor.u32 %v1131, %v1132
          %v1135 = vlaneseq
          %v1136 = vshrl.u32 %v1135, 7
          %v1137 = vsub.s32 0, %v1136
          %v1138 = vrot.slane %v1133, %v1137
          %v1139 = vlaneseq
          %v1140 = vshrl.u32 %v1139, 7
          %v1141 = vsub.s32 1, %v1140
          %v1142 = vrot.slane %v1133, %v1141
          %v1143 = vlaneseq
          %v1144 = vshrl.u32 %v1143, 7
          %v1145 = vsub.s32 2, %v1144
          %v1146 = vrot.slane %v1133, %v1145
          %v1147 = vlaneseq
          %v1148 = vshrl.u32 %v1147, 7
          %v1149 = vsub.s32 3, %v1148
          %v1150 = vrot.slane %v1133, %v1149
          %v1151 = vlaneseq
          %v1152 = vshrl.u32 %v1151, 7
          %v1153 = vsub.s32 4, %v1152
          %v1154 = vrot.slane %v1133, %v1153
          %v1160 = vmul.f32 %v1120, %v1138
          %v1161 = vmul.f32 %v1121, %v1142
          %v1162 = vmul.f32 %v1122, %v1146
          %v1163 = vmul.f32 %v1123, %v1150
          %v1164 = vmul.f32 %v1124, %v1154
          %v1165 = vmul.f32 %v1125, %v1138
          %v1166 = vmul.f32 %v1126, %v1142
          %v1167 = vmul.f32 %v1127, %v1146
          %v1168 = vmul.f32 %v1128, %v1150
          %v1169 = vmul.f32 %v1129, %v1154
          %vm1180 = vcmask 1045504
          %v1181 = vrot.slane %v1160, 2
          %v1182 = vrot.slane %v1165, 2
          %v1183 = vsel %vm1180, %v1181, %v1182
          %v1184 = vrot.slane %v1161, 2
          %v1185 = vrot.slane %v1166, 2
          %v1186 = vsel %vm1180, %v1184, %v1185
          %v1187 = vrot.slane %v1162, 2
          %v1188 = vrot.slane %v1167, 2
          %v1189 = vsel %vm1180, %v1187, %v1188
          %v1190 = vrot.slane %v1163, 2
          %v1191 = vrot.slane %v1168, 2
          %v1192 = vsel %vm1180, %v1190, %v1191
          %v1193 = vrot.slane %v1164, 2
          %v1194 = vrot.slane %v1169, 2
          %v1195 = vsel %vm1180, %v1193, %v1194
          %v1206 = vadd.f32 %v1110, %v1183
          %v1207 = vadd.f32 %v1111, %v1186
          %v1208 = vadd.f32 %v1112, %v1189
          %v1209 = vadd.f32 %v1113, %v1192
          %v1210 = vadd.f32 %v1114, %v1195
          %v1211 = vadd.f32 %v1115, %v1182
          %v1212 = vadd.f32 %v1116, %v1185
          %v1213 = vadd.f32 %v1117, %v1188
          %v1214 = vadd.f32 %v1118, %v1191
          %v1215 = vadd.f32 %v1119, %v1194
          %v1216 = vld [vmem:[%s974] sm:$0xf8]
          %v1217 = vld [vmem:[%s974 + $0x8] sm:$0xf8]
          %v1218 = vld [vmem:[%s974 + $0x10] sm:$0xf8]
          %v1219 = vld [vmem:[%s974 + $0x18] sm:$0xf8]
          %v1220 = vld [vmem:[%s974 + $0x20] sm:$0xf8]
          %v1221 = vld [vmem:[%s974 + $0x50] sm:$0x1]
          %v1222 = vld [vmem:[%s974 + $0x58] sm:$0x1]
          %v1223 = vld [vmem:[%s974 + $0x60] sm:$0x1]
          %v1224 = vld [vmem:[%s974 + $0x68] sm:$0x1]
          %v1225 = vld [vmem:[%s974 + $0x70] sm:$0x1]
          %s1226 = scalar_lea.vmem %s893, 3 [#allocation3]
          %v1227 = vld [vmem:[%s1226] ss:$8 sm:$0xf]
          %v1228 = vld [vmem:[%s1226] ss:$8 sm:$0x10]
          %v1229 = vor.u32 %v1227, %v1228
          %v1231 = vlaneseq
          %v1232 = vshrl.u32 %v1231, 7
          %v1233 = vsub.s32 0, %v1232
          %v1234 = vrot.slane %v1229, %v1233
          %v1235 = vlaneseq
          %v1236 = vshrl.u32 %v1235, 7
          %v1237 = vsub.s32 1, %v1236
          %v1238 = vrot.slane %v1229, %v1237
          %v1239 = vlaneseq
          %v1240 = vshrl.u32 %v1239, 7
          %v1241 = vsub.s32 2, %v1240
          %v1242 = vrot.slane %v1229, %v1241
          %v1243 = vlaneseq
          %v1244 = vshrl.u32 %v1243, 7
          %v1245 = vsub.s32 3, %v1244
          %v1246 = vrot.slane %v1229, %v1245
          %v1247 = vlaneseq
          %v1248 = vshrl.u32 %v1247, 7
          %v1249 = vsub.s32 4, %v1248
          %v1250 = vrot.slane %v1229, %v1249
          %v1256 = vmul.f32 %v1216, %v1234
          %v1257 = vmul.f32 %v1217, %v1238
          %v1258 = vmul.f32 %v1218, %v1242
          %v1259 = vmul.f32 %v1219, %v1246
          %v1260 = vmul.f32 %v1220, %v1250
          %v1261 = vmul.f32 %v1125, %v1234
          %v1262 = vmul.f32 %v1126, %v1238
          %v1263 = vmul.f32 %v1127, %v1242
          %v1264 = vmul.f32 %v1128, %v1246
          %v1265 = vmul.f32 %v1129, %v1250
          %v1266 = vmul.f32 %v1221, %v1234
          %v1267 = vmul.f32 %v1222, %v1238
          %v1268 = vmul.f32 %v1223, %v1242
          %v1269 = vmul.f32 %v1224, %v1246
          %v1270 = vmul.f32 %v1225, %v1250
          %vm1286 = vcmask 1044480
          %v1287 = vrot.slane %v1256, 3
          %v1288 = vrot.slane %v1261, 3
          %v1289 = vsel %vm1286, %v1287, %v1288
          %v1290 = vrot.slane %v1257, 3
          %v1291 = vrot.slane %v1262, 3
          %v1292 = vsel %vm1286, %v1290, %v1291
          %v1293 = vrot.slane %v1258, 3
          %v1294 = vrot.slane %v1263, 3
          %v1295 = vsel %vm1286, %v1293, %v1294
          %v1296 = vrot.slane %v1259, 3
          %v1297 = vrot.slane %v1264, 3
          %v1298 = vsel %vm1286, %v1296, %v1297
          %v1299 = vrot.slane %v1260, 3
          %v1300 = vrot.slane %v1265, 3
          %v1301 = vsel %vm1286, %v1299, %v1300
          %v1302 = vrot.slane %v1266, 3
          %v1303 = vsel %vm1286, %v1288, %v1302
          %v1304 = vrot.slane %v1267, 3
          %v1305 = vsel %vm1286, %v1291, %v1304
          %v1306 = vrot.slane %v1268, 3
          %v1307 = vsel %vm1286, %v1294, %v1306
          %v1308 = vrot.slane %v1269, 3
          %v1309 = vsel %vm1286, %v1297, %v1308
          %v1310 = vrot.slane %v1270, 3
          %v1311 = vsel %vm1286, %v1300, %v1310
          %v1322 = vadd.f32 %v1206, %v1289
          %v1323 = vadd.f32 %v1207, %v1292
          %v1324 = vadd.f32 %v1208, %v1295
          %v1325 = vadd.f32 %v1209, %v1298
          %v1326 = vadd.f32 %v1210, %v1301
          %v1327 = vadd.f32 %v1211, %v1303
          %v1328 = vadd.f32 %v1212, %v1305
          %v1329 = vadd.f32 %v1213, %v1307
          %v1330 = vadd.f32 %v1214, %v1309
          %v1331 = vadd.f32 %v1215, %v1311
          %v1332 = vld [vmem:[%s974] sm:$0xf0]
          %v1333 = vld [vmem:[%s974 + $0x8] sm:$0xf0]
          %v1334 = vld [vmem:[%s974 + $0x10] sm:$0xf0]
          %v1335 = vld [vmem:[%s974 + $0x18] sm:$0xf0]
          %v1336 = vld [vmem:[%s974 + $0x20] sm:$0xf0]
          %v1337 = vld [vmem:[%s974 + $0x50] sm:$0x3]
          %v1338 = vld [vmem:[%s974 + $0x58] sm:$0x3]
          %v1339 = vld [vmem:[%s974 + $0x60] sm:$0x3]
          %v1340 = vld [vmem:[%s974 + $0x68] sm:$0x3]
          %v1341 = vld [vmem:[%s974 + $0x70] sm:$0x3]
          %s1342 = scalar_lea.vmem %s893, 4 [#allocation3]
          %v1343 = vld [vmem:[%s1342] ss:$8 sm:$0xf]
          %v1344 = vld [vmem:[%s1342] ss:$8 sm:$0x10]
          %v1345 = vor.u32 %v1343, %v1344
          %v1347 = vlaneseq
          %v1348 = vshrl.u32 %v1347, 7
          %v1349 = vsub.s32 0, %v1348
          %v1350 = vrot.slane %v1345, %v1349
          %v1351 = vlaneseq
          %v1352 = vshrl.u32 %v1351, 7
          %v1353 = vsub.s32 1, %v1352
          %v1354 = vrot.slane %v1345, %v1353
          %v1355 = vlaneseq
          %v1356 = vshrl.u32 %v1355, 7
          %v1357 = vsub.s32 2, %v1356
          %v1358 = vrot.slane %v1345, %v1357
          %v1359 = vlaneseq
          %v1360 = vshrl.u32 %v1359, 7
          %v1361 = vsub.s32 3, %v1360
          %v1362 = vrot.slane %v1345, %v1361
          %v1363 = vlaneseq
          %v1364 = vshrl.u32 %v1363, 7
          %v1365 = vsub.s32 4, %v1364
          %v1366 = vrot.slane %v1345, %v1365
          %v1372 = vmul.f32 %v1332, %v1350
          %v1373 = vmul.f32 %v1333, %v1354
          %v1374 = vmul.f32 %v1334, %v1358
          %v1375 = vmul.f32 %v1335, %v1362
          %v1376 = vmul.f32 %v1336, %v1366
          %v1377 = vmul.f32 %v1125, %v1350
          %v1378 = vmul.f32 %v1126, %v1354
          %v1379 = vmul.f32 %v1127, %v1358
          %v1380 = vmul.f32 %v1128, %v1362
          %v1381 = vmul.f32 %v1129, %v1366
          %v1382 = vmul.f32 %v1337, %v1350
          %v1383 = vmul.f32 %v1338, %v1354
          %v1384 = vmul.f32 %v1339, %v1358
          %v1385 = vmul.f32 %v1340, %v1362
          %v1386 = vmul.f32 %v1341, %v1366
          %vm1402 = vcmask 1043456
          %v1403 = vrot.slane %v1372, 4
          %v1404 = vrot.slane %v1377, 4
          %v1405 = vsel %vm1402, %v1403, %v1404
          %v1406 = vrot.slane %v1373, 4
          %v1407 = vrot.slane %v1378, 4
          %v1408 = vsel %vm1402, %v1406, %v1407
          %v1409 = vrot.slane %v1374, 4
          %v1410 = vrot.slane %v1379, 4
          %v1411 = vsel %vm1402, %v1409, %v1410
          %v1412 = vrot.slane %v1375, 4
          %v1413 = vrot.slane %v1380, 4
          %v1414 = vsel %vm1402, %v1412, %v1413
          %v1415 = vrot.slane %v1376, 4
          %v1416 = vrot.slane %v1381, 4
          %v1417 = vsel %vm1402, %v1415, %v1416
          %v1418 = vrot.slane %v1382, 4
          %v1419 = vsel %vm1402, %v1404, %v1418
          %v1420 = vrot.slane %v1383, 4
          %v1421 = vsel %vm1402, %v1407, %v1420
          %v1422 = vrot.slane %v1384, 4
          %v1423 = vsel %vm1402, %v1410, %v1422
          %v1424 = vrot.slane %v1385, 4
          %v1425 = vsel %vm1402, %v1413, %v1424
          %v1426 = vrot.slane %v1386, 4
          %v1427 = vsel %vm1402, %v1416, %v1426
          %v1438 = vadd.f32 %v1322, %v1405
          %v1439 = vadd.f32 %v1323, %v1408
          %v1440 = vadd.f32 %v1324, %v1411
          %v1441 = vadd.f32 %v1325, %v1414
          %v1442 = vadd.f32 %v1326, %v1417
          %v1443 = vadd.f32 %v1327, %v1419
          %v1444 = vadd.f32 %v1328, %v1421
          %v1445 = vadd.f32 %v1329, %v1423
          %v1446 = vadd.f32 %v1330, %v1425
          %v1447 = vadd.f32 %v1331, %v1427
          %s1448 = sadd.s32 %s957, 1
          %s1449 = smul.u32 %s1448, 15
          %s1450 = smul.addr %s1449, 8
          %s1451 = scalar_lea.vmem %s886, %s1450 [#allocation2]
          %v1452 = vld [vmem:[%s1451] sm:$0xff]
          %v1453 = vld [vmem:[%s1451 + $0x8] sm:$0xff]
          %v1454 = vld [vmem:[%s1451 + $0x10] sm:$0xff]
          %v1455 = vld [vmem:[%s1451 + $0x18] sm:$0xff]
          %v1456 = vld [vmem:[%s1451 + $0x20] sm:$0xff]
          %v1457 = vld [vmem:[%s1451 + $0x28] sm:$0x3f]
          %v1458 = vld [vmem:[%s1451 + $0x30] sm:$0x3f]
          %v1459 = vld [vmem:[%s1451 + $0x38] sm:$0x3f]
          %v1460 = vld [vmem:[%s1451 + $0x40] sm:$0x3f]
          %v1461 = vld [vmem:[%s1451 + $0x48] sm:$0x3f]
          %s1462 = scalar_lea.vmem %s893, 40 [#allocation3]
          %v1463 = vld [vmem:[%s1462] ss:$8 sm:$0xf]
          %v1464 = vld [vmem:[%s1462] ss:$8 sm:$0x10]
          %v1465 = vor.u32 %v1463, %v1464
          %v1467 = vlaneseq
          %v1468 = vshrl.u32 %v1467, 7
          %v1469 = vsub.s32 0, %v1468
          %v1470 = vrot.slane %v1465, %v1469
          %v1471 = vlaneseq
          %v1472 = vshrl.u32 %v1471, 7
          %v1473 = vsub.s32 1, %v1472
          %v1474 = vrot.slane %v1465, %v1473
          %v1475 = vlaneseq
          %v1476 = vshrl.u32 %v1475, 7
          %v1477 = vsub.s32 2, %v1476
          %v1478 = vrot.slane %v1465, %v1477
          %v1479 = vlaneseq
          %v1480 = vshrl.u32 %v1479, 7
          %v1481 = vsub.s32 3, %v1480
          %v1482 = vrot.slane %v1465, %v1481
          %v1483 = vlaneseq
          %v1484 = vshrl.u32 %v1483, 7
          %v1485 = vsub.s32 4, %v1484
          %v1486 = vrot.slane %v1465, %v1485
          %v1492 = vmul.f32 %v1452, %v1470
          %v1493 = vmul.f32 %v1453, %v1474
          %v1494 = vmul.f32 %v1454, %v1478
          %v1495 = vmul.f32 %v1455, %v1482
          %v1496 = vmul.f32 %v1456, %v1486
          %v1497 = vmul.f32 %v1457, %v1470
          %v1498 = vmul.f32 %v1458, %v1474
          %v1499 = vmul.f32 %v1459, %v1478
          %v1500 = vmul.f32 %v1460, %v1482
          %v1501 = vmul.f32 %v1461, %v1486
          %v1502 = vadd.f32 %v1438, %v1492
          %v1503 = vadd.f32 %v1439, %v1493
          %v1504 = vadd.f32 %v1440, %v1494
          %v1505 = vadd.f32 %v1441, %v1495
          %v1506 = vadd.f32 %v1442, %v1496
          %v1507 = vadd.f32 %v1443, %v1497
          %v1508 = vadd.f32 %v1444, %v1498
          %v1509 = vadd.f32 %v1445, %v1499
          %v1510 = vadd.f32 %v1446, %v1500
          %v1511 = vadd.f32 %v1447, %v1501
          %v1512 = vld [vmem:[%s1451] sm:$0xfe]
          %v1513 = vld [vmem:[%s1451 + $0x8] sm:$0xfe]
          %v1514 = vld [vmem:[%s1451 + $0x10] sm:$0xfe]
          %v1515 = vld [vmem:[%s1451 + $0x18] sm:$0xfe]
          %v1516 = vld [vmem:[%s1451 + $0x20] sm:$0xfe]
          %v1517 = vld [vmem:[%s1451 + $0x28] sm:$0x7f]
          %v1518 = vld [vmem:[%s1451 + $0x30] sm:$0x7f]
          %v1519 = vld [vmem:[%s1451 + $0x38] sm:$0x7f]
          %v1520 = vld [vmem:[%s1451 + $0x40] sm:$0x7f]
          %v1521 = vld [vmem:[%s1451 + $0x48] sm:$0x7f]
          %s1522 = scalar_lea.vmem %s1462, 1 [#allocation3]
          %v1523 = vld [vmem:[%s1522] ss:$8 sm:$0xf]
          %v1524 = vld [vmem:[%s1522] ss:$8 sm:$0x10]
          %v1525 = vor.u32 %v1523, %v1524
          %v1527 = vlaneseq
          %v1528 = vshrl.u32 %v1527, 7
          %v1529 = vsub.s32 0, %v1528
          %v1530 = vrot.slane %v1525, %v1529
          %v1531 = vlaneseq
          %v1532 = vshrl.u32 %v1531, 7
          %v1533 = vsub.s32 1, %v1532
          %v1534 = vrot.slane %v1525, %v1533
          %v1535 = vlaneseq
          %v1536 = vshrl.u32 %v1535, 7
          %v1537 = vsub.s32 2, %v1536
          %v1538 = vrot.slane %v1525, %v1537
          %v1539 = vlaneseq
          %v1540 = vshrl.u32 %v1539, 7
          %v1541 = vsub.s32 3, %v1540
          %v1542 = vrot.slane %v1525, %v1541
          %v1543 = vlaneseq
          %v1544 = vshrl.u32 %v1543, 7
          %v1545 = vsub.s32 4, %v1544
          %v1546 = vrot.slane %v1525, %v1545
          %v1552 = vmul.f32 %v1512, %v1530
          %v1553 = vmul.f32 %v1513, %v1534
          %v1554 = vmul.f32 %v1514, %v1538
          %v1555 = vmul.f32 %v1515, %v1542
          %v1556 = vmul.f32 %v1516, %v1546
          %v1557 = vmul.f32 %v1517, %v1530
          %v1558 = vmul.f32 %v1518, %v1534
          %v1559 = vmul.f32 %v1519, %v1538
          %v1560 = vmul.f32 %v1520, %v1542
          %v1561 = vmul.f32 %v1521, %v1546
          %v1572 = vrot.slane %v1552, 1
          %v1573 = vrot.slane %v1557, 1
          %v1574 = vsel %vm1084, %v1572, %v1573
          %v1575 = vrot.slane %v1553, 1
          %v1576 = vrot.slane %v1558, 1
          %v1577 = vsel %vm1084, %v1575, %v1576
          %v1578 = vrot.slane %v1554, 1
          %v1579 = vrot.slane %v1559, 1
          %v1580 = vsel %vm1084, %v1578, %v1579
          %v1581 = vrot.slane %v1555, 1
          %v1582 = vrot.slane %v1560, 1
          %v1583 = vsel %vm1084, %v1581, %v1582
          %v1584 = vrot.slane %v1556, 1
          %v1585 = vrot.slane %v1561, 1
          %v1586 = vsel %vm1084, %v1584, %v1585
          %v1597 = vadd.f32 %v1502, %v1574
          %v1598 = vadd.f32 %v1503, %v1577
          %v1599 = vadd.f32 %v1504, %v1580
          %v1600 = vadd.f32 %v1505, %v1583
          %v1601 = vadd.f32 %v1506, %v1586
          %v1602 = vadd.f32 %v1507, %v1573
          %v1603 = vadd.f32 %v1508, %v1576
          %v1604 = vadd.f32 %v1509, %v1579
          %v1605 = vadd.f32 %v1510, %v1582
          %v1606 = vadd.f32 %v1511, %v1585
          %v1607 = vld [vmem:[%s1451] sm:$0xfc]
          %v1608 = vld [vmem:[%s1451 + $0x8] sm:$0xfc]
          %v1609 = vld [vmem:[%s1451 + $0x10] sm:$0xfc]
          %v1610 = vld [vmem:[%s1451 + $0x18] sm:$0xfc]
          %v1611 = vld [vmem:[%s1451 + $0x20] sm:$0xfc]
          %v1612 = vld [vmem:[%s1451 + $0x28] sm:$0xff]
          %v1613 = vld [vmem:[%s1451 + $0x30] sm:$0xff]
          %v1614 = vld [vmem:[%s1451 + $0x38] sm:$0xff]
          %v1615 = vld [vmem:[%s1451 + $0x40] sm:$0xff]
          %v1616 = vld [vmem:[%s1451 + $0x48] sm:$0xff]
          %s1617 = scalar_lea.vmem %s1462, 2 [#allocation3]
          %v1618 = vld [vmem:[%s1617] ss:$8 sm:$0xf]
          %v1619 = vld [vmem:[%s1617] ss:$8 sm:$0x10]
          %v1620 = vor.u32 %v1618, %v1619
          %v1622 = vlaneseq
          %v1623 = vshrl.u32 %v1622, 7
          %v1624 = vsub.s32 0, %v1623
          %v1625 = vrot.slane %v1620, %v1624
          %v1626 = vlaneseq
          %v1627 = vshrl.u32 %v1626, 7
          %v1628 = vsub.s32 1, %v1627
          %v1629 = vrot.slane %v1620, %v1628
          %v1630 = vlaneseq
          %v1631 = vshrl.u32 %v1630, 7
          %v1632 = vsub.s32 2, %v1631
          %v1633 = vrot.slane %v1620, %v1632
          %v1634 = vlaneseq
          %v1635 = vshrl.u32 %v1634, 7
          %v1636 = vsub.s32 3, %v1635
          %v1637 = vrot.slane %v1620, %v1636
          %v1638 = vlaneseq
          %v1639 = vshrl.u32 %v1638, 7
          %v1640 = vsub.s32 4, %v1639
          %v1641 = vrot.slane %v1620, %v1640
          %v1647 = vmul.f32 %v1607, %v1625
          %v1648 = vmul.f32 %v1608, %v1629
          %v1649 = vmul.f32 %v1609, %v1633
          %v1650 = vmul.f32 %v1610, %v1637
          %v1651 = vmul.f32 %v1611, %v1641
          %v1652 = vmul.f32 %v1612, %v1625
          %v1653 = vmul.f32 %v1613, %v1629
          %v1654 = vmul.f32 %v1614, %v1633
          %v1655 = vmul.f32 %v1615, %v1637
          %v1656 = vmul.f32 %v1616, %v1641
          %v1667 = vrot.slane %v1647, 2
          %v1668 = vrot.slane %v1652, 2
          %v1669 = vsel %vm1180, %v1667, %v1668
          %v1670 = vrot.slane %v1648, 2
          %v1671 = vrot.slane %v1653, 2
          %v1672 = vsel %vm1180, %v1670, %v1671
          %v1673 = vrot.slane %v1649, 2
          %v1674 = vrot.slane %v1654, 2
          %v1675 = vsel %vm1180, %v1673, %v1674
          %v1676 = vrot.slane %v1650, 2
          %v1677 = vrot.slane %v1655, 2
          %v1678 = vsel %vm1180, %v1676, %v1677
          %v1679 = vrot.slane %v1651, 2
          %v1680 = vrot.slane %v1656, 2
          %v1681 = vsel %vm1180, %v1679, %v1680
          %v1692 = vadd.f32 %v1597, %v1669
          %v1693 = vadd.f32 %v1598, %v1672
          %v1694 = vadd.f32 %v1599, %v1675
          %v1695 = vadd.f32 %v1600, %v1678
          %v1696 = vadd.f32 %v1601, %v1681
          %v1697 = vadd.f32 %v1602, %v1668
          %v1698 = vadd.f32 %v1603, %v1671
          %v1699 = vadd.f32 %v1604, %v1674
          %v1700 = vadd.f32 %v1605, %v1677
          %v1701 = vadd.f32 %v1606, %v1680
          %v1702 = vld [vmem:[%s1451] sm:$0xf8]
          %v1703 = vld [vmem:[%s1451 + $0x8] sm:$0xf8]
          %v1704 = vld [vmem:[%s1451 + $0x10] sm:$0xf8]
          %v1705 = vld [vmem:[%s1451 + $0x18] sm:$0xf8]
          %v1706 = vld [vmem:[%s1451 + $0x20] sm:$0xf8]
          %v1707 = vld [vmem:[%s1451 + $0x50] sm:$0x1]
          %v1708 = vld [vmem:[%s1451 + $0x58] sm:$0x1]
          %v1709 = vld [vmem:[%s1451 + $0x60] sm:$0x1]
          %v1710 = vld [vmem:[%s1451 + $0x68] sm:$0x1]
          %v1711 = vld [vmem:[%s1451 + $0x70] sm:$0x1]
          %s1712 = scalar_lea.vmem %s1462, 3 [#allocation3]
          %v1713 = vld [vmem:[%s1712] ss:$8 sm:$0xf]
          %v1714 = vld [vmem:[%s1712] ss:$8 sm:$0x10]
          %v1715 = vor.u32 %v1713, %v1714
          %v1717 = vlaneseq
          %v1718 = vshrl.u32 %v1717, 7
          %v1719 = vsub.s32 0, %v1718
          %v1720 = vrot.slane %v1715, %v1719
          %v1721 = vlaneseq
          %v1722 = vshrl.u32 %v1721, 7
          %v1723 = vsub.s32 1, %v1722
          %v1724 = vrot.slane %v1715, %v1723
          %v1725 = vlaneseq
          %v1726 = vshrl.u32 %v1725, 7
          %v1727 = vsub.s32 2, %v1726
          %v1728 = vrot.slane %v1715, %v1727
          %v1729 = vlaneseq
          %v1730 = vshrl.u32 %v1729, 7
          %v1731 = vsub.s32 3, %v1730
          %v1732 = vrot.slane %v1715, %v1731
          %v1733 = vlaneseq
          %v1734 = vshrl.u32 %v1733, 7
          %v1735 = vsub.s32 4, %v1734
          %v1736 = vrot.slane %v1715, %v1735
          %v1742 = vmul.f32 %v1702, %v1720
          %v1743 = vmul.f32 %v1703, %v1724
          %v1744 = vmul.f32 %v1704, %v1728
          %v1745 = vmul.f32 %v1705, %v1732
          %v1746 = vmul.f32 %v1706, %v1736
          %v1747 = vmul.f32 %v1612, %v1720
          %v1748 = vmul.f32 %v1613, %v1724
          %v1749 = vmul.f32 %v1614, %v1728
          %v1750 = vmul.f32 %v1615, %v1732
          %v1751 = vmul.f32 %v1616, %v1736
          %v1752 = vmul.f32 %v1707, %v1720
          %v1753 = vmul.f32 %v1708, %v1724
          %v1754 = vmul.f32 %v1709, %v1728
          %v1755 = vmul.f32 %v1710, %v1732
          %v1756 = vmul.f32 %v1711, %v1736
          %v1772 = vrot.slane %v1742, 3
          %v1773 = vrot.slane %v1747, 3
          %v1774 = vsel %vm1286, %v1772, %v1773
          %v1775 = vrot.slane %v1743, 3
          %v1776 = vrot.slane %v1748, 3
          %v1777 = vsel %vm1286, %v1775, %v1776
          %v1778 = vrot.slane %v1744, 3
          %v1779 = vrot.slane %v1749, 3
          %v1780 = vsel %vm1286, %v1778, %v1779
          %v1781 = vrot.slane %v1745, 3
          %v1782 = vrot.slane %v1750, 3
          %v1783 = vsel %vm1286, %v1781, %v1782
          %v1784 = vrot.slane %v1746, 3
          %v1785 = vrot.slane %v1751, 3
          %v1786 = vsel %vm1286, %v1784, %v1785
          %v1787 = vrot.slane %v1752, 3
          %v1788 = vsel %vm1286, %v1773, %v1787
          %v1789 = vrot.slane %v1753, 3
          %v1790 = vsel %vm1286, %v1776, %v1789
          %v1791 = vrot.slane %v1754, 3
          %v1792 = vsel %vm1286, %v1779, %v1791
          %v1793 = vrot.slane %v1755, 3
          %v1794 = vsel %vm1286, %v1782, %v1793
          %v1795 = vrot.slane %v1756, 3
          %v1796 = vsel %vm1286, %v1785, %v1795
          %v1807 = vadd.f32 %v1692, %v1774
          %v1808 = vadd.f32 %v1693, %v1777
          %v1809 = vadd.f32 %v1694, %v1780
          %v1810 = vadd.f32 %v1695, %v1783
          %v1811 = vadd.f32 %v1696, %v1786
          %v1812 = vadd.f32 %v1697, %v1788
          %v1813 = vadd.f32 %v1698, %v1790
          %v1814 = vadd.f32 %v1699, %v1792
          %v1815 = vadd.f32 %v1700, %v1794
          %v1816 = vadd.f32 %v1701, %v1796
          %v1817 = vld [vmem:[%s1451] sm:$0xf0]
          %v1818 = vld [vmem:[%s1451 + $0x8] sm:$0xf0]
          %v1819 = vld [vmem:[%s1451 + $0x10] sm:$0xf0]
          %v1820 = vld [vmem:[%s1451 + $0x18] sm:$0xf0]
          %v1821 = vld [vmem:[%s1451 + $0x20] sm:$0xf0]
          %v1822 = vld [vmem:[%s1451 + $0x50] sm:$0x3]
          %v1823 = vld [vmem:[%s1451 + $0x58] sm:$0x3]
          %v1824 = vld [vmem:[%s1451 + $0x60] sm:$0x3]
          %v1825 = vld [vmem:[%s1451 + $0x68] sm:$0x3]
          %v1826 = vld [vmem:[%s1451 + $0x70] sm:$0x3]
          %s1827 = scalar_lea.vmem %s1462, 4 [#allocation3]
          %v1828 = vld [vmem:[%s1827] ss:$8 sm:$0xf]
          %v1829 = vld [vmem:[%s1827] ss:$8 sm:$0x10]
          %v1830 = vor.u32 %v1828, %v1829
          %v1832 = vlaneseq
          %v1833 = vshrl.u32 %v1832, 7
          %v1834 = vsub.s32 0, %v1833
          %v1835 = vrot.slane %v1830, %v1834
          %v1836 = vlaneseq
          %v1837 = vshrl.u32 %v1836, 7
          %v1838 = vsub.s32 1, %v1837
          %v1839 = vrot.slane %v1830, %v1838
          %v1840 = vlaneseq
          %v1841 = vshrl.u32 %v1840, 7
          %v1842 = vsub.s32 2, %v1841
          %v1843 = vrot.slane %v1830, %v1842
          %v1844 = vlaneseq
          %v1845 = vshrl.u32 %v1844, 7
          %v1846 = vsub.s32 3, %v1845
          %v1847 = vrot.slane %v1830, %v1846
          %v1848 = vlaneseq
          %v1849 = vshrl.u32 %v1848, 7
          %v1850 = vsub.s32 4, %v1849
          %v1851 = vrot.slane %v1830, %v1850
          %v1857 = vmul.f32 %v1817, %v1835
          %v1858 = vmul.f32 %v1818, %v1839
          %v1859 = vmul.f32 %v1819, %v1843
          %v1860 = vmul.f32 %v1820, %v1847
          %v1861 = vmul.f32 %v1821, %v1851
          %v1862 = vmul.f32 %v1612, %v1835
          %v1863 = vmul.f32 %v1613, %v1839
          %v1864 = vmul.f32 %v1614, %v1843
          %v1865 = vmul.f32 %v1615, %v1847
          %v1866 = vmul.f32 %v1616, %v1851
          %v1867 = vmul.f32 %v1822, %v1835
          %v1868 = vmul.f32 %v1823, %v1839
          %v1869 = vmul.f32 %v1824, %v1843
          %v1870 = vmul.f32 %v1825, %v1847
          %v1871 = vmul.f32 %v1826, %v1851
          %v1887 = vrot.slane %v1857, 4
          %v1888 = vrot.slane %v1862, 4
          %v1889 = vsel %vm1402, %v1887, %v1888
          %v1890 = vrot.slane %v1858, 4
          %v1891 = vrot.slane %v1863, 4
          %v1892 = vsel %vm1402, %v1890, %v1891
          %v1893 = vrot.slane %v1859, 4
          %v1894 = vrot.slane %v1864, 4
          %v1895 = vsel %vm1402, %v1893, %v1894
          %v1896 = vrot.slane %v1860, 4
          %v1897 = vrot.slane %v1865, 4
          %v1898 = vsel %vm1402, %v1896, %v1897
          %v1899 = vrot.slane %v1861, 4
          %v1900 = vrot.slane %v1866, 4
          %v1901 = vsel %vm1402, %v1899, %v1900
          %v1902 = vrot.slane %v1867, 4
          %v1903 = vsel %vm1402, %v1888, %v1902
          %v1904 = vrot.slane %v1868, 4
          %v1905 = vsel %vm1402, %v1891, %v1904
          %v1906 = vrot.slane %v1869, 4
          %v1907 = vsel %vm1402, %v1894, %v1906
          %v1908 = vrot.slane %v1870, 4
          %v1909 = vsel %vm1402, %v1897, %v1908
          %v1910 = vrot.slane %v1871, 4
          %v1911 = vsel %vm1402, %v1900, %v1910
          %v1922 = vadd.f32 %v1807, %v1889
          %v1923 = vadd.f32 %v1808, %v1892
          %v1924 = vadd.f32 %v1809, %v1895
          %v1925 = vadd.f32 %v1810, %v1898
          %v1926 = vadd.f32 %v1811, %v1901
          %v1927 = vadd.f32 %v1812, %v1903
          %v1928 = vadd.f32 %v1813, %v1905
          %v1929 = vadd.f32 %v1814, %v1907
          %v1930 = vadd.f32 %v1815, %v1909
          %v1931 = vadd.f32 %v1816, %v1911
          %s1932 = sadd.s32 %s957, 2
          %s1933 = smul.u32 %s1932, 15
          %s1934 = smul.addr %s1933, 8
          %s1935 = scalar_lea.vmem %s886, %s1934 [#allocation2]
          %v1936 = vld [vmem:[%s1935] sm:$0xff]
          %v1937 = vld [vmem:[%s1935 + $0x8] sm:$0xff]
          %v1938 = vld [vmem:[%s1935 + $0x10] sm:$0xff]
          %v1939 = vld [vmem:[%s1935 + $0x18] sm:$0xff]
          %v1940 = vld [vmem:[%s1935 + $0x20] sm:$0xff]
          %v1941 = vld [vmem:[%s1935 + $0x28] sm:$0x3f]
          %v1942 = vld [vmem:[%s1935 + $0x30] sm:$0x3f]
          %v1943 = vld [vmem:[%s1935 + $0x38] sm:$0x3f]
          %v1944 = vld [vmem:[%s1935 + $0x40] sm:$0x3f]
          %v1945 = vld [vmem:[%s1935 + $0x48] sm:$0x3f]
          %s1946 = scalar_lea.vmem %s893, 80 [#allocation3]
          %v1947 = vld [vmem:[%s1946] ss:$8 sm:$0xf]
          %v1948 = vld [vmem:[%s1946] ss:$8 sm:$0x10]
          %v1949 = vor.u32 %v1947, %v1948
          %v1951 = vlaneseq
          %v1952 = vshrl.u32 %v1951, 7
          %v1953 = vsub.s32 0, %v1952
          %v1954 = vrot.slane %v1949, %v1953
          %v1955 = vlaneseq
          %v1956 = vshrl.u32 %v1955, 7
          %v1957 = vsub.s32 1, %v1956
          %v1958 = vrot.slane %v1949, %v1957
          %v1959 = vlaneseq
          %v1960 = vshrl.u32 %v1959, 7
          %v1961 = vsub.s32 2, %v1960
          %v1962 = vrot.slane %v1949, %v1961
          %v1963 = vlaneseq
          %v1964 = vshrl.u32 %v1963, 7
          %v1965 = vsub.s32 3, %v1964
          %v1966 = vrot.slane %v1949, %v1965
          %v1967 = vlaneseq
          %v1968 = vshrl.u32 %v1967, 7
          %v1969 = vsub.s32 4, %v1968
          %v1970 = vrot.slane %v1949, %v1969
          %v1976 = vmul.f32 %v1936, %v1954
          %v1977 = vmul.f32 %v1937, %v1958
          %v1978 = vmul.f32 %v1938, %v1962
          %v1979 = vmul.f32 %v1939, %v1966
          %v1980 = vmul.f32 %v1940, %v1970
          %v1981 = vmul.f32 %v1941, %v1954
          %v1982 = vmul.f32 %v1942, %v1958
          %v1983 = vmul.f32 %v1943, %v1962
          %v1984 = vmul.f32 %v1944, %v1966
          %v1985 = vmul.f32 %v1945, %v1970
          %v1986 = vadd.f32 %v1922, %v1976
          %v1987 = vadd.f32 %v1923, %v1977
          %v1988 = vadd.f32 %v1924, %v1978
          %v1989 = vadd.f32 %v1925, %v1979
          %v1990 = vadd.f32 %v1926, %v1980
          %v1991 = vadd.f32 %v1927, %v1981
          %v1992 = vadd.f32 %v1928, %v1982
          %v1993 = vadd.f32 %v1929, %v1983
          %v1994 = vadd.f32 %v1930, %v1984
          %v1995 = vadd.f32 %v1931, %v1985
          %v1996 = vld [vmem:[%s1935] sm:$0xfe]
          %v1997 = vld [vmem:[%s1935 + $0x8] sm:$0xfe]
          %v1998 = vld [vmem:[%s1935 + $0x10] sm:$0xfe]
          %v1999 = vld [vmem:[%s1935 + $0x18] sm:$0xfe]
          %v2000 = vld [vmem:[%s1935 + $0x20] sm:$0xfe]
          %v2001 = vld [vmem:[%s1935 + $0x28] sm:$0x7f]
          %v2002 = vld [vmem:[%s1935 + $0x30] sm:$0x7f]
          %v2003 = vld [vmem:[%s1935 + $0x38] sm:$0x7f]
          %v2004 = vld [vmem:[%s1935 + $0x40] sm:$0x7f]
          %v2005 = vld [vmem:[%s1935 + $0x48] sm:$0x7f]
          %s2006 = scalar_lea.vmem %s1946, 1 [#allocation3]
          %v2007 = vld [vmem:[%s2006] ss:$8 sm:$0xf]
          %v2008 = vld [vmem:[%s2006] ss:$8 sm:$0x10]
          %v2009 = vor.u32 %v2007, %v2008
          %v2011 = vlaneseq
          %v2012 = vshrl.u32 %v2011, 7
          %v2013 = vsub.s32 0, %v2012
          %v2014 = vrot.slane %v2009, %v2013
          %v2015 = vlaneseq
          %v2016 = vshrl.u32 %v2015, 7
          %v2017 = vsub.s32 1, %v2016
          %v2018 = vrot.slane %v2009, %v2017
          %v2019 = vlaneseq
          %v2020 = vshrl.u32 %v2019, 7
          %v2021 = vsub.s32 2, %v2020
          %v2022 = vrot.slane %v2009, %v2021
          %v2023 = vlaneseq
          %v2024 = vshrl.u32 %v2023, 7
          %v2025 = vsub.s32 3, %v2024
          %v2026 = vrot.slane %v2009, %v2025
          %v2027 = vlaneseq
          %v2028 = vshrl.u32 %v2027, 7
          %v2029 = vsub.s32 4, %v2028
          %v2030 = vrot.slane %v2009, %v2029
          %v2036 = vmul.f32 %v1996, %v2014
          %v2037 = vmul.f32 %v1997, %v2018
          %v2038 = vmul.f32 %v1998, %v2022
          %v2039 = vmul.f32 %v1999, %v2026
          %v2040 = vmul.f32 %v2000, %v2030
          %v2041 = vmul.f32 %v2001, %v2014
          %v2042 = vmul.f32 %v2002, %v2018
          %v2043 = vmul.f32 %v2003, %v2022
          %v2044 = vmul.f32 %v2004, %v2026
          %v2045 = vmul.f32 %v2005, %v2030
          %v2056 = vrot.slane %v2036, 1
          %v2057 = vrot.slane %v2041, 1
          %v2058 = vsel %vm1084, %v2056, %v2057
          %v2059 = vrot.slane %v2037, 1
          %v2060 = vrot.slane %v2042, 1
          %v2061 = vsel %vm1084, %v2059, %v2060
          %v2062 = vrot.slane %v2038, 1
          %v2063 = vrot.slane %v2043, 1
          %v2064 = vsel %vm1084, %v2062, %v2063
          %v2065 = vrot.slane %v2039, 1
          %v2066 = vrot.slane %v2044, 1
          %v2067 = vsel %vm1084, %v2065, %v2066
          %v2068 = vrot.slane %v2040, 1
          %v2069 = vrot.slane %v2045, 1
          %v2070 = vsel %vm1084, %v2068, %v2069
          %v2081 = vadd.f32 %v1986, %v2058
          %v2082 = vadd.f32 %v1987, %v2061
          %v2083 = vadd.f32 %v1988, %v2064
          %v2084 = vadd.f32 %v1989, %v2067
          %v2085 = vadd.f32 %v1990, %v2070
          %v2086 = vadd.f32 %v1991, %v2057
          %v2087 = vadd.f32 %v1992, %v2060
          %v2088 = vadd.f32 %v1993, %v2063
          %v2089 = vadd.f32 %v1994, %v2066
          %v2090 = vadd.f32 %v1995, %v2069
          %v2091 = vld [vmem:[%s1935] sm:$0xfc]
          %v2092 = vld [vmem:[%s1935 + $0x8] sm:$0xfc]
          %v2093 = vld [vmem:[%s1935 + $0x10] sm:$0xfc]
          %v2094 = vld [vmem:[%s1935 + $0x18] sm:$0xfc]
          %v2095 = vld [vmem:[%s1935 + $0x20] sm:$0xfc]
          %v2096 = vld [vmem:[%s1935 + $0x28] sm:$0xff]
          %v2097 = vld [vmem:[%s1935 + $0x30] sm:$0xff]
          %v2098 = vld [vmem:[%s1935 + $0x38] sm:$0xff]
          %v2099 = vld [vmem:[%s1935 + $0x40] sm:$0xff]
          %v2100 = vld [vmem:[%s1935 + $0x48] sm:$0xff]
          %s2101 = scalar_lea.vmem %s1946, 2 [#allocation3]
          %v2102 = vld [vmem:[%s2101] ss:$8 sm:$0xf]
          %v2103 = vld [vmem:[%s2101] ss:$8 sm:$0x10]
          %v2104 = vor.u32 %v2102, %v2103
          %v2106 = vlaneseq
          %v2107 = vshrl.u32 %v2106, 7
          %v2108 = vsub.s32 0, %v2107
          %v2109 = vrot.slane %v2104, %v2108
          %v2110 = vlaneseq
          %v2111 = vshrl.u32 %v2110, 7
          %v2112 = vsub.s32 1, %v2111
          %v2113 = vrot.slane %v2104, %v2112
          %v2114 = vlaneseq
          %v2115 = vshrl.u32 %v2114, 7
          %v2116 = vsub.s32 2, %v2115
          %v2117 = vrot.slane %v2104, %v2116
          %v2118 = vlaneseq
          %v2119 = vshrl.u32 %v2118, 7
          %v2120 = vsub.s32 3, %v2119
          %v2121 = vrot.slane %v2104, %v2120
          %v2122 = vlaneseq
          %v2123 = vshrl.u32 %v2122, 7
          %v2124 = vsub.s32 4, %v2123
          %v2125 = vrot.slane %v2104, %v2124
          %v2131 = vmul.f32 %v2091, %v2109
          %v2132 = vmul.f32 %v2092, %v2113
          %v2133 = vmul.f32 %v2093, %v2117
          %v2134 = vmul.f32 %v2094, %v2121
          %v2135 = vmul.f32 %v2095, %v2125
          %v2136 = vmul.f32 %v2096, %v2109
          %v2137 = vmul.f32 %v2097, %v2113
          %v2138 = vmul.f32 %v2098, %v2117
          %v2139 = vmul.f32 %v2099, %v2121
          %v2140 = vmul.f32 %v2100, %v2125
          %v2151 = vrot.slane %v2131, 2
          %v2152 = vrot.slane %v2136, 2
          %v2153 = vsel %vm1180, %v2151, %v2152
          %v2154 = vrot.slane %v2132, 2
          %v2155 = vrot.slane %v2137, 2
          %v2156 = vsel %vm1180, %v2154, %v2155
          %v2157 = vrot.slane %v2133, 2
          %v2158 = vrot.slane %v2138, 2
          %v2159 = vsel %vm1180, %v2157, %v2158
          %v2160 = vrot.slane %v2134, 2
          %v2161 = vrot.slane %v2139, 2
          %v2162 = vsel %vm1180, %v2160, %v2161
          %v2163 = vrot.slane %v2135, 2
          %v2164 = vrot.slane %v2140, 2
          %v2165 = vsel %vm1180, %v2163, %v2164
          %v2176 = vadd.f32 %v2081, %v2153
          %v2177 = vadd.f32 %v2082, %v2156
          %v2178 = vadd.f32 %v2083, %v2159
          %v2179 = vadd.f32 %v2084, %v2162
          %v2180 = vadd.f32 %v2085, %v2165
          %v2181 = vadd.f32 %v2086, %v2152
          %v2182 = vadd.f32 %v2087, %v2155
          %v2183 = vadd.f32 %v2088, %v2158
          %v2184 = vadd.f32 %v2089, %v2161
          %v2185 = vadd.f32 %v2090, %v2164
          %v2186 = vld [vmem:[%s1935] sm:$0xf8]
          %v2187 = vld [vmem:[%s1935 + $0x8] sm:$0xf8]
          %v2188 = vld [vmem:[%s1935 + $0x10] sm:$0xf8]
          %v2189 = vld [vmem:[%s1935 + $0x18] sm:$0xf8]
          %v2190 = vld [vmem:[%s1935 + $0x20] sm:$0xf8]
          %v2191 = vld [vmem:[%s1935 + $0x50] sm:$0x1]
          %v2192 = vld [vmem:[%s1935 + $0x58] sm:$0x1]
          %v2193 = vld [vmem:[%s1935 + $0x60] sm:$0x1]
          %v2194 = vld [vmem:[%s1935 + $0x68] sm:$0x1]
          %v2195 = vld [vmem:[%s1935 + $0x70] sm:$0x1]
          %s2196 = scalar_lea.vmem %s1946, 3 [#allocation3]
          %v2197 = vld [vmem:[%s2196] ss:$8 sm:$0xf]
          %v2198 = vld [vmem:[%s2196] ss:$8 sm:$0x10]
          %v2199 = vor.u32 %v2197, %v2198
          %v2201 = vlaneseq
          %v2202 = vshrl.u32 %v2201, 7
          %v2203 = vsub.s32 0, %v2202
          %v2204 = vrot.slane %v2199, %v2203
          %v2205 = vlaneseq
          %v2206 = vshrl.u32 %v2205, 7
          %v2207 = vsub.s32 1, %v2206
          %v2208 = vrot.slane %v2199, %v2207
          %v2209 = vlaneseq
          %v2210 = vshrl.u32 %v2209, 7
          %v2211 = vsub.s32 2, %v2210
          %v2212 = vrot.slane %v2199, %v2211
          %v2213 = vlaneseq
          %v2214 = vshrl.u32 %v2213, 7
          %v2215 = vsub.s32 3, %v2214
          %v2216 = vrot.slane %v2199, %v2215
          %v2217 = vlaneseq
          %v2218 = vshrl.u32 %v2217, 7
          %v2219 = vsub.s32 4, %v2218
          %v2220 = vrot.slane %v2199, %v2219
          %v2226 = vmul.f32 %v2186, %v2204
          %v2227 = vmul.f32 %v2187, %v2208
          %v2228 = vmul.f32 %v2188, %v2212
          %v2229 = vmul.f32 %v2189, %v2216
          %v2230 = vmul.f32 %v2190, %v2220
          %v2231 = vmul.f32 %v2096, %v2204
          %v2232 = vmul.f32 %v2097, %v2208
          %v2233 = vmul.f32 %v2098, %v2212
          %v2234 = vmul.f32 %v2099, %v2216
          %v2235 = vmul.f32 %v2100, %v2220
          %v2236 = vmul.f32 %v2191, %v2204
          %v2237 = vmul.f32 %v2192, %v2208
          %v2238 = vmul.f32 %v2193, %v2212
          %v2239 = vmul.f32 %v2194, %v2216
          %v2240 = vmul.f32 %v2195, %v2220
          %v2256 = vrot.slane %v2226, 3
          %v2257 = vrot.slane %v2231, 3
          %v2258 = vsel %vm1286, %v2256, %v2257
          %v2259 = vrot.slane %v2227, 3
          %v2260 = vrot.slane %v2232, 3
          %v2261 = vsel %vm1286, %v2259, %v2260
          %v2262 = vrot.slane %v2228, 3
          %v2263 = vrot.slane %v2233, 3
          %v2264 = vsel %vm1286, %v2262, %v2263
          %v2265 = vrot.slane %v2229, 3
          %v2266 = vrot.slane %v2234, 3
          %v2267 = vsel %vm1286, %v2265, %v2266
          %v2268 = vrot.slane %v2230, 3
          %v2269 = vrot.slane %v2235, 3
          %v2270 = vsel %vm1286, %v2268, %v2269
          %v2271 = vrot.slane %v2236, 3
          %v2272 = vsel %vm1286, %v2257, %v2271
          %v2273 = vrot.slane %v2237, 3
          %v2274 = vsel %vm1286, %v2260, %v2273
          %v2275 = vrot.slane %v2238, 3
          %v2276 = vsel %vm1286, %v2263, %v2275
          %v2277 = vrot.slane %v2239, 3
          %v2278 = vsel %vm1286, %v2266, %v2277
          %v2279 = vrot.slane %v2240, 3
          %v2280 = vsel %vm1286, %v2269, %v2279
          %v2291 = vadd.f32 %v2176, %v2258
          %v2292 = vadd.f32 %v2177, %v2261
          %v2293 = vadd.f32 %v2178, %v2264
          %v2294 = vadd.f32 %v2179, %v2267
          %v2295 = vadd.f32 %v2180, %v2270
          %v2296 = vadd.f32 %v2181, %v2272
          %v2297 = vadd.f32 %v2182, %v2274
          %v2298 = vadd.f32 %v2183, %v2276
          %v2299 = vadd.f32 %v2184, %v2278
          %v2300 = vadd.f32 %v2185, %v2280
          %v2301 = vld [vmem:[%s1935] sm:$0xf0]
          %v2302 = vld [vmem:[%s1935 + $0x8] sm:$0xf0]
          %v2303 = vld [vmem:[%s1935 + $0x10] sm:$0xf0]
          %v2304 = vld [vmem:[%s1935 + $0x18] sm:$0xf0]
          %v2305 = vld [vmem:[%s1935 + $0x20] sm:$0xf0]
          %v2306 = vld [vmem:[%s1935 + $0x50] sm:$0x3]
          %v2307 = vld [vmem:[%s1935 + $0x58] sm:$0x3]
          %v2308 = vld [vmem:[%s1935 + $0x60] sm:$0x3]
          %v2309 = vld [vmem:[%s1935 + $0x68] sm:$0x3]
          %v2310 = vld [vmem:[%s1935 + $0x70] sm:$0x3]
          %s2311 = scalar_lea.vmem %s1946, 4 [#allocation3]
          %v2312 = vld [vmem:[%s2311] ss:$8 sm:$0xf]
          %v2313 = vld [vmem:[%s2311] ss:$8 sm:$0x10]
          %v2314 = vor.u32 %v2312, %v2313
          %v2316 = vlaneseq
          %v2317 = vshrl.u32 %v2316, 7
          %v2318 = vsub.s32 0, %v2317
          %v2319 = vrot.slane %v2314, %v2318
          %v2320 = vlaneseq
          %v2321 = vshrl.u32 %v2320, 7
          %v2322 = vsub.s32 1, %v2321
          %v2323 = vrot.slane %v2314, %v2322
          %v2324 = vlaneseq
          %v2325 = vshrl.u32 %v2324, 7
          %v2326 = vsub.s32 2, %v2325
          %v2327 = vrot.slane %v2314, %v2326
          %v2328 = vlaneseq
          %v2329 = vshrl.u32 %v2328, 7
          %v2330 = vsub.s32 3, %v2329
          %v2331 = vrot.slane %v2314, %v2330
          %v2332 = vlaneseq
          %v2333 = vshrl.u32 %v2332, 7
          %v2334 = vsub.s32 4, %v2333
          %v2335 = vrot.slane %v2314, %v2334
          %v2341 = vmul.f32 %v2301, %v2319
          %v2342 = vmul.f32 %v2302, %v2323
          %v2343 = vmul.f32 %v2303, %v2327
          %v2344 = vmul.f32 %v2304, %v2331
          %v2345 = vmul.f32 %v2305, %v2335
          %v2346 = vmul.f32 %v2096, %v2319
          %v2347 = vmul.f32 %v2097, %v2323
          %v2348 = vmul.f32 %v2098, %v2327
          %v2349 = vmul.f32 %v2099, %v2331
          %v2350 = vmul.f32 %v2100, %v2335
          %v2351 = vmul.f32 %v2306, %v2319
          %v2352 = vmul.f32 %v2307, %v2323
          %v2353 = vmul.f32 %v2308, %v2327
          %v2354 = vmul.f32 %v2309, %v2331
          %v2355 = vmul.f32 %v2310, %v2335
          %v2371 = vrot.slane %v2341, 4
          %v2372 = vrot.slane %v2346, 4
          %v2373 = vsel %vm1402, %v2371, %v2372
          %v2374 = vrot.slane %v2342, 4
          %v2375 = vrot.slane %v2347, 4
          %v2376 = vsel %vm1402, %v2374, %v2375
          %v2377 = vrot.slane %v2343, 4
          %v2378 = vrot.slane %v2348, 4
          %v2379 = vsel %vm1402, %v2377, %v2378
          %v2380 = vrot.slane %v2344, 4
          %v2381 = vrot.slane %v2349, 4
          %v2382 = vsel %vm1402, %v2380, %v2381
          %v2383 = vrot.slane %v2345, 4
          %v2384 = vrot.slane %v2350, 4
          %v2385 = vsel %vm1402, %v2383, %v2384
          %v2386 = vrot.slane %v2351, 4
          %v2387 = vsel %vm1402, %v2372, %v2386
          %v2388 = vrot.slane %v2352, 4
          %v2389 = vsel %vm1402, %v2375, %v2388
          %v2390 = vrot.slane %v2353, 4
          %v2391 = vsel %vm1402, %v2378, %v2390
          %v2392 = vrot.slane %v2354, 4
          %v2393 = vsel %vm1402, %v2381, %v2392
          %v2394 = vrot.slane %v2355, 4
          %v2395 = vsel %vm1402, %v2384, %v2394
          %v2406 = vadd.f32 %v2291, %v2373
          %v2407 = vadd.f32 %v2292, %v2376
          %v2408 = vadd.f32 %v2293, %v2379
          %v2409 = vadd.f32 %v2294, %v2382
          %v2410 = vadd.f32 %v2295, %v2385
          %v2411 = vadd.f32 %v2296, %v2387
          %v2412 = vadd.f32 %v2297, %v2389
          %v2413 = vadd.f32 %v2298, %v2391
          %v2414 = vadd.f32 %v2299, %v2393
          %v2415 = vadd.f32 %v2300, %v2395
          %s2416 = sadd.s32 %s957, 3
          %s2417 = smul.u32 %s2416, 15
          %s2418 = smul.addr %s2417, 8
          %s2419 = scalar_lea.vmem %s886, %s2418 [#allocation2]
          %v2420 = vld [vmem:[%s2419] sm:$0xff]
          %v2421 = vld [vmem:[%s2419 + $0x8] sm:$0xff]
          %v2422 = vld [vmem:[%s2419 + $0x10] sm:$0xff]
          %v2423 = vld [vmem:[%s2419 + $0x18] sm:$0xff]
          %v2424 = vld [vmem:[%s2419 + $0x20] sm:$0xff]
          %v2425 = vld [vmem:[%s2419 + $0x28] sm:$0x3f]
          %v2426 = vld [vmem:[%s2419 + $0x30] sm:$0x3f]
          %v2427 = vld [vmem:[%s2419 + $0x38] sm:$0x3f]
          %v2428 = vld [vmem:[%s2419 + $0x40] sm:$0x3f]
          %v2429 = vld [vmem:[%s2419 + $0x48] sm:$0x3f]
          %s2430 = scalar_lea.vmem %s893, 120 [#allocation3]
          %v2431 = vld [vmem:[%s2430] ss:$8 sm:$0xf]
          %v2432 = vld [vmem:[%s2430] ss:$8 sm:$0x10]
          %v2433 = vor.u32 %v2431, %v2432
          %v2435 = vlaneseq
          %v2436 = vshrl.u32 %v2435, 7
          %v2437 = vsub.s32 0, %v2436
          %v2438 = vrot.slane %v2433, %v2437
          %v2439 = vlaneseq
          %v2440 = vshrl.u32 %v2439, 7
          %v2441 = vsub.s32 1, %v2440
          %v2442 = vrot.slane %v2433, %v2441
          %v2443 = vlaneseq
          %v2444 = vshrl.u32 %v2443, 7
          %v2445 = vsub.s32 2, %v2444
          %v2446 = vrot.slane %v2433, %v2445
          %v2447 = vlaneseq
          %v2448 = vshrl.u32 %v2447, 7
          %v2449 = vsub.s32 3, %v2448
          %v2450 = vrot.slane %v2433, %v2449
          %v2451 = vlaneseq
          %v2452 = vshrl.u32 %v2451, 7
          %v2453 = vsub.s32 4, %v2452
          %v2454 = vrot.slane %v2433, %v2453
          %v2460 = vmul.f32 %v2420, %v2438
          %v2461 = vmul.f32 %v2421, %v2442
          %v2462 = vmul.f32 %v2422, %v2446
          %v2463 = vmul.f32 %v2423, %v2450
          %v2464 = vmul.f32 %v2424, %v2454
          %v2465 = vmul.f32 %v2425, %v2438
          %v2466 = vmul.f32 %v2426, %v2442
          %v2467 = vmul.f32 %v2427, %v2446
          %v2468 = vmul.f32 %v2428, %v2450
          %v2469 = vmul.f32 %v2429, %v2454
          %v2470 = vadd.f32 %v2406, %v2460
          %v2471 = vadd.f32 %v2407, %v2461
          %v2472 = vadd.f32 %v2408, %v2462
          %v2473 = vadd.f32 %v2409, %v2463
          %v2474 = vadd.f32 %v2410, %v2464
          %v2475 = vadd.f32 %v2411, %v2465
          %v2476 = vadd.f32 %v2412, %v2466
          %v2477 = vadd.f32 %v2413, %v2467
          %v2478 = vadd.f32 %v2414, %v2468
          %v2479 = vadd.f32 %v2415, %v2469
          %v2480 = vld [vmem:[%s2419] sm:$0xfe]
          %v2481 = vld [vmem:[%s2419 + $0x8] sm:$0xfe]
          %v2482 = vld [vmem:[%s2419 + $0x10] sm:$0xfe]
          %v2483 = vld [vmem:[%s2419 + $0x18] sm:$0xfe]
          %v2484 = vld [vmem:[%s2419 + $0x20] sm:$0xfe]
          %v2485 = vld [vmem:[%s2419 + $0x28] sm:$0x7f]
          %v2486 = vld [vmem:[%s2419 + $0x30] sm:$0x7f]
          %v2487 = vld [vmem:[%s2419 + $0x38] sm:$0x7f]
          %v2488 = vld [vmem:[%s2419 + $0x40] sm:$0x7f]
          %v2489 = vld [vmem:[%s2419 + $0x48] sm:$0x7f]
          %s2490 = scalar_lea.vmem %s2430, 1 [#allocation3]
          %v2491 = vld [vmem:[%s2490] ss:$8 sm:$0xf]
          %v2492 = vld [vmem:[%s2490] ss:$8 sm:$0x10]
          %v2493 = vor.u32 %v2491, %v2492
          %v2495 = vlaneseq
          %v2496 = vshrl.u32 %v2495, 7
          %v2497 = vsub.s32 0, %v2496
          %v2498 = vrot.slane %v2493, %v2497
          %v2499 = vlaneseq
          %v2500 = vshrl.u32 %v2499, 7
          %v2501 = vsub.s32 1, %v2500
          %v2502 = vrot.slane %v2493, %v2501
          %v2503 = vlaneseq
          %v2504 = vshrl.u32 %v2503, 7
          %v2505 = vsub.s32 2, %v2504
          %v2506 = vrot.slane %v2493, %v2505
          %v2507 = vlaneseq
          %v2508 = vshrl.u32 %v2507, 7
          %v2509 = vsub.s32 3, %v2508
          %v2510 = vrot.slane %v2493, %v2509
          %v2511 = vlaneseq
          %v2512 = vshrl.u32 %v2511, 7
          %v2513 = vsub.s32 4, %v2512
          %v2514 = vrot.slane %v2493, %v2513
          %v2520 = vmul.f32 %v2480, %v2498
          %v2521 = vmul.f32 %v2481, %v2502
          %v2522 = vmul.f32 %v2482, %v2506
          %v2523 = vmul.f32 %v2483, %v2510
          %v2524 = vmul.f32 %v2484, %v2514
          %v2525 = vmul.f32 %v2485, %v2498
          %v2526 = vmul.f32 %v2486, %v2502
          %v2527 = vmul.f32 %v2487, %v2506
          %v2528 = vmul.f32 %v2488, %v2510
          %v2529 = vmul.f32 %v2489, %v2514
          %v2540 = vrot.slane %v2520, 1
          %v2541 = vrot.slane %v2525, 1
          %v2542 = vsel %vm1084, %v2540, %v2541
          %v2543 = vrot.slane %v2521, 1
          %v2544 = vrot.slane %v2526, 1
          %v2545 = vsel %vm1084, %v2543, %v2544
          %v2546 = vrot.slane %v2522, 1
          %v2547 = vrot.slane %v2527, 1
          %v2548 = vsel %vm1084, %v2546, %v2547
          %v2549 = vrot.slane %v2523, 1
          %v2550 = vrot.slane %v2528, 1
          %v2551 = vsel %vm1084, %v2549, %v2550
          %v2552 = vrot.slane %v2524, 1
          %v2553 = vrot.slane %v2529, 1
          %v2554 = vsel %vm1084, %v2552, %v2553
          %v2565 = vadd.f32 %v2470, %v2542
          %v2566 = vadd.f32 %v2471, %v2545
          %v2567 = vadd.f32 %v2472, %v2548
          %v2568 = vadd.f32 %v2473, %v2551
          %v2569 = vadd.f32 %v2474, %v2554
          %v2570 = vadd.f32 %v2475, %v2541
          %v2571 = vadd.f32 %v2476, %v2544
          %v2572 = vadd.f32 %v2477, %v2547
          %v2573 = vadd.f32 %v2478, %v2550
          %v2574 = vadd.f32 %v2479, %v2553
          %v2575 = vld [vmem:[%s2419] sm:$0xfc]
          %v2576 = vld [vmem:[%s2419 + $0x8] sm:$0xfc]
          %v2577 = vld [vmem:[%s2419 + $0x10] sm:$0xfc]
          %v2578 = vld [vmem:[%s2419 + $0x18] sm:$0xfc]
          %v2579 = vld [vmem:[%s2419 + $0x20] sm:$0xfc]
          %v2580 = vld [vmem:[%s2419 + $0x28] sm:$0xff]
          %v2581 = vld [vmem:[%s2419 + $0x30] sm:$0xff]
          %v2582 = vld [vmem:[%s2419 + $0x38] sm:$0xff]
          %v2583 = vld [vmem:[%s2419 + $0x40] sm:$0xff]
          %v2584 = vld [vmem:[%s2419 + $0x48] sm:$0xff]
          %s2585 = scalar_lea.vmem %s2430, 2 [#allocation3]
          %v2586 = vld [vmem:[%s2585] ss:$8 sm:$0xf]
          %v2587 = vld [vmem:[%s2585] ss:$8 sm:$0x10]
          %v2588 = vor.u32 %v2586, %v2587
          %v2590 = vlaneseq
          %v2591 = vshrl.u32 %v2590, 7
          %v2592 = vsub.s32 0, %v2591
          %v2593 = vrot.slane %v2588, %v2592
          %v2594 = vlaneseq
          %v2595 = vshrl.u32 %v2594, 7
          %v2596 = vsub.s32 1, %v2595
          %v2597 = vrot.slane %v2588, %v2596
          %v2598 = vlaneseq
          %v2599 = vshrl.u32 %v2598, 7
          %v2600 = vsub.s32 2, %v2599
          %v2601 = vrot.slane %v2588, %v2600
          %v2602 = vlaneseq
          %v2603 = vshrl.u32 %v2602, 7
          %v2604 = vsub.s32 3, %v2603
          %v2605 = vrot.slane %v2588, %v2604
          %v2606 = vlaneseq
          %v2607 = vshrl.u32 %v2606, 7
          %v2608 = vsub.s32 4, %v2607
          %v2609 = vrot.slane %v2588, %v2608
          %v2615 = vmul.f32 %v2575, %v2593
          %v2616 = vmul.f32 %v2576, %v2597
          %v2617 = vmul.f32 %v2577, %v2601
          %v2618 = vmul.f32 %v2578, %v2605
          %v2619 = vmul.f32 %v2579, %v2609
          %v2620 = vmul.f32 %v2580, %v2593
          %v2621 = vmul.f32 %v2581, %v2597
          %v2622 = vmul.f32 %v2582, %v2601
          %v2623 = vmul.f32 %v2583, %v2605
          %v2624 = vmul.f32 %v2584, %v2609
          %v2635 = vrot.slane %v2615, 2
          %v2636 = vrot.slane %v2620, 2
          %v2637 = vsel %vm1180, %v2635, %v2636
          %v2638 = vrot.slane %v2616, 2
          %v2639 = vrot.slane %v2621, 2
          %v2640 = vsel %vm1180, %v2638, %v2639
          %v2641 = vrot.slane %v2617, 2
          %v2642 = vrot.slane %v2622, 2
          %v2643 = vsel %vm1180, %v2641, %v2642
          %v2644 = vrot.slane %v2618, 2
          %v2645 = vrot.slane %v2623, 2
          %v2646 = vsel %vm1180, %v2644, %v2645
          %v2647 = vrot.slane %v2619, 2
          %v2648 = vrot.slane %v2624, 2
          %v2649 = vsel %vm1180, %v2647, %v2648
          %v2660 = vadd.f32 %v2565, %v2637
          %v2661 = vadd.f32 %v2566, %v2640
          %v2662 = vadd.f32 %v2567, %v2643
          %v2663 = vadd.f32 %v2568, %v2646
          %v2664 = vadd.f32 %v2569, %v2649
          %v2665 = vadd.f32 %v2570, %v2636
          %v2666 = vadd.f32 %v2571, %v2639
          %v2667 = vadd.f32 %v2572, %v2642
          %v2668 = vadd.f32 %v2573, %v2645
          %v2669 = vadd.f32 %v2574, %v2648
          %v2670 = vld [vmem:[%s2419] sm:$0xf8]
          %v2671 = vld [vmem:[%s2419 + $0x8] sm:$0xf8]
          %v2672 = vld [vmem:[%s2419 + $0x10] sm:$0xf8]
          %v2673 = vld [vmem:[%s2419 + $0x18] sm:$0xf8]
          %v2674 = vld [vmem:[%s2419 + $0x20] sm:$0xf8]
          %v2675 = vld [vmem:[%s2419 + $0x50] sm:$0x1]
          %v2676 = vld [vmem:[%s2419 + $0x58] sm:$0x1]
          %v2677 = vld [vmem:[%s2419 + $0x60] sm:$0x1]
          %v2678 = vld [vmem:[%s2419 + $0x68] sm:$0x1]
          %v2679 = vld [vmem:[%s2419 + $0x70] sm:$0x1]
          %s2680 = scalar_lea.vmem %s2430, 3 [#allocation3]
          %v2681 = vld [vmem:[%s2680] ss:$8 sm:$0xf]
          %v2682 = vld [vmem:[%s2680] ss:$8 sm:$0x10]
          %v2683 = vor.u32 %v2681, %v2682
          %v2685 = vlaneseq
          %v2686 = vshrl.u32 %v2685, 7
          %v2687 = vsub.s32 0, %v2686
          %v2688 = vrot.slane %v2683, %v2687
          %v2689 = vlaneseq
          %v2690 = vshrl.u32 %v2689, 7
          %v2691 = vsub.s32 1, %v2690
          %v2692 = vrot.slane %v2683, %v2691
          %v2693 = vlaneseq
          %v2694 = vshrl.u32 %v2693, 7
          %v2695 = vsub.s32 2, %v2694
          %v2696 = vrot.slane %v2683, %v2695
          %v2697 = vlaneseq
          %v2698 = vshrl.u32 %v2697, 7
          %v2699 = vsub.s32 3, %v2698
          %v2700 = vrot.slane %v2683, %v2699
          %v2701 = vlaneseq
          %v2702 = vshrl.u32 %v2701, 7
          %v2703 = vsub.s32 4, %v2702
          %v2704 = vrot.slane %v2683, %v2703
          %v2710 = vmul.f32 %v2670, %v2688
          %v2711 = vmul.f32 %v2671, %v2692
          %v2712 = vmul.f32 %v2672, %v2696
          %v2713 = vmul.f32 %v2673, %v2700
          %v2714 = vmul.f32 %v2674, %v2704
          %v2715 = vmul.f32 %v2580, %v2688
          %v2716 = vmul.f32 %v2581, %v2692
          %v2717 = vmul.f32 %v2582, %v2696
          %v2718 = vmul.f32 %v2583, %v2700
          %v2719 = vmul.f32 %v2584, %v2704
          %v2720 = vmul.f32 %v2675, %v2688
          %v2721 = vmul.f32 %v2676, %v2692
          %v2722 = vmul.f32 %v2677, %v2696
          %v2723 = vmul.f32 %v2678, %v2700
          %v2724 = vmul.f32 %v2679, %v2704
          %v2740 = vrot.slane %v2710, 3
          %v2741 = vrot.slane %v2715, 3
          %v2742 = vsel %vm1286, %v2740, %v2741
          %v2743 = vrot.slane %v2711, 3
          %v2744 = vrot.slane %v2716, 3
          %v2745 = vsel %vm1286, %v2743, %v2744
          %v2746 = vrot.slane %v2712, 3
          %v2747 = vrot.slane %v2717, 3
          %v2748 = vsel %vm1286, %v2746, %v2747
          %v2749 = vrot.slane %v2713, 3
          %v2750 = vrot.slane %v2718, 3
          %v2751 = vsel %vm1286, %v2749, %v2750
          %v2752 = vrot.slane %v2714, 3
          %v2753 = vrot.slane %v2719, 3
          %v2754 = vsel %vm1286, %v2752, %v2753
          %v2755 = vrot.slane %v2720, 3
          %v2756 = vsel %vm1286, %v2741, %v2755
          %v2757 = vrot.slane %v2721, 3
          %v2758 = vsel %vm1286, %v2744, %v2757
          %v2759 = vrot.slane %v2722, 3
          %v2760 = vsel %vm1286, %v2747, %v2759
          %v2761 = vrot.slane %v2723, 3
          %v2762 = vsel %vm1286, %v2750, %v2761
          %v2763 = vrot.slane %v2724, 3
          %v2764 = vsel %vm1286, %v2753, %v2763
          %v2775 = vadd.f32 %v2660, %v2742
          %v2776 = vadd.f32 %v2661, %v2745
          %v2777 = vadd.f32 %v2662, %v2748
          %v2778 = vadd.f32 %v2663, %v2751
          %v2779 = vadd.f32 %v2664, %v2754
          %v2780 = vadd.f32 %v2665, %v2756
          %v2781 = vadd.f32 %v2666, %v2758
          %v2782 = vadd.f32 %v2667, %v2760
          %v2783 = vadd.f32 %v2668, %v2762
          %v2784 = vadd.f32 %v2669, %v2764
          %v2785 = vld [vmem:[%s2419] sm:$0xf0]
          %v2786 = vld [vmem:[%s2419 + $0x8] sm:$0xf0]
          %v2787 = vld [vmem:[%s2419 + $0x10] sm:$0xf0]
          %v2788 = vld [vmem:[%s2419 + $0x18] sm:$0xf0]
          %v2789 = vld [vmem:[%s2419 + $0x20] sm:$0xf0]
          %v2790 = vld [vmem:[%s2419 + $0x50] sm:$0x3]
          %v2791 = vld [vmem:[%s2419 + $0x58] sm:$0x3]
          %v2792 = vld [vmem:[%s2419 + $0x60] sm:$0x3]
          %v2793 = vld [vmem:[%s2419 + $0x68] sm:$0x3]
          %v2794 = vld [vmem:[%s2419 + $0x70] sm:$0x3]
          %s2795 = scalar_lea.vmem %s2430, 4 [#allocation3]
          %v2796 = vld [vmem:[%s2795] ss:$8 sm:$0xf]
          %v2797 = vld [vmem:[%s2795] ss:$8 sm:$0x10]
          %v2798 = vor.u32 %v2796, %v2797
          %v2800 = vlaneseq
          %v2801 = vshrl.u32 %v2800, 7
          %v2802 = vsub.s32 0, %v2801
          %v2803 = vrot.slane %v2798, %v2802
          %v2804 = vlaneseq
          %v2805 = vshrl.u32 %v2804, 7
          %v2806 = vsub.s32 1, %v2805
          %v2807 = vrot.slane %v2798, %v2806
          %v2808 = vlaneseq
          %v2809 = vshrl.u32 %v2808, 7
          %v2810 = vsub.s32 2, %v2809
          %v2811 = vrot.slane %v2798, %v2810
          %v2812 = vlaneseq
          %v2813 = vshrl.u32 %v2812, 7
          %v2814 = vsub.s32 3, %v2813
          %v2815 = vrot.slane %v2798, %v2814
          %v2816 = vlaneseq
          %v2817 = vshrl.u32 %v2816, 7
          %v2818 = vsub.s32 4, %v2817
          %v2819 = vrot.slane %v2798, %v2818
          %v2825 = vmul.f32 %v2785, %v2803
          %v2826 = vmul.f32 %v2786, %v2807
          %v2827 = vmul.f32 %v2787, %v2811
          %v2828 = vmul.f32 %v2788, %v2815
          %v2829 = vmul.f32 %v2789, %v2819
          %v2830 = vmul.f32 %v2580, %v2803
          %v2831 = vmul.f32 %v2581, %v2807
          %v2832 = vmul.f32 %v2582, %v2811
          %v2833 = vmul.f32 %v2583, %v2815
          %v2834 = vmul.f32 %v2584, %v2819
          %v2835 = vmul.f32 %v2790, %v2803
          %v2836 = vmul.f32 %v2791, %v2807
          %v2837 = vmul.f32 %v2792, %v2811
          %v2838 = vmul.f32 %v2793, %v2815
          %v2839 = vmul.f32 %v2794, %v2819
          %v2855 = vrot.slane %v2825, 4
          %v2856 = vrot.slane %v2830, 4
          %v2857 = vsel %vm1402, %v2855, %v2856
          %v2858 = vrot.slane %v2826, 4
          %v2859 = vrot.slane %v2831, 4
          %v2860 = vsel %vm1402, %v2858, %v2859
          %v2861 = vrot.slane %v2827, 4
          %v2862 = vrot.slane %v2832, 4
          %v2863 = vsel %vm1402, %v2861, %v2862
          %v2864 = vrot.slane %v2828, 4
          %v2865 = vrot.slane %v2833, 4
          %v2866 = vsel %vm1402, %v2864, %v2865
          %v2867 = vrot.slane %v2829, 4
          %v2868 = vrot.slane %v2834, 4
          %v2869 = vsel %vm1402, %v2867, %v2868
          %v2870 = vrot.slane %v2835, 4
          %v2871 = vsel %vm1402, %v2856, %v2870
          %v2872 = vrot.slane %v2836, 4
          %v2873 = vsel %vm1402, %v2859, %v2872
          %v2874 = vrot.slane %v2837, 4
          %v2875 = vsel %vm1402, %v2862, %v2874
          %v2876 = vrot.slane %v2838, 4
          %v2877 = vsel %vm1402, %v2865, %v2876
          %v2878 = vrot.slane %v2839, 4
          %v2879 = vsel %vm1402, %v2868, %v2878
          %v2890 = vadd.f32 %v2775, %v2857
          %v2891 = vadd.f32 %v2776, %v2860
          %v2892 = vadd.f32 %v2777, %v2863
          %v2893 = vadd.f32 %v2778, %v2866
          %v2894 = vadd.f32 %v2779, %v2869
          %v2895 = vadd.f32 %v2780, %v2871
          %v2896 = vadd.f32 %v2781, %v2873
          %v2897 = vadd.f32 %v2782, %v2875
          %v2898 = vadd.f32 %v2783, %v2877
          %v2899 = vadd.f32 %v2784, %v2879
          %s2900 = sadd.s32 %s957, 4
          %s2901 = smul.u32 %s2900, 15
          %s2902 = smul.addr %s2901, 8
          %s2903 = scalar_lea.vmem %s886, %s2902 [#allocation2]
          %v2904 = vld [vmem:[%s2903] sm:$0xff]
          %v2905 = vld [vmem:[%s2903 + $0x8] sm:$0xff]
          %v2906 = vld [vmem:[%s2903 + $0x10] sm:$0xff]
          %v2907 = vld [vmem:[%s2903 + $0x18] sm:$0xff]
          %v2908 = vld [vmem:[%s2903 + $0x20] sm:$0xff]
          %v2909 = vld [vmem:[%s2903 + $0x28] sm:$0x3f]
          %v2910 = vld [vmem:[%s2903 + $0x30] sm:$0x3f]
          %v2911 = vld [vmem:[%s2903 + $0x38] sm:$0x3f]
          %v2912 = vld [vmem:[%s2903 + $0x40] sm:$0x3f]
          %v2913 = vld [vmem:[%s2903 + $0x48] sm:$0x3f]
          %s2914 = scalar_lea.vmem %s893, 160 [#allocation3]
          %v2915 = vld [vmem:[%s2914] ss:$8 sm:$0xf]
          %v2916 = vld [vmem:[%s2914] ss:$8 sm:$0x10]
          %v2917 = vor.u32 %v2915, %v2916
          %v2919 = vlaneseq
          %v2920 = vshrl.u32 %v2919, 7
          %v2921 = vsub.s32 0, %v2920
          %v2922 = vrot.slane %v2917, %v2921
          %v2923 = vlaneseq
          %v2924 = vshrl.u32 %v2923, 7
          %v2925 = vsub.s32 1, %v2924
          %v2926 = vrot.slane %v2917, %v2925
          %v2927 = vlaneseq
          %v2928 = vshrl.u32 %v2927, 7
          %v2929 = vsub.s32 2, %v2928
          %v2930 = vrot.slane %v2917, %v2929
          %v2931 = vlaneseq
          %v2932 = vshrl.u32 %v2931, 7
          %v2933 = vsub.s32 3, %v2932
          %v2934 = vrot.slane %v2917, %v2933
          %v2935 = vlaneseq
          %v2936 = vshrl.u32 %v2935, 7
          %v2937 = vsub.s32 4, %v2936
          %v2938 = vrot.slane %v2917, %v2937
          %v2944 = vmul.f32 %v2904, %v2922
          %v2945 = vmul.f32 %v2905, %v2926
          %v2946 = vmul.f32 %v2906, %v2930
          %v2947 = vmul.f32 %v2907, %v2934
          %v2948 = vmul.f32 %v2908, %v2938
          %v2949 = vmul.f32 %v2909, %v2922
          %v2950 = vmul.f32 %v2910, %v2926
          %v2951 = vmul.f32 %v2911, %v2930
          %v2952 = vmul.f32 %v2912, %v2934
          %v2953 = vmul.f32 %v2913, %v2938
          %v2954 = vadd.f32 %v2890, %v2944
          %v2955 = vadd.f32 %v2891, %v2945
          %v2956 = vadd.f32 %v2892, %v2946
          %v2957 = vadd.f32 %v2893, %v2947
          %v2958 = vadd.f32 %v2894, %v2948
          %v2959 = vadd.f32 %v2895, %v2949
          %v2960 = vadd.f32 %v2896, %v2950
          %v2961 = vadd.f32 %v2897, %v2951
          %v2962 = vadd.f32 %v2898, %v2952
          %v2963 = vadd.f32 %v2899, %v2953
          %v2964 = vld [vmem:[%s2903] sm:$0xfe]
          %v2965 = vld [vmem:[%s2903 + $0x8] sm:$0xfe]
          %v2966 = vld [vmem:[%s2903 + $0x10] sm:$0xfe]
          %v2967 = vld [vmem:[%s2903 + $0x18] sm:$0xfe]
          %v2968 = vld [vmem:[%s2903 + $0x20] sm:$0xfe]
          %v2969 = vld [vmem:[%s2903 + $0x28] sm:$0x7f]
          %v2970 = vld [vmem:[%s2903 + $0x30] sm:$0x7f]
          %v2971 = vld [vmem:[%s2903 + $0x38] sm:$0x7f]
          %v2972 = vld [vmem:[%s2903 + $0x40] sm:$0x7f]
          %v2973 = vld [vmem:[%s2903 + $0x48] sm:$0x7f]
          %s2974 = scalar_lea.vmem %s2914, 1 [#allocation3]
          %v2975 = vld [vmem:[%s2974] ss:$8 sm:$0xf]
          %v2976 = vld [vmem:[%s2974] ss:$8 sm:$0x10]
          %v2977 = vor.u32 %v2975, %v2976
          %v2979 = vlaneseq
          %v2980 = vshrl.u32 %v2979, 7
          %v2981 = vsub.s32 0, %v2980
          %v2982 = vrot.slane %v2977, %v2981
          %v2983 = vlaneseq
          %v2984 = vshrl.u32 %v2983, 7
          %v2985 = vsub.s32 1, %v2984
          %v2986 = vrot.slane %v2977, %v2985
          %v2987 = vlaneseq
          %v2988 = vshrl.u32 %v2987, 7
          %v2989 = vsub.s32 2, %v2988
          %v2990 = vrot.slane %v2977, %v2989
          %v2991 = vlaneseq
          %v2992 = vshrl.u32 %v2991, 7
          %v2993 = vsub.s32 3, %v2992
          %v2994 = vrot.slane %v2977, %v2993
          %v2995 = vlaneseq
          %v2996 = vshrl.u32 %v2995, 7
          %v2997 = vsub.s32 4, %v2996
          %v2998 = vrot.slane %v2977, %v2997
          %v3004 = vmul.f32 %v2964, %v2982
          %v3005 = vmul.f32 %v2965, %v2986
          %v3006 = vmul.f32 %v2966, %v2990
          %v3007 = vmul.f32 %v2967, %v2994
          %v3008 = vmul.f32 %v2968, %v2998
          %v3009 = vmul.f32 %v2969, %v2982
          %v3010 = vmul.f32 %v2970, %v2986
          %v3011 = vmul.f32 %v2971, %v2990
          %v3012 = vmul.f32 %v2972, %v2994
          %v3013 = vmul.f32 %v2973, %v2998
          %v3024 = vrot.slane %v3004, 1
          %v3025 = vrot.slane %v3009, 1
          %v3026 = vsel %vm1084, %v3024, %v3025
          %v3027 = vrot.slane %v3005, 1
          %v3028 = vrot.slane %v3010, 1
          %v3029 = vsel %vm1084, %v3027, %v3028
          %v3030 = vrot.slane %v3006, 1
          %v3031 = vrot.slane %v3011, 1
          %v3032 = vsel %vm1084, %v3030, %v3031
          %v3033 = vrot.slane %v3007, 1
          %v3034 = vrot.slane %v3012, 1
          %v3035 = vsel %vm1084, %v3033, %v3034
          %v3036 = vrot.slane %v3008, 1
          %v3037 = vrot.slane %v3013, 1
          %v3038 = vsel %vm1084, %v3036, %v3037
          %v3049 = vadd.f32 %v2954, %v3026
          %v3050 = vadd.f32 %v2955, %v3029
          %v3051 = vadd.f32 %v2956, %v3032
          %v3052 = vadd.f32 %v2957, %v3035
          %v3053 = vadd.f32 %v2958, %v3038
          %v3054 = vadd.f32 %v2959, %v3025
          %v3055 = vadd.f32 %v2960, %v3028
          %v3056 = vadd.f32 %v2961, %v3031
          %v3057 = vadd.f32 %v2962, %v3034
          %v3058 = vadd.f32 %v2963, %v3037
          %v3059 = vld [vmem:[%s2903] sm:$0xfc]
          %v3060 = vld [vmem:[%s2903 + $0x8] sm:$0xfc]
          %v3061 = vld [vmem:[%s2903 + $0x10] sm:$0xfc]
          %v3062 = vld [vmem:[%s2903 + $0x18] sm:$0xfc]
          %v3063 = vld [vmem:[%s2903 + $0x20] sm:$0xfc]
          %v3064 = vld [vmem:[%s2903 + $0x28] sm:$0xff]
          %v3065 = vld [vmem:[%s2903 + $0x30] sm:$0xff]
          %v3066 = vld [vmem:[%s2903 + $0x38] sm:$0xff]
          %v3067 = vld [vmem:[%s2903 + $0x40] sm:$0xff]
          %v3068 = vld [vmem:[%s2903 + $0x48] sm:$0xff]
          %s3069 = scalar_lea.vmem %s2914, 2 [#allocation3]
          %v3070 = vld [vmem:[%s3069] ss:$8 sm:$0xf]
          %v3071 = vld [vmem:[%s3069] ss:$8 sm:$0x10]
          %v3072 = vor.u32 %v3070, %v3071
          %v3074 = vlaneseq
          %v3075 = vshrl.u32 %v3074, 7
          %v3076 = vsub.s32 0, %v3075
          %v3077 = vrot.slane %v3072, %v3076
          %v3078 = vlaneseq
          %v3079 = vshrl.u32 %v3078, 7
          %v3080 = vsub.s32 1, %v3079
          %v3081 = vrot.slane %v3072, %v3080
          %v3082 = vlaneseq
          %v3083 = vshrl.u32 %v3082, 7
          %v3084 = vsub.s32 2, %v3083
          %v3085 = vrot.slane %v3072, %v3084
          %v3086 = vlaneseq
          %v3087 = vshrl.u32 %v3086, 7
          %v3088 = vsub.s32 3, %v3087
          %v3089 = vrot.slane %v3072, %v3088
          %v3090 = vlaneseq
          %v3091 = vshrl.u32 %v3090, 7
          %v3092 = vsub.s32 4, %v3091
          %v3093 = vrot.slane %v3072, %v3092
          %v3099 = vmul.f32 %v3059, %v3077
          %v3100 = vmul.f32 %v3060, %v3081
          %v3101 = vmul.f32 %v3061, %v3085
          %v3102 = vmul.f32 %v3062, %v3089
          %v3103 = vmul.f32 %v3063, %v3093
          %v3104 = vmul.f32 %v3064, %v3077
          %v3105 = vmul.f32 %v3065, %v3081
          %v3106 = vmul.f32 %v3066, %v3085
          %v3107 = vmul.f32 %v3067, %v3089
          %v3108 = vmul.f32 %v3068, %v3093
          %v3119 = vrot.slane %v3099, 2
          %v3120 = vrot.slane %v3104, 2
          %v3121 = vsel %vm1180, %v3119, %v3120
          %v3122 = vrot.slane %v3100, 2
          %v3123 = vrot.slane %v3105, 2
          %v3124 = vsel %vm1180, %v3122, %v3123
          %v3125 = vrot.slane %v3101, 2
          %v3126 = vrot.slane %v3106, 2
          %v3127 = vsel %vm1180, %v3125, %v3126
          %v3128 = vrot.slane %v3102, 2
          %v3129 = vrot.slane %v3107, 2
          %v3130 = vsel %vm1180, %v3128, %v3129
          %v3131 = vrot.slane %v3103, 2
          %v3132 = vrot.slane %v3108, 2
          %v3133 = vsel %vm1180, %v3131, %v3132
          %v3144 = vadd.f32 %v3049, %v3121
          %v3145 = vadd.f32 %v3050, %v3124
          %v3146 = vadd.f32 %v3051, %v3127
          %v3147 = vadd.f32 %v3052, %v3130
          %v3148 = vadd.f32 %v3053, %v3133
          %v3149 = vadd.f32 %v3054, %v3120
          %v3150 = vadd.f32 %v3055, %v3123
          %v3151 = vadd.f32 %v3056, %v3126
          %v3152 = vadd.f32 %v3057, %v3129
          %v3153 = vadd.f32 %v3058, %v3132
          %v3154 = vld [vmem:[%s2903] sm:$0xf8]
          %v3155 = vld [vmem:[%s2903 + $0x8] sm:$0xf8]
          %v3156 = vld [vmem:[%s2903 + $0x10] sm:$0xf8]
          %v3157 = vld [vmem:[%s2903 + $0x18] sm:$0xf8]
          %v3158 = vld [vmem:[%s2903 + $0x20] sm:$0xf8]
          %v3159 = vld [vmem:[%s2903 + $0x50] sm:$0x1]
          %v3160 = vld [vmem:[%s2903 + $0x58] sm:$0x1]
          %v3161 = vld [vmem:[%s2903 + $0x60] sm:$0x1]
          %v3162 = vld [vmem:[%s2903 + $0x68] sm:$0x1]
          %v3163 = vld [vmem:[%s2903 + $0x70] sm:$0x1]
          %s3164 = scalar_lea.vmem %s2914, 3 [#allocation3]
          %v3165 = vld [vmem:[%s3164] ss:$8 sm:$0xf]
          %v3166 = vld [vmem:[%s3164] ss:$8 sm:$0x10]
          %v3167 = vor.u32 %v3165, %v3166
          %v3169 = vlaneseq
          %v3170 = vshrl.u32 %v3169, 7
          %v3171 = vsub.s32 0, %v3170
          %v3172 = vrot.slane %v3167, %v3171
          %v3173 = vlaneseq
          %v3174 = vshrl.u32 %v3173, 7
          %v3175 = vsub.s32 1, %v3174
          %v3176 = vrot.slane %v3167, %v3175
          %v3177 = vlaneseq
          %v3178 = vshrl.u32 %v3177, 7
          %v3179 = vsub.s32 2, %v3178
          %v3180 = vrot.slane %v3167, %v3179
          %v3181 = vlaneseq
          %v3182 = vshrl.u32 %v3181, 7
          %v3183 = vsub.s32 3, %v3182
          %v3184 = vrot.slane %v3167, %v3183
          %v3185 = vlaneseq
          %v3186 = vshrl.u32 %v3185, 7
          %v3187 = vsub.s32 4, %v3186
          %v3188 = vrot.slane %v3167, %v3187
          %v3194 = vmul.f32 %v3154, %v3172
          %v3195 = vmul.f32 %v3155, %v3176
          %v3196 = vmul.f32 %v3156, %v3180
          %v3197 = vmul.f32 %v3157, %v3184
          %v3198 = vmul.f32 %v3158, %v3188
          %v3199 = vmul.f32 %v3064, %v3172
          %v3200 = vmul.f32 %v3065, %v3176
          %v3201 = vmul.f32 %v3066, %v3180
          %v3202 = vmul.f32 %v3067, %v3184
          %v3203 = vmul.f32 %v3068, %v3188
          %v3204 = vmul.f32 %v3159, %v3172
          %v3205 = vmul.f32 %v3160, %v3176
          %v3206 = vmul.f32 %v3161, %v3180
          %v3207 = vmul.f32 %v3162, %v3184
          %v3208 = vmul.f32 %v3163, %v3188
          %v3224 = vrot.slane %v3194, 3
          %v3225 = vrot.slane %v3199, 3
          %v3226 = vsel %vm1286, %v3224, %v3225
          %v3227 = vrot.slane %v3195, 3
          %v3228 = vrot.slane %v3200, 3
          %v3229 = vsel %vm1286, %v3227, %v3228
          %v3230 = vrot.slane %v3196, 3
          %v3231 = vrot.slane %v3201, 3
          %v3232 = vsel %vm1286, %v3230, %v3231
          %v3233 = vrot.slane %v3197, 3
          %v3234 = vrot.slane %v3202, 3
          %v3235 = vsel %vm1286, %v3233, %v3234
          %v3236 = vrot.slane %v3198, 3
          %v3237 = vrot.slane %v3203, 3
          %v3238 = vsel %vm1286, %v3236, %v3237
          %v3239 = vrot.slane %v3204, 3
          %v3240 = vsel %vm1286, %v3225, %v3239
          %v3241 = vrot.slane %v3205, 3
          %v3242 = vsel %vm1286, %v3228, %v3241
          %v3243 = vrot.slane %v3206, 3
          %v3244 = vsel %vm1286, %v3231, %v3243
          %v3245 = vrot.slane %v3207, 3
          %v3246 = vsel %vm1286, %v3234, %v3245
          %v3247 = vrot.slane %v3208, 3
          %v3248 = vsel %vm1286, %v3237, %v3247
          %v3259 = vadd.f32 %v3144, %v3226
          %v3260 = vadd.f32 %v3145, %v3229
          %v3261 = vadd.f32 %v3146, %v3232
          %v3262 = vadd.f32 %v3147, %v3235
          %v3263 = vadd.f32 %v3148, %v3238
          %v3264 = vadd.f32 %v3149, %v3240
          %v3265 = vadd.f32 %v3150, %v3242
          %v3266 = vadd.f32 %v3151, %v3244
          %v3267 = vadd.f32 %v3152, %v3246
          %v3268 = vadd.f32 %v3153, %v3248
          %v3269 = vld [vmem:[%s2903] sm:$0xf0]
          %v3270 = vld [vmem:[%s2903 + $0x8] sm:$0xf0]
          %v3271 = vld [vmem:[%s2903 + $0x10] sm:$0xf0]
          %v3272 = vld [vmem:[%s2903 + $0x18] sm:$0xf0]
          %v3273 = vld [vmem:[%s2903 + $0x20] sm:$0xf0]
          %v3274 = vld [vmem:[%s2903 + $0x50] sm:$0x3]
          %v3275 = vld [vmem:[%s2903 + $0x58] sm:$0x3]
          %v3276 = vld [vmem:[%s2903 + $0x60] sm:$0x3]
          %v3277 = vld [vmem:[%s2903 + $0x68] sm:$0x3]
          %v3278 = vld [vmem:[%s2903 + $0x70] sm:$0x3]
          %s3279 = scalar_lea.vmem %s2914, 4 [#allocation3]
          %v3280 = vld [vmem:[%s3279] ss:$8 sm:$0xf]
          %v3281 = vld [vmem:[%s3279] ss:$8 sm:$0x10]
          %v3282 = vor.u32 %v3280, %v3281
          %v3284 = vlaneseq
          %v3285 = vshrl.u32 %v3284, 7
          %v3286 = vsub.s32 0, %v3285
          %v3287 = vrot.slane %v3282, %v3286
          %v3288 = vlaneseq
          %v3289 = vshrl.u32 %v3288, 7
          %v3290 = vsub.s32 1, %v3289
          %v3291 = vrot.slane %v3282, %v3290
          %v3292 = vlaneseq
          %v3293 = vshrl.u32 %v3292, 7
          %v3294 = vsub.s32 2, %v3293
          %v3295 = vrot.slane %v3282, %v3294
          %v3296 = vlaneseq
          %v3297 = vshrl.u32 %v3296, 7
          %v3298 = vsub.s32 3, %v3297
          %v3299 = vrot.slane %v3282, %v3298
          %v3300 = vlaneseq
          %v3301 = vshrl.u32 %v3300, 7
          %v3302 = vsub.s32 4, %v3301
          %v3303 = vrot.slane %v3282, %v3302
          %v3309 = vmul.f32 %v3269, %v3287
          %v3310 = vmul.f32 %v3270, %v3291
          %v3311 = vmul.f32 %v3271, %v3295
          %v3312 = vmul.f32 %v3272, %v3299
          %v3313 = vmul.f32 %v3273, %v3303
          %v3314 = vmul.f32 %v3064, %v3287
          %v3315 = vmul.f32 %v3065, %v3291
          %v3316 = vmul.f32 %v3066, %v3295
          %v3317 = vmul.f32 %v3067, %v3299
          %v3318 = vmul.f32 %v3068, %v3303
          %v3319 = vmul.f32 %v3274, %v3287
          %v3320 = vmul.f32 %v3275, %v3291
          %v3321 = vmul.f32 %v3276, %v3295
          %v3322 = vmul.f32 %v3277, %v3299
          %v3323 = vmul.f32 %v3278, %v3303
          %v3339 = vrot.slane %v3309, 4
          %v3340 = vrot.slane %v3314, 4
          %v3341 = vsel %vm1402, %v3339, %v3340
          %v3342 = vrot.slane %v3310, 4
          %v3343 = vrot.slane %v3315, 4
          %v3344 = vsel %vm1402, %v3342, %v3343
          %v3345 = vrot.slane %v3311, 4
          %v3346 = vrot.slane %v3316, 4
          %v3347 = vsel %vm1402, %v3345, %v3346
          %v3348 = vrot.slane %v3312, 4
          %v3349 = vrot.slane %v3317, 4
          %v3350 = vsel %vm1402, %v3348, %v3349
          %v3351 = vrot.slane %v3313, 4
          %v3352 = vrot.slane %v3318, 4
          %v3353 = vsel %vm1402, %v3351, %v3352
          %v3354 = vrot.slane %v3319, 4
          %v3355 = vsel %vm1402, %v3340, %v3354
          %v3356 = vrot.slane %v3320, 4
          %v3357 = vsel %vm1402, %v3343, %v3356
          %v3358 = vrot.slane %v3321, 4
          %v3359 = vsel %vm1402, %v3346, %v3358
          %v3360 = vrot.slane %v3322, 4
          %v3361 = vsel %vm1402, %v3349, %v3360
          %v3362 = vrot.slane %v3323, 4
          %v3363 = vsel %vm1402, %v3352, %v3362
          %v3374 = vadd.f32 %v3259, %v3341
          %v3375 = vadd.f32 %v3260, %v3344
          %v3376 = vadd.f32 %v3261, %v3347
          %v3377 = vadd.f32 %v3262, %v3350
          %v3378 = vadd.f32 %v3263, %v3353
          %v3379 = vadd.f32 %v3264, %v3355
          %v3380 = vadd.f32 %v3265, %v3357
          %v3381 = vadd.f32 %v3266, %v3359
          %v3382 = vadd.f32 %v3267, %v3361
          %v3383 = vadd.f32 %v3268, %v3363
          %s3384 = smul.u32 %s957, 10
          %s3385 = smul.addr %s3384, 8
          %s3386 = scalar_lea.vmem %s926, %s3385 [#allocation4]
          %3387 = vst [vmem:[%s3386] sm:$0xff] %v3374
          %3388 = vst [vmem:[%s3386 + $0x8] sm:$0xff] %v3375
          %3389 = vst [vmem:[%s3386 + $0x10] sm:$0xff] %v3376
          %3390 = vst [vmem:[%s3386 + $0x18] sm:$0xff] %v3377
          %3391 = vst [vmem:[%s3386 + $0x20] sm:$0xff] %v3378
          %3392 = vst [vmem:[%s3386 + $0x28] sm:$0x3f] %v3379
          %3393 = vst [vmem:[%s3386 + $0x30] sm:$0x3f] %v3380
          %3394 = vst [vmem:[%s3386 + $0x38] sm:$0x3f] %v3381
          %3395 = vst [vmem:[%s3386 + $0x40] sm:$0x3f] %v3382
          %3396 = vst [vmem:[%s3386 + $0x48] sm:$0x3f] %v3383
          %v3397 = vsel %vm1180, %v3379, 0.0
          %v3398 = vadd.f32 %v3374, %v3397
          %v3399 = vrot.slane %v3398, 4
          %v3400 = vadd.f32 %v3398, %v3399
          %v3401 = vrot.slane %v3400, 2
          %v3402 = vadd.f32 %v3400, %v3401
          %v3403 = vrot.slane %v3402, 1
          %v3404 = vadd.f32 %v3402, %v3403
          %v3405 = vsel %vm1180, %v3380, 0.0
          %v3406 = vadd.f32 %v3375, %v3405
          %v3407 = vrot.slane %v3406, 4
          %v3408 = vadd.f32 %v3406, %v3407
          %v3409 = vrot.slane %v3408, 2
          %v3410 = vadd.f32 %v3408, %v3409
          %v3411 = vrot.slane %v3410, 1
          %v3412 = vadd.f32 %v3410, %v3411
          %v3413 = vsel %vm1180, %v3381, 0.0
          %v3414 = vadd.f32 %v3376, %v3413
          %v3415 = vrot.slane %v3414, 4
          %v3416 = vadd.f32 %v3414, %v3415
          %v3417 = vrot.slane %v3416, 2
          %v3418 = vadd.f32 %v3416, %v3417
          %v3419 = vrot.slane %v3418, 1
          %v3420 = vadd.f32 %v3418, %v3419
          %v3421 = vsel %vm1180, %v3382, 0.0
          %v3422 = vadd.f32 %v3377, %v3421
          %v3423 = vrot.slane %v3422, 4
          %v3424 = vadd.f32 %v3422, %v3423
          %v3425 = vrot.slane %v3424, 2
          %v3426 = vadd.f32 %v3424, %v3425
          %v3427 = vrot.slane %v3426, 1
          %v3428 = vadd.f32 %v3426, %v3427
          %v3429 = vsel %vm1180, %v3383, 0.0
          %v3430 = vadd.f32 %v3378, %v3429
          %v3431 = vrot.slane %v3430, 4
          %v3432 = vadd.f32 %v3430, %v3431
          %v3433 = vrot.slane %v3432, 2
          %v3434 = vadd.f32 %v3432, %v3433
          %v3435 = vrot.slane %v3434, 1
          %v3436 = vadd.f32 %v3434, %v3435
          %v3437 = vadd.f32 %v962, %v3404
          %v3438 = vadd.f32 %v963, %v3412
          %v3439 = vadd.f32 %v964, %v3420
          %v3440 = vadd.f32 %v965, %v3428
          %v3441 = vadd.f32 %v966, %v3436
          %v3442 = vmul.f32 %v3374, %v3374
          %v3443 = vmul.f32 %v3375, %v3375
          %v3444 = vmul.f32 %v3376, %v3376
          %v3445 = vmul.f32 %v3377, %v3377
          %v3446 = vmul.f32 %v3378, %v3378
          %v3447 = vmul.f32 %v3379, %v3379
          %v3448 = vmul.f32 %v3380, %v3380
          %v3449 = vmul.f32 %v3381, %v3381
          %v3450 = vmul.f32 %v3382, %v3382
          %v3451 = vmul.f32 %v3383, %v3383
          %v3452 = vsel %vm1180, %v3447, 0.0
          %v3453 = vadd.f32 %v3442, %v3452
          %v3454 = vrot.slane %v3453, 4
          %v3455 = vadd.f32 %v3453, %v3454
          %v3456 = vrot.slane %v3455, 2
          %v3457 = vadd.f32 %v3455, %v3456
          %v3458 = vrot.slane %v3457, 1
          %v3459 = vadd.f32 %v3457, %v3458
          %v3460 = vsel %vm1180, %v3448, 0.0
          %v3461 = vadd.f32 %v3443, %v3460
          %v3462 = vrot.slane %v3461, 4
          %v3463 = vadd.f32 %v3461, %v3462
          %v3464 = vrot.slane %v3463, 2
          %v3465 = vadd.f32 %v3463, %v3464
          %v3466 = vrot.slane %v3465, 1
          %v3467 = vadd.f32 %v3465, %v3466
          %v3468 = vsel %vm1180, %v3449, 0.0
          %v3469 = vadd.f32 %v3444, %v3468
          %v3470 = vrot.slane %v3469, 4
          %v3471 = vadd.f32 %v3469, %v3470
          %v3472 = vrot.slane %v3471, 2
          %v3473 = vadd.f32 %v3471, %v3472
          %v3474 = vrot.slane %v3473, 1
          %v3475 = vadd.f32 %v3473, %v3474
          %v3476 = vsel %vm1180, %v3450, 0.0
          %v3477 = vadd.f32 %v3445, %v3476
          %v3478 = vrot.slane %v3477, 4
          %v3479 = vadd.f32 %v3477, %v3478
          %v3480 = vrot.slane %v3479, 2
          %v3481 = vadd.f32 %v3479, %v3480
          %v3482 = vrot.slane %v3481, 1
          %v3483 = vadd.f32 %v3481, %v3482
          %v3484 = vsel %vm1180, %v3451, 0.0
          %v3485 = vadd.f32 %v3446, %v3484
          %v3486 = vrot.slane %v3485, 4
          %v3487 = vadd.f32 %v3485, %v3486
          %v3488 = vrot.slane %v3487, 2
          %v3489 = vadd.f32 %v3487, %v3488
          %v3490 = vrot.slane %v3489, 1
          %v3491 = vadd.f32 %v3489, %v3490
          %v3492 = vadd.f32 %v967, %v3459
          %v3493 = vadd.f32 %v968, %v3467
          %v3494 = vadd.f32 %v969, %v3475
          %v3495 = vadd.f32 %v970, %v3483
          %v3496 = vadd.f32 %v971, %v3491
        $region87: #{tpu_custom_call.1} parent=73 // loop_footer
          %s961 = sadd.s32 1, %s957
        $region88: #{tpu_custom_call.1} parent=73 // loop_footer_branch
          %956 = sbr.rel target = $region84
        $region89: #{tpu_custom_call.1} parent=73 // loop_exit
          _
        %v3497 = vmul.f32 %v962, 0.0051020407
        %v3498 = vmul.f32 %v963, 0.0051020407
        %v3499 = vmul.f32 %v964, 0.0051020407
        %v3500 = vmul.f32 %v965, 0.0051020407
        %v3501 = vmul.f32 %v966, 0.0051020407
        %v3502 = vmul.f32 %v967, 0.0051020407
        %v3503 = vmul.f32 %v968, 0.0051020407
        %v3504 = vmul.f32 %v969, 0.0051020407
        %v3505 = vmul.f32 %v970, 0.0051020407
        %v3506 = vmul.f32 %v971, 0.0051020407
        %v3507 = vmul.f32 %v3497, %v3497
        %v3508 = vmul.f32 %v3498, %v3498
        %v3509 = vmul.f32 %v3499, %v3499
        %v3510 = vmul.f32 %v3500, %v3500
        %v3511 = vmul.f32 %v3501, %v3501
        %v3512 = vsub.f32 %v3502, %v3507
        %v3513 = vsub.f32 %v3503, %v3508
        %v3514 = vsub.f32 %v3504, %v3509
        %v3515 = vsub.f32 %v3505, %v3510
        %v3516 = vsub.f32 %v3506, %v3511
        %v3517 = vmax.f32 %v3512, 0.0
        %v3518 = vmax.f32 %v3513, 0.0
        %v3519 = vmax.f32 %v3514, 0.0
        %v3520 = vmax.f32 %v3515, 0.0
        %v3521 = vmax.f32 %v3516, 0.0
        %v3522 = vadd.f32 %v3517, 1e-05
        %v3523 = vadd.f32 %v3518, 1e-05
        %v3524 = vadd.f32 %v3519, 1e-05
        %v3525 = vadd.f32 %v3520, 1e-05
        %v3526 = vadd.f32 %v3521, 1e-05
        %v3527 = vrsqrt.pop %v3522
        %v3528 = vrsqrt.pop %v3523
        %v3529 = vrsqrt.pop %v3524
        %v3530 = vrsqrt.pop %v3525
        %v3531 = vrsqrt.pop %v3526
        %v3532 = vld [vmem:[%s946] sm:$0x1f]
        %v3538 = vcombine.low %v3527, %v3528
        %v3539 = vcombine.low %v3529, %v3530
        %v3541 = vunpack.c.l.s4 1966171168
        %v3542 = vunpack.c.0.s8 %v3541
        %v3543 = vlaneseq
        %v3544 = vshrl.u32 %v3543, 7
        %v3545 = vsub.s32 %v3542, %v3544
        %v3546 = vrot.slane %v3538, %v3545
        %v3548 = vunpack.c.l.s4 1966171168
        %v3549 = vunpack.c.0.s8 %v3548
        %v3550 = vlaneseq
        %v3551 = vshrl.u32 %v3550, 7
        %v3552 = vsub.s32 %v3549, %v3551
        %v3553 = vrot.slane %v3539, %v3552
        %v3555 = vunpack.c.l.s4 1966171168
        %v3556 = vunpack.c.0.s8 %v3555
        %v3557 = vlaneseq
        %v3558 = vshrl.u32 %v3557, 7
        %v3559 = vsub.s32 %v3556, %v3558
        %v3560 = vrot.slane %v3531, %v3559
        %v3561 = vcombine.low %v3546, %v3553
        %v3563 = vunpack.c.l.s4 1966171168
        %v3564 = vunpack.c.0.s8 %v3563
        %v3565 = vlaneseq
        %v3566 = vshrl.u32 %v3565, 7
        %v3567 = vsub.s32 %v3564, %v3566
        %v3568 = vrot.slane %v3561, %v3567
        %v3570 = vunpack.c.l.s4 1966171168
        %v3571 = vunpack.c.0.s8 %v3570
        %v3572 = vlaneseq
        %v3573 = vshrl.u32 %v3572, 7
        %v3574 = vsub.s32 %v3571, %v3573
        %v3575 = vrot.slane %v3560, %v3574
        %v3576 = vcombine.low %v3568, %v3575
        %v3578 = vmul.f32 %v3532, %v3576
        %v3579 = vld [vmem:[%s951] sm:$0x1f]
        %v3581 = vlaneseq
        %v3582 = vshrl.u32 %v3581, 7
        %v3583 = vsub.s32 0, %v3582
        %v3584 = vrot.slane %v3578, %v3583
        %v3585 = vlaneseq
        %v3586 = vshrl.u32 %v3585, 7
        %v3587 = vsub.s32 1, %v3586
        %v3588 = vrot.slane %v3578, %v3587
        %v3589 = vlaneseq
        %v3590 = vshrl.u32 %v3589, 7
        %v3591 = vsub.s32 2, %v3590
        %v3592 = vrot.slane %v3578, %v3591
        %v3593 = vlaneseq
        %v3594 = vshrl.u32 %v3593, 7
        %v3595 = vsub.s32 3, %v3594
        %v3596 = vrot.slane %v3578, %v3595
        %v3597 = vlaneseq
        %v3598 = vshrl.u32 %v3597, 7
        %v3599 = vsub.s32 4, %v3598
        %v3600 = vrot.slane %v3578, %v3599
        %v3606 = vmul.f32 %v3497, %v3584
        %v3607 = vmul.f32 %v3498, %v3588
        %v3608 = vmul.f32 %v3499, %v3592
        %v3609 = vmul.f32 %v3500, %v3596
        %v3610 = vmul.f32 %v3501, %v3600
        %v3616 = vcombine.low %v3606, %v3607
        %v3617 = vcombine.low %v3608, %v3609
        %v3619 = vunpack.c.l.s4 1966171168
        %v3620 = vunpack.c.0.s8 %v3619
        %v3621 = vlaneseq
        %v3622 = vshrl.u32 %v3621, 7
        %v3623 = vsub.s32 %v3620, %v3622
        %v3624 = vrot.slane %v3616, %v3623
        %v3626 = vunpack.c.l.s4 1966171168
        %v3627 = vunpack.c.0.s8 %v3626
        %v3628 = vlaneseq
        %v3629 = vshrl.u32 %v3628, 7
        %v3630 = vsub.s32 %v3627, %v3629
        %v3631 = vrot.slane %v3617, %v3630
        %v3633 = vunpack.c.l.s4 1966171168
        %v3634 = vunpack.c.0.s8 %v3633
        %v3635 = vlaneseq
        %v3636 = vshrl.u32 %v3635, 7
        %v3637 = vsub.s32 %v3634, %v3636
        %v3638 = vrot.slane %v3610, %v3637
        %v3639 = vcombine.low %v3624, %v3631
        %v3641 = vunpack.c.l.s4 1966171168
        %v3642 = vunpack.c.0.s8 %v3641
        %v3643 = vlaneseq
        %v3644 = vshrl.u32 %v3643, 7
        %v3645 = vsub.s32 %v3642, %v3644
        %v3646 = vrot.slane %v3639, %v3645
        %v3648 = vunpack.c.l.s4 1966171168
        %v3649 = vunpack.c.0.s8 %v3648
        %v3650 = vlaneseq
        %v3651 = vshrl.u32 %v3650, 7
        %v3652 = vsub.s32 %v3649, %v3651
        %v3653 = vrot.slane %v3638, %v3652
        %v3654 = vcombine.low %v3646, %v3653
        %v3656 = vsub.f32 %v3579, %v3654
        %v3662 = vcombine.low %v3497, %v3498
        %v3663 = vcombine.low %v3499, %v3500
        %v3665 = vunpack.c.l.s4 1966171168
        %v3666 = vunpack.c.0.s8 %v3665
        %v3667 = vlaneseq
        %v3668 = vshrl.u32 %v3667, 7
        %v3669 = vsub.s32 %v3666, %v3668
        %v3670 = vrot.slane %v3662, %v3669
        %v3672 = vunpack.c.l.s4 1966171168
        %v3673 = vunpack.c.0.s8 %v3672
        %v3674 = vlaneseq
        %v3675 = vshrl.u32 %v3674, 7
        %v3676 = vsub.s32 %v3673, %v3675
        %v3677 = vrot.slane %v3663, %v3676
        %v3679 = vunpack.c.l.s4 1966171168
        %v3680 = vunpack.c.0.s8 %v3679
        %v3681 = vlaneseq
        %v3682 = vshrl.u32 %v3681, 7
        %v3683 = vsub.s32 %v3680, %v3682
        %v3684 = vrot.slane %v3501, %v3683
        %v3685 = vcombine.low %v3670, %v3677
        %v3687 = vunpack.c.l.s4 1966171168
        %v3688 = vunpack.c.0.s8 %v3687
        %v3689 = vlaneseq
        %v3690 = vshrl.u32 %v3689, 7
        %v3691 = vsub.s32 %v3688, %v3690
        %v3692 = vrot.slane %v3685, %v3691
        %v3694 = vunpack.c.l.s4 1966171168
        %v3695 = vunpack.c.0.s8 %v3694
        %v3696 = vlaneseq
        %v3697 = vshrl.u32 %v3696, 7
        %v3698 = vsub.s32 %v3695, %v3697
        %v3699 = vrot.slane %v3684, %v3698
        %v3700 = vcombine.low %v3692, %v3699
        %v3702 = vlaneseq
        %vm3703 = vcmp.ge.s32.totalorder %v3702, 0
        %vm3704 = vcmp.lt.s32.totalorder %v3702, 640
        %vm3705 = vmand %vm3703, %vm3704
        %3706 = vst.msk [vmem:[%s933] sm:$0x1f] %vm3705, %v3700
        %v3712 = vcombine.low %v3517, %v3518
        %v3713 = vcombine.low %v3519, %v3520
        %v3715 = vunpack.c.l.s4 1966171168
        %v3716 = vunpack.c.0.s8 %v3715
        %v3717 = vlaneseq
        %v3718 = vshrl.u32 %v3717, 7
        %v3719 = vsub.s32 %v3716, %v3718
        %v3720 = vrot.slane %v3712, %v3719
        %v3722 = vunpack.c.l.s4 1966171168
        %v3723 = vunpack.c.0.s8 %v3722
        %v3724 = vlaneseq
        %v3725 = vshrl.u32 %v3724, 7
        %v3726 = vsub.s32 %v3723, %v3725
        %v3727 = vrot.slane %v3713, %v3726
        %v3729 = vunpack.c.l.s4 1966171168
        %v3730 = vunpack.c.0.s8 %v3729
        %v3731 = vlaneseq
        %v3732 = vshrl.u32 %v3731, 7
        %v3733 = vsub.s32 %v3730, %v3732
        %v3734 = vrot.slane %v3521, %v3733
        %v3735 = vcombine.low %v3720, %v3727
        %v3737 = vunpack.c.l.s4 1966171168
        %v3738 = vunpack.c.0.s8 %v3737
        %v3739 = vlaneseq
        %v3740 = vshrl.u32 %v3739, 7
        %v3741 = vsub.s32 %v3738, %v3740
        %v3742 = vrot.slane %v3735, %v3741
        %v3744 = vunpack.c.l.s4 1966171168
        %v3745 = vunpack.c.0.s8 %v3744
        %v3746 = vlaneseq
        %v3747 = vshrl.u32 %v3746, 7
        %v3748 = vsub.s32 %v3745, %v3747
        %v3749 = vrot.slane %v3734, %v3748
        %v3750 = vcombine.low %v3742, %v3749
        %3752 = vst.msk [vmem:[%s940] sm:$0x1f] %vm3705, %v3750
        loop: start=0, step=1, limit=14
        $region90: #{tpu_custom_call.1} parent=73 // loop_pre_header
          _
        $region91: #{tpu_custom_call.1} parent=73 // loop_header
          %s3754 = sphi 0, %s3758
          %p3755 = scmp.ge.s32.totalorder %s3754, 14
        $region92: #{tpu_custom_call.1} parent=73 // loop_header_branch
          %3757 = sbr.rel (%p3755) target = $region96
        $region93: #{tpu_custom_call.1} parent=73 // loop_body
          %s3759 = smul.u32 %s3754, 10
          %s3760 = smul.addr %s3759, 8
          %s3761 = scalar_lea.vmem %s926, %s3760 [#allocation4]
          %v3762 = vld [vmem:[%s3761] sm:$0xff]
          %v3763 = vld [vmem:[%s3761 + $0x8] sm:$0xff]
          %v3764 = vld [vmem:[%s3761 + $0x10] sm:$0xff]
          %v3765 = vld [vmem:[%s3761 + $0x18] sm:$0xff]
          %v3766 = vld [vmem:[%s3761 + $0x20] sm:$0xff]
          %v3767 = vld [vmem:[%s3761 + $0x28] sm:$0x3f]
          %v3768 = vld [vmem:[%s3761 + $0x30] sm:$0x3f]
          %v3769 = vld [vmem:[%s3761 + $0x38] sm:$0x3f]
          %v3770 = vld [vmem:[%s3761 + $0x40] sm:$0x3f]
          %v3771 = vld [vmem:[%s3761 + $0x48] sm:$0x3f]
          %v3772 = vmul.f32 %v3762, %v3584
          %v3773 = vmul.f32 %v3763, %v3588
          %v3774 = vmul.f32 %v3764, %v3592
          %v3775 = vmul.f32 %v3765, %v3596
          %v3776 = vmul.f32 %v3766, %v3600
          %v3777 = vmul.f32 %v3767, %v3584
          %v3778 = vmul.f32 %v3768, %v3588
          %v3779 = vmul.f32 %v3769, %v3592
          %v3780 = vmul.f32 %v3770, %v3596
          %v3781 = vmul.f32 %v3771, %v3600
          %v3783 = vlaneseq
          %v3784 = vshrl.u32 %v3783, 7
          %v3785 = vsub.s32 0, %v3784
          %v3786 = vrot.slane %v3656, %v3785
          %v3787 = vlaneseq
          %v3788 = vshrl.u32 %v3787, 7
          %v3789 = vsub.s32 1, %v3788
          %v3790 = vrot.slane %v3656, %v3789
          %v3791 = vlaneseq
          %v3792 = vshrl.u32 %v3791, 7
          %v3793 = vsub.s32 2, %v3792
          %v3794 = vrot.slane %v3656, %v3793
          %v3795 = vlaneseq
          %v3796 = vshrl.u32 %v3795, 7
          %v3797 = vsub.s32 3, %v3796
          %v3798 = vrot.slane %v3656, %v3797
          %v3799 = vlaneseq
          %v3800 = vshrl.u32 %v3799, 7
          %v3801 = vsub.s32 4, %v3800
          %v3802 = vrot.slane %v3656, %v3801
          %v3808 = vadd.f32 %v3772, %v3786
          %v3809 = vadd.f32 %v3773, %v3790
          %v3810 = vadd.f32 %v3774, %v3794
          %v3811 = vadd.f32 %v3775, %v3798
          %v3812 = vadd.f32 %v3776, %v3802
          %v3813 = vadd.f32 %v3777, %v3786
          %v3814 = vadd.f32 %v3778, %v3790
          %v3815 = vadd.f32 %v3779, %v3794
          %v3816 = vadd.f32 %v3780, %v3798
          %v3817 = vadd.f32 %v3781, %v3802
          %3818 = vst [vmem:[%s3761] sm:$0xff] %v3808
          %3819 = vst [vmem:[%s3761 + $0x8] sm:$0xff] %v3809
          %3820 = vst [vmem:[%s3761 + $0x10] sm:$0xff] %v3810
          %3821 = vst [vmem:[%s3761 + $0x18] sm:$0xff] %v3811
          %3822 = vst [vmem:[%s3761 + $0x20] sm:$0xff] %v3812
          %3823 = vst [vmem:[%s3761 + $0x28] sm:$0x3f] %v3813
          %3824 = vst [vmem:[%s3761 + $0x30] sm:$0x3f] %v3814
          %3825 = vst [vmem:[%s3761 + $0x38] sm:$0x3f] %v3815
          %3826 = vst [vmem:[%s3761 + $0x40] sm:$0x3f] %v3816
          %3827 = vst [vmem:[%s3761 + $0x48] sm:$0x3f] %v3817
        $region94: #{tpu_custom_call.1} parent=73 // loop_footer
          %s3758 = sadd.s32 1, %s3754
        $region95: #{tpu_custom_call.1} parent=73 // loop_footer_branch
          %3753 = sbr.rel target = $region91
        $region96: #{tpu_custom_call.1} parent=73 // loop_exit
          _
        %s3828 = sand.u32 %s136, 1
        %s3829 = sand.u32 %s136, 1
        %s3830 = smul.addr %s3829, 1120
        %s3831 = scalar_lea.vmem [#allocation4], %s3830
        %s3832 = sand.u32 %s162, 1
        %s3833 = scalar_lea.sflag [#allocation6], %s3832
        %s3834 = sand.u32 %s162, 1
        %s3835 = smul.addr %s3834, 5
        %s3836 = scalar_lea.vmem [#allocation5], %s3835
        %s3837 = sand.u32 %s188, 1
        %s3838 = scalar_lea.sflag [#allocation8], %s3837
        %s3839 = sand.u32 %s188, 1
        %s3840 = smul.addr %s3839, 5
        %s3841 = scalar_lea.vmem [#allocation7], %s3840
        // Predicated region
        $region97: #{tpu_custom_call.1} parent=73 // pred_check
          %p3842 = pneg %p146
        $region98: #{tpu_custom_call.1} parent=73 // pred_check_branch
          %3844 = sbr.rel (%p3842) target = $region100
        $region99: #{tpu_custom_call.1} parent=73 // pred_region
          %s3845 = smul.u32 5, %s24
          %s3846 = smul.addr %s3845, 8
          %s3847 = scalar_lea.vmem %s4, %s3846
          // Predicated region
          $region101: #{tpu_custom_call.1} parent=99 // pred_check
            _
          $region102: #{tpu_custom_call.1} parent=99 // pred_check_branch
            %3849 = sbr.rel (0) target = $region104
          $region103: #{tpu_custom_call.1} parent=99 // pred_region
            // Predicated region
            $region105: #{tpu_custom_call.1} parent=103 // pred_check
              _
            $region106: #{tpu_custom_call.1} parent=103 // pred_check_branch
              %3851 = sbr.rel (0) target = $region108
            $region107: #{tpu_custom_call.1} parent=103 // pred_region
              loop: start=0, step=1, limit=1
              $region109: #{tpu_custom_call.1} parent=107 // loop_pre_header
                _
              $region110: #{tpu_custom_call.1} parent=107 // loop_header
                %s3853 = sphi 0, %s3857
                %p3854 = scmp.ge.s32.totalorder %s3853, 1
                %s3858 = sphi %s3831, %s3831
                %s3859 = sphi %s3847, %s3847
              $region111: #{tpu_custom_call.1} parent=107 // loop_header_branch
                %3856 = sbr.rel (%p3854) target = $region115
              $region112: #{tpu_custom_call.1} parent=107 // loop_body
                %v3860 = vld [vmem:[%s3858] sm:$0xff]
                %3861 = vst [vmem:[%s3859] sm:$0xff] %v3860
                %v3862 = vld [vmem:[%s3858 + $0x8] sm:$0xff]
                %3863 = vst [vmem:[%s3859 + $0x8] sm:$0xff] %v3862
                %v3864 = vld [vmem:[%s3858 + $0x10] sm:$0xff]
                %3865 = vst [vmem:[%s3859 + $0x10] sm:$0xff] %v3864
                %v3866 = vld [vmem:[%s3858 + $0x18] sm:$0xff]
                %3867 = vst [vmem:[%s3859 + $0x18] sm:$0xff] %v3866
                %v3868 = vld [vmem:[%s3858 + $0x20] sm:$0xff]
                %3869 = vst [vmem:[%s3859 + $0x20] sm:$0xff] %v3868
                %v3870 = vld [vmem:[%s3858 + $0x28] sm:$0xff]
                %3871 = vst [vmem:[%s3859 + $0x50] sm:$0xff] %v3870
                %v3872 = vld [vmem:[%s3858 + $0x30] sm:$0xff]
                %3873 = vst [vmem:[%s3859 + $0x58] sm:$0xff] %v3872
                %v3874 = vld [vmem:[%s3858 + $0x38] sm:$0xff]
                %3875 = vst [vmem:[%s3859 + $0x60] sm:$0xff] %v3874
                %v3876 = vld [vmem:[%s3858 + $0x40] sm:$0xff]
                %3877 = vst [vmem:[%s3859 + $0x68] sm:$0xff] %v3876
                %v3878 = vld [vmem:[%s3858 + $0x48] sm:$0xff]
                %3879 = vst [vmem:[%s3859 + $0x70] sm:$0xff] %v3878
                %v3880 = vld [vmem:[%s3858 + $0x50] sm:$0xff]
                %3881 = vst [vmem:[%s3859 + $0xa0] sm:$0xff] %v3880
                %v3882 = vld [vmem:[%s3858 + $0x58] sm:$0xff]
                %3883 = vst [vmem:[%s3859 + $0xa8] sm:$0xff] %v3882
                %v3884 = vld [vmem:[%s3858 + $0x60] sm:$0xff]
                %3885 = vst [vmem:[%s3859 + $0xb0] sm:$0xff] %v3884
                %v3886 = vld [vmem:[%s3858 + $0x68] sm:$0xff]
                %3887 = vst [vmem:[%s3859 + $0xb8] sm:$0xff] %v3886
                %v3888 = vld [vmem:[%s3858 + $0x70] sm:$0xff]
                %3889 = vst [vmem:[%s3859 + $0xc0] sm:$0xff] %v3888
                %v3890 = vld [vmem:[%s3858 + $0x78] sm:$0xff]
                %3891 = vst [vmem:[%s3859 + $0xf0] sm:$0xff] %v3890
                %v3892 = vld [vmem:[%s3858 + $0x80] sm:$0xff]
                %3893 = vst [vmem:[%s3859 + $0xf8] sm:$0xff] %v3892
                %v3894 = vld [vmem:[%s3858 + $0x88] sm:$0xff]
                %3895 = vst [vmem:[%s3859 + $0x100] sm:$0xff] %v3894
                %v3896 = vld [vmem:[%s3858 + $0x90] sm:$0xff]
                %3897 = vst [vmem:[%s3859 + $0x108] sm:$0xff] %v3896
                %v3898 = vld [vmem:[%s3858 + $0x98] sm:$0xff]
                %3899 = vst [vmem:[%s3859 + $0x110] sm:$0xff] %v3898
                %v3900 = vld [vmem:[%s3858 + $0xa0] sm:$0xff]
                %3901 = vst [vmem:[%s3859 + $0x140] sm:$0xff] %v3900
                %v3902 = vld [vmem:[%s3858 + $0xa8] sm:$0xff]
                %3903 = vst [vmem:[%s3859 + $0x148] sm:$0xff] %v3902
                %v3904 = vld [vmem:[%s3858 + $0xb0] sm:$0xff]
                %3905 = vst [vmem:[%s3859 + $0x150] sm:$0xff] %v3904
                %v3906 = vld [vmem:[%s3858 + $0xb8] sm:$0xff]
                %3907 = vst [vmem:[%s3859 + $0x158] sm:$0xff] %v3906
                %v3908 = vld [vmem:[%s3858 + $0xc0] sm:$0xff]
                %3909 = vst [vmem:[%s3859 + $0x160] sm:$0xff] %v3908
                %v3910 = vld [vmem:[%s3858 + $0xc8] sm:$0xff]
                %3911 = vst [vmem:[%s3859 + $0x190] sm:$0xff] %v3910
                %v3912 = vld [vmem:[%s3858 + $0xd0] sm:$0xff]
                %3913 = vst [vmem:[%s3859 + $0x198] sm:$0xff] %v3912
                %v3914 = vld [vmem:[%s3858 + $0xd8] sm:$0xff]
                %3915 = vst [vmem:[%s3859 + $0x1a0] sm:$0xff] %v3914
                %v3916 = vld [vmem:[%s3858 + $0xe0] sm:$0xff]
                %3917 = vst [vmem:[%s3859 + $0x1a8] sm:$0xff] %v3916
                %v3918 = vld [vmem:[%s3858 + $0xe8] sm:$0xff]
                %3919 = vst [vmem:[%s3859 + $0x1b0] sm:$0xff] %v3918
                %v3920 = vld [vmem:[%s3858 + $0xf0] sm:$0xff]
                %3921 = vst [vmem:[%s3859 + $0x1e0] sm:$0xff] %v3920
                %v3922 = vld [vmem:[%s3858 + $0xf8] sm:$0xff]
                %3923 = vst [vmem:[%s3859 + $0x1e8] sm:$0xff] %v3922
                %v3924 = vld [vmem:[%s3858 + $0x100] sm:$0xff]
                %3925 = vst [vmem:[%s3859 + $0x1f0] sm:$0xff] %v3924
                %v3926 = vld [vmem:[%s3858 + $0x108] sm:$0xff]
                %3927 = vst [vmem:[%s3859 + $0x1f8] sm:$0xff] %v3926
                %v3928 = vld [vmem:[%s3858 + $0x110] sm:$0xff]
                %3929 = vst [vmem:[%s3859 + $0x200] sm:$0xff] %v3928
                %v3930 = vld [vmem:[%s3858 + $0x118] sm:$0xff]
                %3931 = vst [vmem:[%s3859 + $0x230] sm:$0xff] %v3930
                %v3932 = vld [vmem:[%s3858 + $0x120] sm:$0xff]
                %3933 = vst [vmem:[%s3859 + $0x238] sm:$0xff] %v3932
                %v3934 = vld [vmem:[%s3858 + $0x128] sm:$0xff]
                %3935 = vst [vmem:[%s3859 + $0x240] sm:$0xff] %v3934
                %v3936 = vld [vmem:[%s3858 + $0x130] sm:$0xff]
                %3937 = vst [vmem:[%s3859 + $0x248] sm:$0xff] %v3936
                %v3938 = vld [vmem:[%s3858 + $0x138] sm:$0xff]
                %3939 = vst [vmem:[%s3859 + $0x250] sm:$0xff] %v3938
                %v3940 = vld [vmem:[%s3858 + $0x140] sm:$0xff]
                %3941 = vst [vmem:[%s3859 + $0x280] sm:$0xff] %v3940
                %v3942 = vld [vmem:[%s3858 + $0x148] sm:$0xff]
                %3943 = vst [vmem:[%s3859 + $0x288] sm:$0xff] %v3942
                %v3944 = vld [vmem:[%s3858 + $0x150] sm:$0xff]
                %3945 = vst [vmem:[%s3859 + $0x290] sm:$0xff] %v3944
                %v3946 = vld [vmem:[%s3858 + $0x158] sm:$0xff]
                %3947 = vst [vmem:[%s3859 + $0x298] sm:$0xff] %v3946
                %v3948 = vld [vmem:[%s3858 + $0x160] sm:$0xff]
                %3949 = vst [vmem:[%s3859 + $0x2a0] sm:$0xff] %v3948
                %v3950 = vld [vmem:[%s3858 + $0x168] sm:$0xff]
                %3951 = vst [vmem:[%s3859 + $0x2d0] sm:$0xff] %v3950
                %v3952 = vld [vmem:[%s3858 + $0x170] sm:$0xff]
                %3953 = vst [vmem:[%s3859 + $0x2d8] sm:$0xff] %v3952
                %v3954 = vld [vmem:[%s3858 + $0x178] sm:$0xff]
                %3955 = vst [vmem:[%s3859 + $0x2e0] sm:$0xff] %v3954
                %v3956 = vld [vmem:[%s3858 + $0x180] sm:$0xff]
                %3957 = vst [vmem:[%s3859 + $0x2e8] sm:$0xff] %v3956
                %v3958 = vld [vmem:[%s3858 + $0x188] sm:$0xff]
                %3959 = vst [vmem:[%s3859 + $0x2f0] sm:$0xff] %v3958
                %v3960 = vld [vmem:[%s3858 + $0x190] sm:$0xff]
                %3961 = vst [vmem:[%s3859 + $0x320] sm:$0xff] %v3960
                %v3962 = vld [vmem:[%s3858 + $0x198] sm:$0xff]
                %3963 = vst [vmem:[%s3859 + $0x328] sm:$0xff] %v3962
                %v3964 = vld [vmem:[%s3858 + $0x1a0] sm:$0xff]
                %3965 = vst [vmem:[%s3859 + $0x330] sm:$0xff] %v3964
                %v3966 = vld [vmem:[%s3858 + $0x1a8] sm:$0xff]
                %3967 = vst [vmem:[%s3859 + $0x338] sm:$0xff] %v3966
                %v3968 = vld [vmem:[%s3858 + $0x1b0] sm:$0xff]
                %3969 = vst [vmem:[%s3859 + $0x340] sm:$0xff] %v3968
                %v3970 = vld [vmem:[%s3858 + $0x1b8] sm:$0xff]
                %3971 = vst [vmem:[%s3859 + $0x370] sm:$0xff] %v3970
                %v3972 = vld [vmem:[%s3858 + $0x1c0] sm:$0xff]
                %3973 = vst [vmem:[%s3859 + $0x378] sm:$0xff] %v3972
                %v3974 = vld [vmem:[%s3858 + $0x1c8] sm:$0xff]
                %3975 = vst [vmem:[%s3859 + $0x380] sm:$0xff] %v3974
                %v3976 = vld [vmem:[%s3858 + $0x1d0] sm:$0xff]
                %3977 = vst [vmem:[%s3859 + $0x388] sm:$0xff] %v3976
                %v3978 = vld [vmem:[%s3858 + $0x1d8] sm:$0xff]
                %3979 = vst [vmem:[%s3859 + $0x390] sm:$0xff] %v3978
                %v3980 = vld [vmem:[%s3858 + $0x1e0] sm:$0xff]
                %3981 = vst [vmem:[%s3859 + $0x3c0] sm:$0xff] %v3980
                %v3982 = vld [vmem:[%s3858 + $0x1e8] sm:$0xff]
                %3983 = vst [vmem:[%s3859 + $0x3c8] sm:$0xff] %v3982
                %v3984 = vld [vmem:[%s3858 + $0x1f0] sm:$0xff]
                %3985 = vst [vmem:[%s3859 + $0x3d0] sm:$0xff] %v3984
                %v3986 = vld [vmem:[%s3858 + $0x1f8] sm:$0xff]
                %3987 = vst [vmem:[%s3859 + $0x3d8] sm:$0xff] %v3986
                %v3988 = vld [vmem:[%s3858 + $0x200] sm:$0xff]
                %3989 = vst [vmem:[%s3859 + $0x3e0] sm:$0xff] %v3988
                %v3990 = vld [vmem:[%s3858 + $0x208] sm:$0xff]
                %3991 = vst [vmem:[%s3859 + $0x410] sm:$0xff] %v3990
                %v3992 = vld [vmem:[%s3858 + $0x210] sm:$0xff]
                %3993 = vst [vmem:[%s3859 + $0x418] sm:$0xff] %v3992
                %v3994 = vld [vmem:[%s3858 + $0x218] sm:$0xff]
                %3995 = vst [vmem:[%s3859 + $0x420] sm:$0xff] %v3994
                %v3996 = vld [vmem:[%s3858 + $0x220] sm:$0xff]
                %3997 = vst [vmem:[%s3859 + $0x428] sm:$0xff] %v3996
                %v3998 = vld [vmem:[%s3858 + $0x228] sm:$0xff]
                %3999 = vst [vmem:[%s3859 + $0x430] sm:$0xff] %v3998
                %v4000 = vld [vmem:[%s3858 + $0x230] sm:$0xff]
                %4001 = vst [vmem:[%s3859 + $0x460] sm:$0xff] %v4000
                %v4002 = vld [vmem:[%s3858 + $0x238] sm:$0xff]
                %4003 = vst [vmem:[%s3859 + $0x468] sm:$0xff] %v4002
                %v4004 = vld [vmem:[%s3858 + $0x240] sm:$0xff]
                %4005 = vst [vmem:[%s3859 + $0x470] sm:$0xff] %v4004
                %v4006 = vld [vmem:[%s3858 + $0x248] sm:$0xff]
                %4007 = vst [vmem:[%s3859 + $0x478] sm:$0xff] %v4006
                %v4008 = vld [vmem:[%s3858 + $0x250] sm:$0xff]
                %4009 = vst [vmem:[%s3859 + $0x480] sm:$0xff] %v4008
                %v4010 = vld [vmem:[%s3858 + $0x258] sm:$0xff]
                %4011 = vst [vmem:[%s3859 + $0x4b0] sm:$0xff] %v4010
                %v4012 = vld [vmem:[%s3858 + $0x260] sm:$0xff]
                %4013 = vst [vmem:[%s3859 + $0x4b8] sm:$0xff] %v4012
                %v4014 = vld [vmem:[%s3858 + $0x268] sm:$0xff]
                %4015 = vst [vmem:[%s3859 + $0x4c0] sm:$0xff] %v4014
                %v4016 = vld [vmem:[%s3858 + $0x270] sm:$0xff]
                %4017 = vst [vmem:[%s3859 + $0x4c8] sm:$0xff] %v4016
                %v4018 = vld [vmem:[%s3858 + $0x278] sm:$0xff]
                %4019 = vst [vmem:[%s3859 + $0x4d0] sm:$0xff] %v4018
                %v4020 = vld [vmem:[%s3858 + $0x280] sm:$0xff]
                %4021 = vst [vmem:[%s3859 + $0x500] sm:$0xff] %v4020
                %v4022 = vld [vmem:[%s3858 + $0x288] sm:$0xff]
                %4023 = vst [vmem:[%s3859 + $0x508] sm:$0xff] %v4022
                %v4024 = vld [vmem:[%s3858 + $0x290] sm:$0xff]
                %4025 = vst [vmem:[%s3859 + $0x510] sm:$0xff] %v4024
                %v4026 = vld [vmem:[%s3858 + $0x298] sm:$0xff]
                %4027 = vst [vmem:[%s3859 + $0x518] sm:$0xff] %v4026
                %v4028 = vld [vmem:[%s3858 + $0x2a0] sm:$0xff]
                %4029 = vst [vmem:[%s3859 + $0x520] sm:$0xff] %v4028
                %v4030 = vld [vmem:[%s3858 + $0x2a8] sm:$0xff]
                %4031 = vst [vmem:[%s3859 + $0x550] sm:$0xff] %v4030
                %v4032 = vld [vmem:[%s3858 + $0x2b0] sm:$0xff]
                %4033 = vst [vmem:[%s3859 + $0x558] sm:$0xff] %v4032
                %v4034 = vld [vmem:[%s3858 + $0x2b8] sm:$0xff]
                %4035 = vst [vmem:[%s3859 + $0x560] sm:$0xff] %v4034
                %v4036 = vld [vmem:[%s3858 + $0x2c0] sm:$0xff]
                %4037 = vst [vmem:[%s3859 + $0x568] sm:$0xff] %v4036
                %v4038 = vld [vmem:[%s3858 + $0x2c8] sm:$0xff]
                %4039 = vst [vmem:[%s3859 + $0x570] sm:$0xff] %v4038
                %v4040 = vld [vmem:[%s3858 + $0x2d0] sm:$0xff]
                %4041 = vst [vmem:[%s3859 + $0x5a0] sm:$0xff] %v4040
                %v4042 = vld [vmem:[%s3858 + $0x2d8] sm:$0xff]
                %4043 = vst [vmem:[%s3859 + $0x5a8] sm:$0xff] %v4042
                %v4044 = vld [vmem:[%s3858 + $0x2e0] sm:$0xff]
                %4045 = vst [vmem:[%s3859 + $0x5b0] sm:$0xff] %v4044
                %v4046 = vld [vmem:[%s3858 + $0x2e8] sm:$0xff]
                %4047 = vst [vmem:[%s3859 + $0x5b8] sm:$0xff] %v4046
                %v4048 = vld [vmem:[%s3858 + $0x2f0] sm:$0xff]
                %4049 = vst [vmem:[%s3859 + $0x5c0] sm:$0xff] %v4048
                %v4050 = vld [vmem:[%s3858 + $0x2f8] sm:$0xff]
                %4051 = vst [vmem:[%s3859 + $0x5f0] sm:$0xff] %v4050
                %v4052 = vld [vmem:[%s3858 + $0x300] sm:$0xff]
                %4053 = vst [vmem:[%s3859 + $0x5f8] sm:$0xff] %v4052
                %v4054 = vld [vmem:[%s3858 + $0x308] sm:$0xff]
                %4055 = vst [vmem:[%s3859 + $0x600] sm:$0xff] %v4054
                %v4056 = vld [vmem:[%s3858 + $0x310] sm:$0xff]
                %4057 = vst [vmem:[%s3859 + $0x608] sm:$0xff] %v4056
                %v4058 = vld [vmem:[%s3858 + $0x318] sm:$0xff]
                %4059 = vst [vmem:[%s3859 + $0x610] sm:$0xff] %v4058
                %v4060 = vld [vmem:[%s3858 + $0x320] sm:$0xff]
                %4061 = vst [vmem:[%s3859 + $0x640] sm:$0xff] %v4060
                %v4062 = vld [vmem:[%s3858 + $0x328] sm:$0xff]
                %4063 = vst [vmem:[%s3859 + $0x648] sm:$0xff] %v4062
                %v4064 = vld [vmem:[%s3858 + $0x330] sm:$0xff]
                %4065 = vst [vmem:[%s3859 + $0x650] sm:$0xff] %v4064
                %v4066 = vld [vmem:[%s3858 + $0x338] sm:$0xff]
                %4067 = vst [vmem:[%s3859 + $0x658] sm:$0xff] %v4066
                %v4068 = vld [vmem:[%s3858 + $0x340] sm:$0xff]
                %4069 = vst [vmem:[%s3859 + $0x660] sm:$0xff] %v4068
                %v4070 = vld [vmem:[%s3858 + $0x348] sm:$0xff]
                %4071 = vst [vmem:[%s3859 + $0x690] sm:$0xff] %v4070
                %v4072 = vld [vmem:[%s3858 + $0x350] sm:$0xff]
                %4073 = vst [vmem:[%s3859 + $0x698] sm:$0xff] %v4072
                %v4074 = vld [vmem:[%s3858 + $0x358] sm:$0xff]
                %4075 = vst [vmem:[%s3859 + $0x6a0] sm:$0xff] %v4074
                %v4076 = vld [vmem:[%s3858 + $0x360] sm:$0xff]
                %4077 = vst [vmem:[%s3859 + $0x6a8] sm:$0xff] %v4076
                %v4078 = vld [vmem:[%s3858 + $0x368] sm:$0xff]
                %4079 = vst [vmem:[%s3859 + $0x6b0] sm:$0xff] %v4078
                %v4080 = vld [vmem:[%s3858 + $0x370] sm:$0xff]
                %4081 = vst [vmem:[%s3859 + $0x6e0] sm:$0xff] %v4080
                %v4082 = vld [vmem:[%s3858 + $0x378] sm:$0xff]
                %4083 = vst [vmem:[%s3859 + $0x6e8] sm:$0xff] %v4082
                %v4084 = vld [vmem:[%s3858 + $0x380] sm:$0xff]
                %4085 = vst [vmem:[%s3859 + $0x6f0] sm:$0xff] %v4084
                %v4086 = vld [vmem:[%s3858 + $0x388] sm:$0xff]
                %4087 = vst [vmem:[%s3859 + $0x6f8] sm:$0xff] %v4086
                %v4088 = vld [vmem:[%s3858 + $0x390] sm:$0xff]
                %4089 = vst [vmem:[%s3859 + $0x700] sm:$0xff] %v4088
                %v4090 = vld [vmem:[%s3858 + $0x398] sm:$0xff]
                %4091 = vst [vmem:[%s3859 + $0x730] sm:$0xff] %v4090
                %v4092 = vld [vmem:[%s3858 + $0x3a0] sm:$0xff]
                %4093 = vst [vmem:[%s3859 + $0x738] sm:$0xff] %v4092
                %v4094 = vld [vmem:[%s3858 + $0x3a8] sm:$0xff]
                %4095 = vst [vmem:[%s3859 + $0x740] sm:$0xff] %v4094
                %v4096 = vld [vmem:[%s3858 + $0x3b0] sm:$0xff]
                %4097 = vst [vmem:[%s3859 + $0x748] sm:$0xff] %v4096
                %v4098 = vld [vmem:[%s3858 + $0x3b8] sm:$0xff]
                %4099 = vst [vmem:[%s3859 + $0x750] sm:$0xff] %v4098
                %v4100 = vld [vmem:[%s3858 + $0x3c0] sm:$0xff]
                %4101 = vst [vmem:[%s3859 + $0x780] sm:$0xff] %v4100
                %v4102 = vld [vmem:[%s3858 + $0x3c8] sm:$0xff]
                %4103 = vst [vmem:[%s3859 + $0x788] sm:$0xff] %v4102
                %v4104 = vld [vmem:[%s3858 + $0x3d0] sm:$0xff]
                %4105 = vst [vmem:[%s3859 + $0x790] sm:$0xff] %v4104
                %v4106 = vld [vmem:[%s3858 + $0x3d8] sm:$0xff]
                %4107 = vst [vmem:[%s3859 + $0x798] sm:$0xff] %v4106
                %v4108 = vld [vmem:[%s3858 + $0x3e0] sm:$0xff]
                %4109 = vst [vmem:[%s3859 + $0x7a0] sm:$0xff] %v4108
                %v4110 = vld [vmem:[%s3858 + $0x3e8] sm:$0xff]
                %4111 = vst [vmem:[%s3859 + $0x7d0] sm:$0xff] %v4110
                %v4112 = vld [vmem:[%s3858 + $0x3f0] sm:$0xff]
                %4113 = vst [vmem:[%s3859 + $0x7d8] sm:$0xff] %v4112
                %v4114 = vld [vmem:[%s3858 + $0x3f8] sm:$0xff]
                %4115 = vst [vmem:[%s3859 + $0x7e0] sm:$0xff] %v4114
                %v4116 = vld [vmem:[%s3858 + $0x400] sm:$0xff]
                %4117 = vst [vmem:[%s3859 + $0x7e8] sm:$0xff] %v4116
                %v4118 = vld [vmem:[%s3858 + $0x408] sm:$0xff]
                %4119 = vst [vmem:[%s3859 + $0x7f0] sm:$0xff] %v4118
                %v4120 = vld [vmem:[%s3858 + $0x410] sm:$0xff]
                %4121 = vst [vmem:[%s3859 + $0x820] sm:$0xff] %v4120
                %v4122 = vld [vmem:[%s3858 + $0x418] sm:$0xff]
                %4123 = vst [vmem:[%s3859 + $0x828] sm:$0xff] %v4122
                %v4124 = vld [vmem:[%s3858 + $0x420] sm:$0xff]
                %4125 = vst [vmem:[%s3859 + $0x830] sm:$0xff] %v4124
                %v4126 = vld [vmem:[%s3858 + $0x428] sm:$0xff]
                %4127 = vst [vmem:[%s3859 + $0x838] sm:$0xff] %v4126
                %v4128 = vld [vmem:[%s3858 + $0x430] sm:$0xff]
                %4129 = vst [vmem:[%s3859 + $0x840] sm:$0xff] %v4128
                %v4130 = vld [vmem:[%s3858 + $0x438] sm:$0xff]
                %4131 = vst [vmem:[%s3859 + $0x870] sm:$0xff] %v4130
                %v4132 = vld [vmem:[%s3858 + $0x440] sm:$0xff]
                %4133 = vst [vmem:[%s3859 + $0x878] sm:$0xff] %v4132
                %v4134 = vld [vmem:[%s3858 + $0x448] sm:$0xff]
                %4135 = vst [vmem:[%s3859 + $0x880] sm:$0xff] %v4134
                %v4136 = vld [vmem:[%s3858 + $0x450] sm:$0xff]
                %4137 = vst [vmem:[%s3859 + $0x888] sm:$0xff] %v4136
                %v4138 = vld [vmem:[%s3858 + $0x458] sm:$0xff]
                %4139 = vst [vmem:[%s3859 + $0x890] sm:$0xff] %v4138
              $region113: #{tpu_custom_call.1} parent=107 // loop_footer
                %s3857 = sadd.s32 1, %s3853
              $region114: #{tpu_custom_call.1} parent=107 // loop_footer_branch
                %3852 = sbr.rel target = $region110
              $region115: #{tpu_custom_call.1} parent=107 // loop_exit
                _
            $region108: #{tpu_custom_call.1} parent=103 // pred_fallthru
              _
            // Predicated region
            $region116: #{tpu_custom_call.1} parent=103 // pred_check
              _
            $region117: #{tpu_custom_call.1} parent=103 // pred_check_branch
              %4141 = sbr.rel target = $region119
            $region118: #{tpu_custom_call.1} parent=103 // pred_region
              _
            $region119: #{tpu_custom_call.1} parent=103 // pred_fallthru
              _
          $region104: #{tpu_custom_call.1} parent=99 // pred_fallthru
            _
          %4142 = vnop
        $region100: #{tpu_custom_call.1} parent=73 // pred_fallthru
          _
        // Predicated region
        $region120: #{tpu_custom_call.1} parent=73 // pred_check
          %p4143 = pneg %p172
        $region121: #{tpu_custom_call.1} parent=73 // pred_check_branch
          %4145 = sbr.rel (%p4143) target = $region123
        $region122: #{tpu_custom_call.1} parent=73 // pred_region
          %s4146 = smul.u32 5, %s24
          %s4148 = ssub.s32 80, 80
          %4149 = vsyncadd %s3833, %s4148
          %s4150 = smul.addr %s4146, 16
          %s4151 = scalar_lea.hbm %s5, %s4150
          %s4153 = sshll.u32 %s3836, 4
          %s4154 = int_to_ptr.vmem [resolvable:$true] %s4153
          %4156 = dma.vmem_to_hbm [thread:$0]  %s4154, 80, %s4151, %s3833
        $region123: #{tpu_custom_call.1} parent=73 // pred_fallthru
          _
        // Predicated region
        $region124: #{tpu_custom_call.1} parent=73 // pred_check
          %p4157 = pneg %p198
        $region125: #{tpu_custom_call.1} parent=73 // pred_check_branch
          %4159 = sbr.rel (%p4157) target = $region127
        $region126: #{tpu_custom_call.1} parent=73 // pred_region
          %s4160 = smul.u32 5, %s24
          %s4162 = ssub.s32 80, 80
          %4163 = vsyncadd %s3838, %s4162
          %s4164 = smul.addr %s4160, 16
          %s4165 = scalar_lea.hbm %s6, %s4164
          %s4167 = sshll.u32 %s3841, 4
          %s4168 = int_to_ptr.vmem [resolvable:$true] %s4167
          %4170 = dma.vmem_to_hbm [thread:$0]  %s4168, 80, %s4165, %s3838
        $region127: #{tpu_custom_call.1} parent=73 // pred_fallthru
          _
      $region74: #{tpu_custom_call.1} parent=5 // pred_fallthru
        _
      %p4171 = scmp.le.s32.totalorder 2, %s19
      // Predicated region
      $region128: #{tpu_custom_call.1} parent=5 // pred_check
        %p4172 = pneg %p4171
      $region129: #{tpu_custom_call.1} parent=5 // pred_check_branch
        %4174 = sbr.rel (%p4172) target = $region131
      $region130: #{tpu_custom_call.1} parent=5 // pred_region
        %s4175 = ssub.s32 %s19, 2
        // Predicated region
        $region132: #{tpu_custom_call.1} parent=130 // pred_check
          %p4176 = pneg %p152
        $region133: #{tpu_custom_call.1} parent=130 // pred_check_branch
          %4178 = sbr.rel (%p4176) target = $region135
        $region134: #{tpu_custom_call.1} parent=130 // pred_region
          %s4179 = sand.u32 %s137, 1
          %s4180 = sand.u32 %s137, 1
          %s4181 = smul.addr %s4180, 1120
          %s4182 = scalar_lea.vmem [#allocation4], %s4181
        $region135: #{tpu_custom_call.1} parent=130 // pred_fallthru
          _
        // Predicated region
        $region136: #{tpu_custom_call.1} parent=130 // pred_check
          %p4183 = pneg %p178
        $region137: #{tpu_custom_call.1} parent=130 // pred_check_branch
          %4185 = sbr.rel (%p4183) target = $region139
        $region138: #{tpu_custom_call.1} parent=130 // pred_region
          %s4186 = sand.u32 %s163, 1
          %s4187 = scalar_lea.sflag [#allocation6], %s4186
          %s4188 = sand.u32 %s163, 1
          %s4189 = smul.addr %s4188, 5
          %s4190 = scalar_lea.vmem [#allocation5], %s4189
          %4191 = dma.done %s4187, 80
        $region139: #{tpu_custom_call.1} parent=130 // pred_fallthru
          _
        // Predicated region
        $region140: #{tpu_custom_call.1} parent=130 // pred_check
          %p4192 = pneg %p204
        $region141: #{tpu_custom_call.1} parent=130 // pred_check_branch
          %4194 = sbr.rel (%p4192) target = $region143
        $region142: #{tpu_custom_call.1} parent=130 // pred_region
          %s4195 = sand.u32 %s189, 1
          %s4196 = scalar_lea.sflag [#allocation8], %s4195
          %s4197 = sand.u32 %s189, 1
          %s4198 = smul.addr %s4197, 5
          %s4199 = scalar_lea.vmem [#allocation7], %s4198
          %4200 = dma.done %s4196, 80
        $region143: #{tpu_custom_call.1} parent=130 // pred_fallthru
          _
      $region131: #{tpu_custom_call.1} parent=5 // pred_fallthru
        _
    $region6: #{tpu_custom_call.1} parent=1 // loop_footer
      %s23 = sadd.s32 1, %s19
    $region7: #{tpu_custom_call.1} parent=1 // loop_footer_branch
      %18 = sbr.rel target = $region3
    $region8: #{tpu_custom_call.1} parent=1 // loop_exit
      _
    %4201 = vsyncpa [#allocation6], 1
    %s4202 = scalar_lea.sflag [#allocation6], 1
    %4203 = vsyncpa %s4202, 1
    %4204 = vsyncpa [#allocation8], 1
    %s4205 = scalar_lea.sflag [#allocation8], 1
    %4206 = vsyncpa %s4205, 1

</llo_original>
